<compile_context>
chip_gen: v7x
topology: tpu7x:2x2x1
jax: 0.10.0
libtpu: 0.0.40
codegen_flags: <defaults>
</compile_context>

<pallas_src>
import functools

import jax
import jax.numpy as jnp
from jax.experimental import pallas as pl
from jax.experimental.pallas import tpu as pltpu

BN_EPS = 1e-5
LANE = 128
WEIGHT_RESIDENT_MAX_BYTES = 4 * 1024 * 1024   # hoist weights <= 4 MiB into VMEM


def _round_up(x, m):
    return (x + m - 1) // m * m


def _vmem_limit_bytes():
    """Generation-aware VMEM cap: ~100 MiB on v5e/v6e (128 MiB physical),
    ~48 MiB on v7x (64 MiB physical); conservative fallback otherwise."""
    try:
        phys = int(pltpu.get_tpu_info().vmem_capacity_bytes)
    except Exception:
        phys = 64 * 1024 * 1024
    return max(32 * 1024 * 1024,
               min(phys - 16 * 1024 * 1024, 100 * 1024 * 1024))


def _pick_tile(n, cap):
    """Largest divisor of n <= cap, preferring multiples of 256 (v6e/v7x MXU
    is 256-wide), then multiples of 8; falls back to the full dimension
    (always a legal block) instead of a tiny tile."""
    hi = min(cap, n)
    for c in range(hi - hi % 256, 255, -256):
        if n % c == 0:
            return c
    for c in range(hi - hi % 8, 7, -8):
        if n % c == 0:
            return c
    return n


def _pick_k_tile(kp, cap=1024):
    """K tile for the tiled-weight path: whole Kp when small, else the largest
    divisor that is a multiple of 128 and >= 256 (never 128 — the accumulator
    read-modify-write would co-saturate the single vst slot with the MXU)."""
    if kp <= cap:
        return kp
    for c in range(cap - cap % 128, 255, -128):
        if kp % c == 0:
            return c
    return kp


# ---------------------------------------------------------------------------
# Pass 1 (weight-resident): grid = (N, D, HW-tiles, kd-taps)
# ---------------------------------------------------------------------------
def _conv_pass1_wres_kernel(x_ref, w_ref, y_ref, ysum_ref, ysq_ref):
    kd = pl.program_id(3)

    @pl.when(kd == 0)
    def _init():
        y_ref[...] = jnp.zeros_like(y_ref)

    # bf16 x bf16 -> f32 accumulate on the MXU; weight slab resident in VMEM,
    # sliced along the (tiny) kd-tap axis with the grid index.
    y_ref[...] += jnp.dot(x_ref[...], w_ref[kd],
                          preferred_element_type=jnp.float32)

    @pl.when(kd == pl.num_programs(3) - 1)
    def _finalize():
        yt = y_ref[...]
        ysum_ref[...] = jnp.sum(yt, axis=0, keepdims=True)
        ysq_ref[...] = jnp.sum(yt * yt, axis=0, keepdims=True)


# ---------------------------------------------------------------------------
# Pass 1 (tiled weight): grid = (N, D, HW-tiles, kd-taps, K-tiles)
# ---------------------------------------------------------------------------
def _conv_pass1_tiled_kernel(x_ref, w_ref, y_ref, ysum_ref, ysq_ref):
    kd = pl.program_id(3)
    kt = pl.program_id(4)

    @pl.when(jnp.logical_and(kd == 0, kt == 0))
    def _init():
        y_ref[...] = jnp.zeros_like(y_ref)

    y_ref[...] += jnp.dot(x_ref[...], w_ref[...],
                          preferred_element_type=jnp.float32)

    @pl.when(jnp.logical_and(kd == pl.num_programs(3) - 1,
                             kt == pl.num_programs(4) - 1))
    def _finalize():
        yt = y_ref[...]
        ysum_ref[...] = jnp.sum(yt, axis=0, keepdims=True)
        ysq_ref[...] = jnp.sum(yt * yt, axis=0, keepdims=True)


# ---------------------------------------------------------------------------
# Pass 2: BN (precomputed scale/shift) + ReLU; optionally writes directly into
# a depth-padded (D+2) output, zeroing the boundary planes in-kernel.
# ---------------------------------------------------------------------------
def _bn_relu_kernel(y_ref, scale_ref, shift_ref, o_ref, *, depth_halo):
    if depth_halo:
        d = pl.program_id(1)
        interior = jnp.logical_and(d >= 1, d <= pl.num_programs(1) - 2)

        @pl.when(interior)
        def _compute():
            o_ref[...] = jnp.maximum(
                y_ref[...] * scale_ref[...] + shift_ref[...], 0.0
            ).astype(o_ref.dtype)

        @pl.when(jnp.logical_not(interior))
        def _zero_halo():
            o_ref[...] = jnp.zeros_like(o_ref)
    else:
        o_ref[...] = jnp.maximum(
            y_ref[...] * scale_ref[...] + shift_ref[...], 0.0
        ).astype(o_ref.dtype)


# ---------------------------------------------------------------------------
# One (Conv3d 3x3x3 pad=1, no bias) -> BN(batch stats) -> ReLU stage.
# Input is NDHWC with the depth axis ALREADY zero-padded by 1 on each side.
# ---------------------------------------------------------------------------
def conv3d_bn_relu(x_dpad_ndhwc, w_oidhw, gamma, beta, *, out_dtype,
                   pad_depth_out):
    N, Dp2, H, W, Cin = x_dpad_ndhwc.shape
    D = Dp2 - 2
    Cout = w_oidhw.shape[0]
    assert w_oidhw.shape[1] == Cin
    HW = H * W
    Coutp = _round_up(Cout, LANE)
    vmem_limit = _vmem_limit_bytes()

    # Fold the kd tap into the matmul K when Cin is small: the 27-tap K still
    # pads to <= 2 lanes of 128, so folding removes the 3x kd reduction
    # (3x fewer accumulator RMW passes / activation reads) at ~no HBM cost.
    fold_kd = (27 * Cin) <= 256

    # ---- im2col patch tensor (bf16, K-padded, matmul-ready) ----
    xp = jnp.pad(x_dpad_ndhwc, ((0, 0), (0, 0), (1, 1), (1, 1), (0, 0)))
    if fold_kd:
        n_kd = 1
        K = 27 * Cin
        patches = [xp[:, kd:kd + D, kh:kh + H, kw:kw + W, :]
                   for kd in range(3) for kh in range(3) for kw in range(3)]
        xcol = jnp.stack(patches, axis=4).reshape(N, D, HW, K)
    else:
        n_kd = 3
        K = 9 * Cin
        patches = [xp[:, :, kh:kh + H, kw:kw + W, :]
                   for kh in range(3) for kw in range(3)]
        xcol = jnp.stack(patches, axis=4).reshape(N, Dp2, HW, K)
    Kp = _round_up(K, LANE)
    xcol = xcol.astype(jnp.bfloat16)
    if Kp != K:
        xcol = jnp.pad(xcol, ((0, 0), (0, 0), (0, 0), (0, Kp - K)))

    # ---- weight: [n_kd, Kp, Coutp] bf16, column order (kd)(kh, kw, cin) ----
    wt = jnp.transpose(w_oidhw, (2, 3, 4, 1, 0)).reshape(n_kd, K, Cout)
    wt = jnp.pad(wt, ((0, 0), (0, Kp - K), (0, Coutp - Cout))).astype(jnp.bfloat16)

    # ---- pass 1: conv-as-matmul + per-channel sum / sum-of-squares ----
    thw = _pick_tile(HW, 512)
    nhw = HW // thw
    weight_bytes = n_kd * Kp * Coutp * 2
    weight_resident = weight_bytes <= WEIGHT_RESIDENT_MAX_BYTES

    out_shapes = (
        jax.ShapeDtypeStruct((N, D, HW, Coutp), jnp.float32),
        jax.ShapeDtypeStruct((N, D, nhw, 1, Coutp), jnp.float32),
        jax.ShapeDtypeStruct((N, D, nhw, 1, Coutp), jnp.float32),
    )

    if weight_resident:
        grid = (N, D, nhw, n_kd)
        cost = pl.CostEstimate(
            flops=2 * N * D * HW * n_kd * Kp * Coutp,
            transcendentals=0,
            bytes_accessed=(n_kd * N * D * HW * Kp * 2 + weight_bytes
                            + N * D * HW * Coutp * 4))
        y, ysum, ysq = pl.pallas_call(
            _conv_pass1_wres_kernel,
            out_shape=out_shapes,
            grid=grid,
            in_specs=[
                # kd tap = shifted block index on the (free) depth axis.
                pl.BlockSpec((None, None, thw, Kp),
                             lambda n, d, m, kd: (n, d + kd, m, 0)),
                # whole weight VMEM-resident: constant index => fetched once.
                pl.BlockSpec((n_kd, Kp, Coutp),
                             lambda n, d, m, kd: (0, 0, 0)),
            ],
            out_specs=(
                pl.BlockSpec((None, None, thw, Coutp),
                             lambda n, d, m, kd: (n, d, m, 0)),
                pl.BlockSpec((None, None, None, 1, Coutp),
                             lambda n, d, m, kd: (n, d, m, 0, 0)),
                pl.BlockSpec((None, None, None, 1, Coutp),
                             lambda n, d, m, kd: (n, d, m, 0, 0)),
            ),
            compiler_params=pltpu.CompilerParams(
                dimension_semantics=("parallel", "parallel", "parallel",
                                     "arbitrary"),
                vmem_limit_bytes=vmem_limit),
            cost_estimate=cost,
        )(xcol, wt)
    else:
        tk = _pick_k_tile(Kp)
        nk = Kp // tk
        grid = (N, D, nhw, n_kd, nk)
        cost = pl.CostEstimate(
            flops=2 * N * D * HW * n_kd * Kp * Coutp,
            transcendentals=0,
            bytes_accessed=(n_kd * N * D * HW * Kp * 2
                            + N * D * nhw * weight_bytes
                            + N * D * HW * Coutp * 4))
        y, ysum, ysq = pl.pallas_call(
            _conv_pass1_tiled_kernel,
            out_shape=out_shapes,
            grid=grid,
            in_specs=[
                pl.BlockSpec((None, None, thw, tk),
                             lambda n, d, m, kd, kt: (n, d + kd, m, kt)),
                pl.BlockSpec((None, tk, Coutp),
                             lambda n, d, m, kd, kt: (kd, kt, 0)),
            ],
            out_specs=(
                pl.BlockSpec((None, None, thw, Coutp),
                             lambda n, d, m, kd, kt: (n, d, m, 0)),
                pl.BlockSpec((None, None, None, 1, Coutp),
                             lambda n, d, m, kd, kt: (n, d, m, 0, 0)),
                pl.BlockSpec((None, None, None, 1, Coutp),
                             lambda n, d, m, kd, kt: (n, d, m, 0, 0)),
            ),
            compiler_params=pltpu.CompilerParams(
                dimension_semantics=("parallel", "parallel", "parallel",
                                     "arbitrary", "arbitrary"),
                vmem_limit_bytes=vmem_limit),
            cost_estimate=cost,
        )(xcol, wt)

    # ---- finalize batch stats (tiny, per-channel) in plain JAX ----
    cnt = float(N * D * HW)
    s1 = ysum.sum(axis=(0, 1, 2, 3))                 # [Coutp]
    s2 = ysq.sum(axis=(0, 1, 2, 3))                  # [Coutp]
    mean = s1 / cnt
    var = jnp.maximum(s2 / cnt - mean * mean, 0.0)   # biased var (PyTorch BN)
    gamma_p = jnp.pad(gamma.astype(jnp.float32), (0, Coutp - Cout))
    beta_p = jnp.pad(beta.astype(jnp.float32), (0, Coutp - Cout))
    scale = (gamma_p * jax.lax.rsqrt(var + BN_EPS)).reshape(1, Coutp)
    shift = (beta_p - mean * scale[0]).reshape(1, Coutp)

    # ---- pass 2: normalize + affine + ReLU (optionally depth-padded out) ----
    d_out = D + 2 if pad_depth_out else D
    thw2 = _pick_tile(HW, 1024)
    nhw2 = HW // thw2

    if pad_depth_out:
        def in_d_map(n, d, m):
            return (n, jnp.clip(d - 1, 0, D - 1), m, 0)
    else:
        def in_d_map(n, d, m):
            return (n, d, m, 0)

    z = pl.pallas_call(
        functools.partial(_bn_relu_kernel, depth_halo=pad_depth_out),
        out_shape=jax.ShapeDtypeStruct((N, d_out, HW, Coutp), out_dtype),
        grid=(N, d_out, nhw2),
        in_specs=[
            pl.BlockSpec((None, None, thw2, Coutp), in_d_map),
            pl.BlockSpec((1, Coutp), lambda n, d, m: (0, 0)),
            pl.BlockSpec((1, Coutp), lambda n, d, m: (0, 0)),
        ],
        out_specs=pl.BlockSpec((None, None, thw2, Coutp),
                               lambda n, d, m: (n, d, m, 0)),
        compiler_params=pltpu.CompilerParams(
            dimension_semantics=("parallel", "parallel", "parallel"),
            vmem_limit_bytes=vmem_limit),
    )(y, scale, shift)

    # channel-padded, lane-dense NDHWC (depth-padded iff pad_depth_out)
    return z.reshape(N, d_out, H, W, Coutp)


# ---------------------------------------------------------------------------
# DoubleConv forward (public API in NCDHW, like the PyTorch module)
# ---------------------------------------------------------------------------
@jax.jit
def double_conv(x_ncdhw, params):
    (w1, b1, g1, be1, w2, b2, g2, be2) = params
    del b1, b2  # conv bias cancels exactly under training-mode BatchNorm

    N, Cin, D, H, W = x_ncdhw.shape
    C1, C2 = w1.shape[0], w2.shape[0]
    C1p = _round_up(C1, LANE)

    # NDHWC once at the boundary; depth-pad the stage-1 input once.  Stage 1
    # emits a depth-padded, bf16, channel-padded activation straight from its
    # BN/ReLU pass, so stage 2 needs no inter-stage pad copy or cast.
    x = jnp.transpose(x_ncdhw, (0, 2, 3, 4, 1))
    x = jnp.pad(x, ((0, 0), (1, 1), (0, 0), (0, 0), (0, 0)))

    z1 = conv3d_bn_relu(x, w1, g1, be1,
                        out_dtype=jnp.bfloat16, pad_depth_out=True)
    # z1: [N, D+2, H, W, C1p] bf16 (zero boundary depth planes)

    # stage 2 consumes the channel-padded activation; pad conv2's input-channel
    # dim with zeros to match (zero channels x zero weights).
    w2p = jnp.pad(w2, ((0, 0), (0, C1p - C1), (0, 0), (0, 0), (0, 0)))
    z2 = conv3d_bn_relu(z1, w2p, g2, be2,
                        out_dtype=jnp.float32, pad_depth_out=False)
    # z2: [N, D, H, W, C2p] f32

    z2 = z2[..., :C2]
    return jnp.transpose(z2, (0, 4, 1, 2, 3))        # back to NCDHW


# ---------------------------------------------------------------------------
# Pure-JAX reference (PyTorch training-mode forward). Conv operands are
# pre-rounded to bf16 to match the kernel's bf16 MXU operands; everything else
# (bias, BN, ReLU) is f32, exactly as in the nn.Module.
# ---------------------------------------------------------------------------
def reference(x, params):
    (w1, b1, g1, be1, w2, b2, g2, be2) = params

    def conv(x, w, b):
        xq = x.astype(jnp.bfloat16).astype(jnp.float32)
        wq = w.astype(jnp.bfloat16).astype(jnp.float32)
        y = jax.lax.conv_general_dilated(
            xq, wq, window_strides=(1, 1, 1),
            padding=((1, 1), (1, 1), (1, 1)),
            dimension_numbers=("NCDHW", "OIDHW", "NCDHW"),
            precision=jax.lax.Precision.HIGHEST)
        return y + b.reshape(1, -1, 1, 1, 1)

    def bn_relu(y, g, be):
        mean = y.mean(axis=(0, 2, 3, 4), keepdims=True)
        var = jnp.square(y - mean).mean(axis=(0, 2, 3, 4), keepdims=True)
        yn = (y - mean) / jnp.sqrt(var + BN_EPS)
        return jnp.maximum(
            yn * g.reshape(1, -1, 1, 1, 1) + be.reshape(1, -1, 1, 1, 1), 0.0)

    y = bn_relu(conv(x, w1, b1), g1, be1)
    y = bn_relu(conv(y, w2, b2), g2, be2)
    return y


if __name__ == "__main__":
    # Small shapes consistent with Conv3d: x is NCDHW.
    N, Cin, D, H, W = 2, 4, 8, 8, 8
    C1, C2 = 8, 8

    key = jax.random.PRNGKey(0)
    k = jax.random.split(key, 9)

    x = jax.random.normal(k[0], (N, Cin, D, H, W), dtype=jnp.float32)

    # PyTorch shapes: Conv3d weight [Cout, Cin, 3, 3, 3].
    w1 = 0.1 * jax.random.normal(k[1], (C1, Cin, 3, 3, 3), dtype=jnp.float32)
    b1 = 0.1 * jax.random.normal(k[2], (C1,), dtype=jnp.float32)
    g1 = 1.0 + 0.1 * jax.random.normal(k[3], (C1,), dtype=jnp.float32)
    be1 = 0.1 * jax.random.normal(k[4], (C1,), dtype=jnp.float32)

    w2 = 0.1 * jax.random.normal(k[5], (C2, C1, 3, 3, 3), dtype=jnp.float32)
    b2 = 0.1 * jax.random.normal(k[6], (C2,), dtype=jnp.float32)
    g2 = 1.0 + 0.1 * jax.random.normal(k[7], (C2,), dtype=jnp.float32)
    be2 = 0.1 * jax.random.normal(k[8], (C2,), dtype=jnp.float32)

    params = (w1, b1, g1, be1, w2, b2, g2, be2)

    out = jax.block_until_ready(double_conv(x, params))
    ref = jax.block_until_ready(reference(x, params))

    assert out.shape == (N, C2, D, H, W), out.shape
    max_err = float(jnp.max(jnp.abs(out - ref)))
    assert max_err < 5e-3, f"mismatch vs reference: {max_err}"

    print("KERNEL_OK")
</pallas_src>

<mosaic_0001>
module attributes {stable_mosaic.version = 11 : i64} {
  func.func @_conv_pass1_wres_kernel(%arg0: i32, %arg1: i32, %arg2: i32, %arg3: i32, %arg4: memref<1x1x64x128xbf16, #tpu.memory_space<vmem>>, %arg5: memref<1x128x128xbf16, #tpu.memory_space<vmem>>, %arg6: memref<1x1x64x128xf32, #tpu.memory_space<vmem>>, %arg7: memref<1x1x1x1x128xf32, #tpu.memory_space<vmem>>, %arg8: memref<1x1x1x1x128xf32, #tpu.memory_space<vmem>>) attributes {dimension_semantics = [#tpu.dimension_semantics<parallel>, #tpu.dimension_semantics<parallel>, #tpu.dimension_semantics<parallel>, #tpu.dimension_semantics<arbitrary>], iteration_bounds = array<i64: 2, 8, 1, 1>, scalar_prefetch = 0 : i64, scratch_operands = 0 : i64, tpu.core_type = #tpu.core_type<tc>, window_params = [{transform_indices = @transform_0, window_bounds = array<i64: 1, 1, 64, 128>}, {pipeline_mode = #tpu.pipeline_mode<synchronous>, transform_indices = @transform_1, window_bounds = array<i64: 1, 128, 128>}, {transform_indices = @transform_2, window_bounds = array<i64: 1, 1, 64, 128>}, {transform_indices = @transform_3, window_bounds = array<i64: 1, 1, 1, 1, 128>}, {transform_indices = @transform_4, window_bounds = array<i64: 1, 1, 1, 1, 128>}]} {
    %c0_i32 = arith.constant 0 : i32
    %0 = arith.cmpi eq, %arg3, %c0_i32 : i32
    %1 = arith.extui %0 : i1 to i32
    %c0_i32_0 = arith.constant 0 : i32
    %2 = arith.cmpi ne, %1, %c0_i32_0 : i32
    scf.if %2 {
      %cst_16 = arith.constant 0.000000e+00 : f32
      %18 = vector.broadcast %cst_16 : f32 to vector<64x128xf32>
      %c0_17 = arith.constant 0 : index
      %c0_18 = arith.constant 0 : index
      %c0_19 = arith.constant 0 : index
      %c0_20 = arith.constant 0 : index
      %19 = vector.load %arg6[%c0_17, %c0_18, %c0_19, %c0_20] : memref<1x1x64x128xf32, #tpu.memory_space<vmem>>, vector<1x1x64x128xf32>
      %20 = vector.shape_cast %19 : vector<1x1x64x128xf32> to vector<64x128xf32>
      %21 = vector.shape_cast %18 : vector<64x128xf32> to vector<1x1x64x128xf32>
      tpu.vector_store %arg6[%c0_17, %c0_18, %c0_19, %c0_20], %21 {strides = array<i32>} : memref<1x1x64x128xf32, #tpu.memory_space<vmem>>, vector<1x1x64x128xf32>,
    } else {
    }
    %c0 = arith.constant 0 : index
    %c0_1 = arith.constant 0 : index
    %c0_2 = arith.constant 0 : index
    %c0_3 = arith.constant 0 : index
    %3 = vector.load %arg6[%c0, %c0_1, %c0_2, %c0_3] : memref<1x1x64x128xf32, #tpu.memory_space<vmem>>, vector<1x1x64x128xf32>
    %4 = vector.shape_cast %3 : vector<1x1x64x128xf32> to vector<64x128xf32>
    %c0_4 = arith.constant 0 : index
    %c0_5 = arith.constant 0 : index
    %c0_6 = arith.constant 0 : index
    %c0_7 = arith.constant 0 : index
    %5 = vector.load %arg4[%c0_4, %c0_5, %c0_6, %c0_7] : memref<1x1x64x128xbf16, #tpu.memory_space<vmem>>, vector<1x1x64x128xbf16>
    %6 = vector.shape_cast %5 : vector<1x1x64x128xbf16> to vector<64x128xbf16>
    %7 = arith.index_cast %arg3 : i32 to index
    %c0_8 = arith.constant 0 : index
    %c0_9 = arith.constant 0 : index
    %8 = vector.load %arg5[%7, %c0_8, %c0_9] : memref<1x128x128xbf16, #tpu.memory_space<vmem>>, vector<1x128x128xbf16>
    %9 = vector.shape_cast %8 : vector<1x128x128xbf16> to vector<128x128xbf16>
    %cst = arith.constant dense<0.000000e+00> : vector<64x128xf32>
    %10 = tpu.matmul %6, %9, %cst {dimension_numbers = #tpu.dot_dimension_numbers<[1], [0], [0], [1], [0, 0, 1, 1], [], []>} : vector<64x128xbf16>, vector<128x128xbf16>, vector<64x128xf32> -> vector<64x128xf32>
    %11 = arith.addf %4, %10 : vector<64x128xf32>
    %c0_10 = arith.constant 0 : index
    %c0_11 = arith.constant 0 : index
    %c0_12 = arith.constant 0 : index
    %c0_13 = arith.constant 0 : index
    %12 = vector.load %arg6[%c0_10, %c0_11, %c0_12, %c0_13] : memref<1x1x64x128xf32, #tpu.memory_space<vmem>>, vector<1x1x64x128xf32>
    %13 = vector.shape_cast %12 : vector<1x1x64x128xf32> to vector<64x128xf32>
    %14 = vector.shape_cast %11 : vector<64x128xf32> to vector<1x1x64x128xf32>
    tpu.vector_store %arg6[%c0_10, %c0_11, %c0_12, %c0_13], %14 {strides = array<i32>} : memref<1x1x64x128xf32, #tpu.memory_space<vmem>>, vector<1x1x64x128xf32>,
    %c0_i32_14 = arith.constant 0 : i32
    %15 = arith.cmpi eq, %arg3, %c0_i32_14 : i32
    %16 = arith.extui %15 : i1 to i32
    %c0_i32_15 = arith.constant 0 : i32
    %17 = arith.cmpi ne, %16, %c0_i32_15 : i32
    scf.if %17 {
      %c0_16 = arith.constant 0 : index
      %c0_17 = arith.constant 0 : index
      %c0_18 = arith.constant 0 : index
      %c0_19 = arith.constant 0 : index
      %18 = vector.load %arg6[%c0_16, %c0_17, %c0_18, %c0_19] : memref<1x1x64x128xf32, #tpu.memory_space<vmem>>, vector<1x1x64x128xf32>
      %19 = vector.shape_cast %18 : vector<1x1x64x128xf32> to vector<64x128xf32>
      %cst_20 = arith.constant dense<0.000000e+00> : vector<128xf32>
      %20 = vector.multi_reduction <add>, %19, %cst_20 [0] : vector<64x128xf32> to vector<128xf32>
      %21 = vector.shape_cast %20 : vector<128xf32> to vector<1x128xf32>
      %c0_21 = arith.constant 0 : index
      %c0_22 = arith.constant 0 : index
      %c0_23 = arith.constant 0 : index
      %c0_24 = arith.constant 0 : index
      %c0_25 = arith.constant 0 : index
      %22 = vector.load %arg7[%c0_21, %c0_22, %c0_23, %c0_24, %c0_25] : memref<1x1x1x1x128xf32, #tpu.memory_space<vmem>>, vector<1x1x1x1x128xf32>
      %23 = vector.shape_cast %22 : vector<1x1x1x1x128xf32> to vector<1x128xf32>
      %24 = vector.shape_cast %21 : vector<1x128xf32> to vector<1x1x1x1x128xf32>
      tpu.vector_store %arg7[%c0_21, %c0_22, %c0_23, %c0_24, %c0_25], %24 {strides = array<i32>} : memref<1x1x1x1x128xf32, #tpu.memory_space<vmem>>, vector<1x1x1x1x128xf32>,
      %25 = arith.mulf %19, %19 : vector<64x128xf32>
      %cst_26 = arith.constant dense<0.000000e+00> : vector<128xf32>
      %26 = vector.multi_reduction <add>, %25, %cst_26 [0] : vector<64x128xf32> to vector<128xf32>
      %27 = vector.shape_cast %26 : vector<128xf32> to vector<1x128xf32>
      %c0_27 = arith.constant 0 : index
      %c0_28 = arith.constant 0 : index
      %c0_29 = arith.constant 0 : index
      %c0_30 = arith.constant 0 : index
      %c0_31 = arith.constant 0 : index
      %28 = vector.load %arg8[%c0_27, %c0_28, %c0_29, %c0_30, %c0_31] : memref<1x1x1x1x128xf32, #tpu.memory_space<vmem>>, vector<1x1x1x1x128xf32>
      %29 = vector.shape_cast %28 : vector<1x1x1x1x128xf32> to vector<1x128xf32>
      %30 = vector.shape_cast %27 : vector<1x128xf32> to vector<1x1x1x1x128xf32>
      tpu.vector_store %arg8[%c0_27, %c0_28, %c0_29, %c0_30, %c0_31], %30 {strides = array<i32>} : memref<1x1x1x1x128xf32, #tpu.memory_space<vmem>>, vector<1x1x1x1x128xf32>,
    } else {
    }
    return
  }
  func.func @transform_0(%arg0: i32, %arg1: i32, %arg2: i32, %arg3: i32) -> (i32, i32, i32, i32) {
    %0 = arith.addi %arg1, %arg3 : i32
    %c0_i32 = arith.constant 0 : i32
    %c0_i32_0 = arith.constant 0 : i32
    return %arg0, %0, %arg2, %c0_i32 : i32, i32, i32, i32
  }
  func.func @transform_1(%arg0: i32, %arg1: i32, %arg2: i32, %arg3: i32) -> (i32, i32, i32) {
    %c0_i32 = arith.constant 0 : i32
    %c0_i32_0 = arith.constant 0 : i32
    %c0_i32_1 = arith.constant 0 : i32
    %c0_i32_2 = arith.constant 0 : i32
    return %c0_i32, %c0_i32_0, %c0_i32_1 : i32, i32, i32
  }
  func.func @transform_2(%arg0: i32, %arg1: i32, %arg2: i32, %arg3: i32) -> (i32, i32, i32, i32) {
    %c0_i32 = arith.constant 0 : i32
    %c0_i32_0 = arith.constant 0 : i32
    return %arg0, %arg1, %arg2, %c0_i32 : i32, i32, i32, i32
  }
  func.func @transform_3(%arg0: i32, %arg1: i32, %arg2: i32, %arg3: i32) -> (i32, i32, i32, i32, i32) {
    %c0_i32 = arith.constant 0 : i32
    %c0_i32_0 = arith.constant 0 : i32
    %c0_i32_1 = arith.constant 0 : i32
    return %arg0, %arg1, %arg2, %c0_i32, %c0_i32_0 : i32, i32, i32, i32, i32
  }
  func.func @transform_4(%arg0: i32, %arg1: i32, %arg2: i32, %arg3: i32) -> (i32, i32, i32, i32, i32) {
    %c0_i32 = arith.constant 0 : i32
    %c0_i32_0 = arith.constant 0 : i32
    %c0_i32_1 = arith.constant 0 : i32
    return %arg0, %arg1, %arg2, %c0_i32, %c0_i32_0 : i32, i32, i32, i32, i32
  }
}

module attributes {stable_mosaic.version = 11 : i64} {
  func.func @_bn_relu_kernel(%arg0: i32, %arg1: i32, %arg2: i32, %arg3: memref<1x1x64x128xf32, #tpu.memory_space<vmem>>, %arg4: memref<1x128xf32, #tpu.memory_space<vmem>>, %arg5: memref<1x128xf32, #tpu.memory_space<vmem>>, %arg6: memref<1x1x64x128xbf16, #tpu.memory_space<vmem>>) attributes {dimension_semantics = [#tpu.dimension_semantics<parallel>, #tpu.dimension_semantics<parallel>, #tpu.dimension_semantics<parallel>], iteration_bounds = array<i64: 2, 10, 1>, scalar_prefetch = 0 : i64, scratch_operands = 0 : i64, tpu.core_type = #tpu.core_type<tc>, window_params = [{transform_indices = @transform_0, window_bounds = array<i64: 1, 1, 64, 128>}, {pipeline_mode = #tpu.pipeline_mode<synchronous>, transform_indices = @transform_1, window_bounds = array<i64: 1, 128>}, {pipeline_mode = #tpu.pipeline_mode<synchronous>, transform_indices = @transform_2, window_bounds = array<i64: 1, 128>}, {transform_indices = @transform_3, window_bounds = array<i64: 1, 1, 64, 128>}]} {
    %c1_i32 = arith.constant 1 : i32
    %0 = arith.cmpi sge, %arg1, %c1_i32 : i32
    %c8_i32 = arith.constant 8 : i32
    %1 = arith.cmpi sle, %arg1, %c8_i32 : i32
    %2 = arith.andi %0, %1 : i1
    %3 = arith.extui %2 : i1 to i32
    %c0_i32 = arith.constant 0 : i32
    %4 = arith.cmpi ne, %3, %c0_i32 : i32
    scf.if %4 {
      %c0 = arith.constant 0 : index
      %c0_1 = arith.constant 0 : index
      %c0_2 = arith.constant 0 : index
      %c0_3 = arith.constant 0 : index
      %8 = vector.load %arg3[%c0, %c0_1, %c0_2, %c0_3] : memref<1x1x64x128xf32, #tpu.memory_space<vmem>>, vector<1x1x64x128xf32>
      %9 = vector.shape_cast %8 : vector<1x1x64x128xf32> to vector<64x128xf32>
      %c0_4 = arith.constant 0 : index
      %c0_5 = arith.constant 0 : index
      %10 = vector.load %arg4[%c0_4, %c0_5] : memref<1x128xf32, #tpu.memory_space<vmem>>, vector<1x128xf32>
      %11 = vector.broadcast %10 : vector<1x128xf32> to vector<64x128xf32>
      %12 = arith.mulf %9, %11 : vector<64x128xf32>
      %c0_6 = arith.constant 0 : index
      %c0_7 = arith.constant 0 : index
      %13 = vector.load %arg5[%c0_6, %c0_7] : memref<1x128xf32, #tpu.memory_space<vmem>>, vector<1x128xf32>
      %14 = vector.broadcast %13 : vector<1x128xf32> to vector<64x128xf32>
      %15 = arith.addf %12, %14 : vector<64x128xf32>
      %cst = arith.constant 0.000000e+00 : f32
      %16 = vector.broadcast %cst : f32 to vector<64x128xf32>
      %17 = arith.maximumf %15, %16 : vector<64x128xf32>
      %18 = arith.truncf %17 : vector<64x128xf32> to vector<64x128xbf16>
      %c0_8 = arith.constant 0 : index
      %c0_9 = arith.constant 0 : index
      %c0_10 = arith.constant 0 : index
      %c0_11 = arith.constant 0 : index
      %19 = vector.load %arg6[%c0_8, %c0_9, %c0_10, %c0_11] : memref<1x1x64x128xbf16, #tpu.memory_space<vmem>>, vector<1x1x64x128xbf16>
      %20 = vector.shape_cast %19 : vector<1x1x64x128xbf16> to vector<64x128xbf16>
      %21 = vector.shape_cast %18 : vector<64x128xbf16> to vector<1x1x64x128xbf16>
      tpu.vector_store %arg6[%c0_8, %c0_9, %c0_10, %c0_11], %21 {strides = array<i32>} : memref<1x1x64x128xbf16, #tpu.memory_space<vmem>>, vector<1x1x64x128xbf16>,
    } else {
    }
    %true = arith.constant true
    %5 = arith.xori %2, %true : i1
    %6 = arith.extui %5 : i1 to i32
    %c0_i32_0 = arith.constant 0 : i32
    %7 = arith.cmpi ne, %6, %c0_i32_0 : i32
    scf.if %7 {
      %cst = arith.constant 0.000000e+00 : bf16
      %8 = vector.broadcast %cst : bf16 to vector<64x128xbf16>
      %c0 = arith.constant 0 : index
      %c0_1 = arith.constant 0 : index
      %c0_2 = arith.constant 0 : index
      %c0_3 = arith.constant 0 : index
      %9 = vector.load %arg6[%c0, %c0_1, %c0_2, %c0_3] : memref<1x1x64x128xbf16, #tpu.memory_space<vmem>>, vector<1x1x64x128xbf16>
      %10 = vector.shape_cast %9 : vector<1x1x64x128xbf16> to vector<64x128xbf16>
      %11 = vector.shape_cast %8 : vector<64x128xbf16> to vector<1x1x64x128xbf16>
      tpu.vector_store %arg6[%c0, %c0_1, %c0_2, %c0_3], %11 {strides = array<i32>} : memref<1x1x64x128xbf16, #tpu.memory_space<vmem>>, vector<1x1x64x128xbf16>,
    } else {
    }
    return
  }
  func.func @transform_0(%arg0: i32, %arg1: i32, %arg2: i32) -> (i32, i32, i32, i32) {
    %c1_i32 = arith.constant 1 : i32
    %0 = arith.subi %arg1, %c1_i32 : i32
    %c0_i32 = arith.constant 0 : i32
    %c7_i32 = arith.constant 7 : i32
    %1 = arith.maxsi %c0_i32, %0 : i32
    %2 = arith.minsi %c7_i32, %1 : i32
    %c0_i32_0 = arith.constant 0 : i32
    %c0_i32_1 = arith.constant 0 : i32
    return %arg0, %2, %arg2, %c0_i32_0 : i32, i32, i32, i32
  }
  func.func @transform_1(%arg0: i32, %arg1: i32, %arg2: i32) -> (i32, i32) {
    %c0_i32 = arith.constant 0 : i32
    %c0_i32_0 = arith.constant 0 : i32
    %c0_i32_1 = arith.constant 0 : i32
    return %c0_i32, %c0_i32_0 : i32, i32
  }
  func.func @transform_2(%arg0: i32, %arg1: i32, %arg2: i32) -> (i32, i32) {
    %c0_i32 = arith.constant 0 : i32
    %c0_i32_0 = arith.constant 0 : i32
    %c0_i32_1 = arith.constant 0 : i32
    return %c0_i32, %c0_i32_0 : i32, i32
  }
  func.func @transform_3(%arg0: i32, %arg1: i32, %arg2: i32) -> (i32, i32, i32, i32) {
    %c0_i32 = arith.constant 0 : i32
    %c0_i32_0 = arith.constant 0 : i32
    return %arg0, %arg1, %arg2, %c0_i32 : i32, i32, i32, i32
  }
}

module attributes {stable_mosaic.version = 11 : i64} {
  func.func @_conv_pass1_wres_kernel(%arg0: i32, %arg1: i32, %arg2: i32, %arg3: i32, %arg4: memref<1x1x64x1152xbf16, #tpu.memory_space<vmem>>, %arg5: memref<3x1152x128xbf16, #tpu.memory_space<vmem>>, %arg6: memref<1x1x64x128xf32, #tpu.memory_space<vmem>>, %arg7: memref<1x1x1x1x128xf32, #tpu.memory_space<vmem>>, %arg8: memref<1x1x1x1x128xf32, #tpu.memory_space<vmem>>) attributes {dimension_semantics = [#tpu.dimension_semantics<parallel>, #tpu.dimension_semantics<parallel>, #tpu.dimension_semantics<parallel>, #tpu.dimension_semantics<arbitrary>], iteration_bounds = array<i64: 2, 8, 1, 3>, scalar_prefetch = 0 : i64, scratch_operands = 0 : i64, tpu.core_type = #tpu.core_type<tc>, window_params = [{transform_indices = @transform_0, window_bounds = array<i64: 1, 1, 64, 1152>}, {pipeline_mode = #tpu.pipeline_mode<synchronous>, transform_indices = @transform_1, window_bounds = array<i64: 3, 1152, 128>}, {transform_indices = @transform_2, window_bounds = array<i64: 1, 1, 64, 128>}, {transform_indices = @transform_3, window_bounds = array<i64: 1, 1, 1, 1, 128>}, {transform_indices = @transform_4, window_bounds = array<i64: 1, 1, 1, 1, 128>}]} {
    %c0_i32 = arith.constant 0 : i32
    %0 = arith.cmpi eq, %arg3, %c0_i32 : i32
    %1 = arith.extui %0 : i1 to i32
    %c0_i32_0 = arith.constant 0 : i32
    %2 = arith.cmpi ne, %1, %c0_i32_0 : i32
    scf.if %2 {
      %cst_15 = arith.constant 0.000000e+00 : f32
      %18 = vector.broadcast %cst_15 : f32 to vector<64x128xf32>
      %c0_16 = arith.constant 0 : index
      %c0_17 = arith.constant 0 : index
      %c0_18 = arith.constant 0 : index
      %c0_19 = arith.constant 0 : index
      %19 = vector.load %arg6[%c0_16, %c0_17, %c0_18, %c0_19] : memref<1x1x64x128xf32, #tpu.memory_space<vmem>>, vector<1x1x64x128xf32>
      %20 = vector.shape_cast %19 : vector<1x1x64x128xf32> to vector<64x128xf32>
      %21 = vector.shape_cast %18 : vector<64x128xf32> to vector<1x1x64x128xf32>
      tpu.vector_store %arg6[%c0_16, %c0_17, %c0_18, %c0_19], %21 {strides = array<i32>} : memref<1x1x64x128xf32, #tpu.memory_space<vmem>>, vector<1x1x64x128xf32>,
    } else {
    }
    %c0 = arith.constant 0 : index
    %c0_1 = arith.constant 0 : index
    %c0_2 = arith.constant 0 : index
    %c0_3 = arith.constant 0 : index
    %3 = vector.load %arg6[%c0, %c0_1, %c0_2, %c0_3] : memref<1x1x64x128xf32, #tpu.memory_space<vmem>>, vector<1x1x64x128xf32>
    %4 = vector.shape_cast %3 : vector<1x1x64x128xf32> to vector<64x128xf32>
    %c0_4 = arith.constant 0 : index
    %c0_5 = arith.constant 0 : index
    %c0_6 = arith.constant 0 : index
    %c0_7 = arith.constant 0 : index
    %5 = vector.load %arg4[%c0_4, %c0_5, %c0_6, %c0_7] : memref<1x1x64x1152xbf16, #tpu.memory_space<vmem>>, vector<1x1x64x1152xbf16>
    %6 = vector.shape_cast %5 : vector<1x1x64x1152xbf16> to vector<64x1152xbf16>
    %7 = arith.index_cast %arg3 : i32 to index
    %c0_8 = arith.constant 0 : index
    %c0_9 = arith.constant 0 : index
    %8 = vector.load %arg5[%7, %c0_8, %c0_9] : memref<3x1152x128xbf16, #tpu.memory_space<vmem>>, vector<1x1152x128xbf16>
    %9 = vector.shape_cast %8 : vector<1x1152x128xbf16> to vector<1152x128xbf16>
    %cst = arith.constant dense<0.000000e+00> : vector<64x128xf32>
    %10 = tpu.matmul %6, %9, %cst {dimension_numbers = #tpu.dot_dimension_numbers<[1], [0], [0], [1], [0, 0, 1, 1], [], []>} : vector<64x1152xbf16>, vector<1152x128xbf16>, vector<64x128xf32> -> vector<64x128xf32>
    %11 = arith.addf %4, %10 : vector<64x128xf32>
    %c0_10 = arith.constant 0 : index
    %c0_11 = arith.constant 0 : index
    %c0_12 = arith.constant 0 : index
    %c0_13 = arith.constant 0 : index
    %12 = vector.load %arg6[%c0_10, %c0_11, %c0_12, %c0_13] : memref<1x1x64x128xf32, #tpu.memory_space<vmem>>, vector<1x1x64x128xf32>
    %13 = vector.shape_cast %12 : vector<1x1x64x128xf32> to vector<64x128xf32>
    %14 = vector.shape_cast %11 : vector<64x128xf32> to vector<1x1x64x128xf32>
    tpu.vector_store %arg6[%c0_10, %c0_11, %c0_12, %c0_13], %14 {strides = array<i32>} : memref<1x1x64x128xf32, #tpu.memory_space<vmem>>, vector<1x1x64x128xf32>,
    %c2_i32 = arith.constant 2 : i32
    %15 = arith.cmpi eq, %arg3, %c2_i32 : i32
    %16 = arith.extui %15 : i1 to i32
    %c0_i32_14 = arith.constant 0 : i32
    %17 = arith.cmpi ne, %16, %c0_i32_14 : i32
    scf.if %17 {
      %c0_15 = arith.constant 0 : index
      %c0_16 = arith.constant 0 : index
      %c0_17 = arith.constant 0 : index
      %c0_18 = arith.constant 0 : index
      %18 = vector.load %arg6[%c0_15, %c0_16, %c0_17, %c0_18] : memref<1x1x64x128xf32, #tpu.memory_space<vmem>>, vector<1x1x64x128xf32>
      %19 = vector.shape_cast %18 : vector<1x1x64x128xf32> to vector<64x128xf32>
      %cst_19 = arith.constant dense<0.000000e+00> : vector<128xf32>
      %20 = vector.multi_reduction <add>, %19, %cst_19 [0] : vector<64x128xf32> to vector<128xf32>
      %21 = vector.shape_cast %20 : vector<128xf32> to vector<1x128xf32>
      %c0_20 = arith.constant 0 : index
      %c0_21 = arith.constant 0 : index
      %c0_22 = arith.constant 0 : index
      %c0_23 = arith.constant 0 : index
      %c0_24 = arith.constant 0 : index
      %22 = vector.load %arg7[%c0_20, %c0_21, %c0_22, %c0_23, %c0_24] : memref<1x1x1x1x128xf32, #tpu.memory_space<vmem>>, vector<1x1x1x1x128xf32>
      %23 = vector.shape_cast %22 : vector<1x1x1x1x128xf32> to vector<1x128xf32>
      %24 = vector.shape_cast %21 : vector<1x128xf32> to vector<1x1x1x1x128xf32>
      tpu.vector_store %arg7[%c0_20, %c0_21, %c0_22, %c0_23, %c0_24], %24 {strides = array<i32>} : memref<1x1x1x1x128xf32, #tpu.memory_space<vmem>>, vector<1x1x1x1x128xf32>,
      %25 = arith.mulf %19, %19 : vector<64x128xf32>
      %cst_25 = arith.constant dense<0.000000e+00> : vector<128xf32>
      %26 = vector.multi_reduction <add>, %25, %cst_25 [0] : vector<64x128xf32> to vector<128xf32>
      %27 = vector.shape_cast %26 : vector<128xf32> to vector<1x128xf32>
      %c0_26 = arith.constant 0 : index
      %c0_27 = arith.constant 0 : index
      %c0_28 = arith.constant 0 : index
      %c0_29 = arith.constant 0 : index
      %c0_30 = arith.constant 0 : index
      %28 = vector.load %arg8[%c0_26, %c0_27, %c0_28, %c0_29, %c0_30] : memref<1x1x1x1x128xf32, #tpu.memory_space<vmem>>, vector<1x1x1x1x128xf32>
      %29 = vector.shape_cast %28 : vector<1x1x1x1x128xf32> to vector<1x128xf32>
      %30 = vector.shape_cast %27 : vector<1x128xf32> to vector<1x1x1x1x128xf32>
      tpu.vector_store %arg8[%c0_26, %c0_27, %c0_28, %c0_29, %c0_30], %30 {strides = array<i32>} : memref<1x1x1x1x128xf32, #tpu.memory_space<vmem>>, vector<1x1x1x1x128xf32>,
    } else {
    }
    return
  }
  func.func @transform_0(%arg0: i32, %arg1: i32, %arg2: i32, %arg3: i32) -> (i32, i32, i32, i32) {
    %0 = arith.addi %arg1, %arg3 : i32
    %c0_i32 = arith.constant 0 : i32
    %c0_i32_0 = arith.constant 0 : i32
    return %arg0, %0, %arg2, %c0_i32 : i32, i32, i32, i32
  }
  func.func @transform_1(%arg0: i32, %arg1: i32, %arg2: i32, %arg3: i32) -> (i32, i32, i32) {
    %c0_i32 = arith.constant 0 : i32
    %c0_i32_0 = arith.constant 0 : i32
    %c0_i32_1 = arith.constant 0 : i32
    %c0_i32_2 = arith.constant 0 : i32
    return %c0_i32, %c0_i32_0, %c0_i32_1 : i32, i32, i32
  }
  func.func @transform_2(%arg0: i32, %arg1: i32, %arg2: i32, %arg3: i32) -> (i32, i32, i32, i32) {
    %c0_i32 = arith.constant 0 : i32
    %c0_i32_0 = arith.constant 0 : i32
    return %arg0, %arg1, %arg2, %c0_i32 : i32, i32, i32, i32
  }
  func.func @transform_3(%arg0: i32, %arg1: i32, %arg2: i32, %arg3: i32) -> (i32, i32, i32, i32, i32) {
    %c0_i32 = arith.constant 0 : i32
    %c0_i32_0 = arith.constant 0 : i32
    %c0_i32_1 = arith.constant 0 : i32
    return %arg0, %arg1, %arg2, %c0_i32, %c0_i32_0 : i32, i32, i32, i32, i32
  }
  func.func @transform_4(%arg0: i32, %arg1: i32, %arg2: i32, %arg3: i32) -> (i32, i32, i32, i32, i32) {
    %c0_i32 = arith.constant 0 : i32
    %c0_i32_0 = arith.constant 0 : i32
    %c0_i32_1 = arith.constant 0 : i32
    return %arg0, %arg1, %arg2, %c0_i32, %c0_i32_0 : i32, i32, i32, i32, i32
  }
}

module attributes {stable_mosaic.version = 11 : i64} {
  func.func @_bn_relu_kernel(%arg0: i32, %arg1: i32, %arg2: i32, %arg3: memref<1x1x64x128xf32, #tpu.memory_space<vmem>>, %arg4: memref<1x128xf32, #tpu.memory_space<vmem>>, %arg5: memref<1x128xf32, #tpu.memory_space<vmem>>, %arg6: memref<1x1x64x128xf32, #tpu.memory_space<vmem>>) attributes {dimension_semantics = [#tpu.dimension_semantics<parallel>, #tpu.dimension_semantics<parallel>, #tpu.dimension_semantics<parallel>], iteration_bounds = array<i64: 2, 8, 1>, scalar_prefetch = 0 : i64, scratch_operands = 0 : i64, tpu.core_type = #tpu.core_type<tc>, window_params = [{transform_indices = @transform_0, window_bounds = array<i64: 1, 1, 64, 128>}, {pipeline_mode = #tpu.pipeline_mode<synchronous>, transform_indices = @transform_1, window_bounds = array<i64: 1, 128>}, {pipeline_mode = #tpu.pipeline_mode<synchronous>, transform_indices = @transform_2, window_bounds = array<i64: 1, 128>}, {transform_indices = @transform_3, window_bounds = array<i64: 1, 1, 64, 128>}]} {
    %c0 = arith.constant 0 : index
    %c0_0 = arith.constant 0 : index
    %c0_1 = arith.constant 0 : index
    %c0_2 = arith.constant 0 : index
    %0 = vector.load %arg3[%c0, %c0_0, %c0_1, %c0_2] : memref<1x1x64x128xf32, #tpu.memory_space<vmem>>, vector<1x1x64x128xf32>
    %1 = vector.shape_cast %0 : vector<1x1x64x128xf32> to vector<64x128xf32>
    %c0_3 = arith.constant 0 : index
    %c0_4 = arith.constant 0 : index
    %2 = vector.load %arg4[%c0_3, %c0_4] : memref<1x128xf32, #tpu.memory_space<vmem>>, vector<1x128xf32>
    %3 = vector.broadcast %2 : vector<1x128xf32> to vector<64x128xf32>
    %4 = arith.mulf %1, %3 : vector<64x128xf32>
    %c0_5 = arith.constant 0 : index
    %c0_6 = arith.constant 0 : index
    %5 = vector.load %arg5[%c0_5, %c0_6] : memref<1x128xf32, #tpu.memory_space<vmem>>, vector<1x128xf32>
    %6 = vector.broadcast %5 : vector<1x128xf32> to vector<64x128xf32>
    %7 = arith.addf %4, %6 : vector<64x128xf32>
    %cst = arith.constant 0.000000e+00 : f32
    %8 = vector.broadcast %cst : f32 to vector<64x128xf32>
    %9 = arith.maximumf %7, %8 : vector<64x128xf32>
    %c0_7 = arith.constant 0 : index
    %c0_8 = arith.constant 0 : index
    %c0_9 = arith.constant 0 : index
    %c0_10 = arith.constant 0 : index
    %10 = vector.load %arg6[%c0_7, %c0_8, %c0_9, %c0_10] : memref<1x1x64x128xf32, #tpu.memory_space<vmem>>, vector<1x1x64x128xf32>
    %11 = vector.shape_cast %10 : vector<1x1x64x128xf32> to vector<64x128xf32>
    %12 = vector.shape_cast %9 : vector<64x128xf32> to vector<1x1x64x128xf32>
    tpu.vector_store %arg6[%c0_7, %c0_8, %c0_9, %c0_10], %12 {strides = array<i32>} : memref<1x1x64x128xf32, #tpu.memory_space<vmem>>, vector<1x1x64x128xf32>,
    return
  }
  func.func @transform_0(%arg0: i32, %arg1: i32, %arg2: i32) -> (i32, i32, i32, i32) {
    %c0_i32 = arith.constant 0 : i32
    %c0_i32_0 = arith.constant 0 : i32
    return %arg0, %arg1, %arg2, %c0_i32 : i32, i32, i32, i32
  }
  func.func @transform_1(%arg0: i32, %arg1: i32, %arg2: i32) -> (i32, i32) {
    %c0_i32 = arith.constant 0 : i32
    %c0_i32_0 = arith.constant 0 : i32
    %c0_i32_1 = arith.constant 0 : i32
    return %c0_i32, %c0_i32_0 : i32, i32
  }
  func.func @transform_2(%arg0: i32, %arg1: i32, %arg2: i32) -> (i32, i32) {
    %c0_i32 = arith.constant 0 : i32
    %c0_i32_0 = arith.constant 0 : i32
    %c0_i32_1 = arith.constant 0 : i32
    return %c0_i32, %c0_i32_0 : i32, i32
  }
  func.func @transform_3(%arg0: i32, %arg1: i32, %arg2: i32) -> (i32, i32, i32, i32) {
    %c0_i32 = arith.constant 0 : i32
    %c0_i32_0 = arith.constant 0 : i32
    return %arg0, %arg1, %arg2, %c0_i32 : i32, i32, i32, i32
  }
}

</mosaic_0001>

<llo_original>
// kernel: double_conv.5
$region0: #{double_conv.5}
  #allocation0 [shape = 'u32[]', space=smem, size = 0x4, offset = 0x4, fixed_abs, tag = 'smem constant byte address 0x4 - core index']
  #allocation1 [shape = 'u32[144,128]{1,0:T(1,128)}', space=vmem, size = 0x12000, scoped, tag = 'internal scratch']
  %s0 = inlined_call_operand.vmem [shape: f32[2,8,64,128], index: 0, kind: input, shape index: {}]
  %s1 = inlined_call_operand.vmem [shape: f32[1,128], index: 1, kind: input, shape index: {}]
  %s2 = inlined_call_operand.vmem [shape: f32[1,128], index: 2, kind: input, shape index: {}]
  %s3 = inlined_call_operand.vmem [shape: bf16[2,10,64,128], index: 3, kind: output, shape index: {}]
  %s4 = sld [smem:[#allocation0]]
  $region53: #{double_conv.5} parent=0
    _
  %s6 = ssub.s32 1, %s4
  %s7 = scalar_select 0, %s6, %s4
  loop: start=0, step=1, limit=22
  $region2: #{double_conv.5} parent=0 // loop_pre_header
    _
  $region3: #{double_conv.5} parent=0 // loop_header
    %s9 = sphi 0, %s13
    %p10 = scmp.ge.s32.totalorder %s9, 22
    %s16 = sphi 0, %s35
    %s17 = sphi 0, %s31
    %s18 = sphi 0, %s27
    %s19 = sphi 0, %s16
    %s20 = sphi 0, %s17
    %s21 = sphi 0, %s18
    %s22 = sphi 0, %s19
    %s23 = sphi 0, %s20
    %s24 = sphi 0, %s21
    %s52 = sphi 0, %s54
    %s55 = sphi 0, %s52
    %s56 = sphi 0, %s55
    %s72 = sphi 0, %s56
    %s76 = sphi 0, %s76
    %s78 = sphi 0, %s76
    %s79 = sphi 0, %s78
    %s93 = sphi 0, %s79
    %s97 = sphi 0, %s97
    %s99 = sphi 0, %s97
    %s100 = sphi 0, %s99
    %s114 = sphi 0, %s100
    %s124 = sphi 0, %s126
    %s127 = sphi 0, %s124
    %s128 = sphi 0, %s127
    %s144 = sphi 0, %s128
  $region4: #{double_conv.5} parent=0 // loop_header_branch
    %12 = sbr.rel (%p10) target = $region8
  $region5: #{double_conv.5} parent=0 // loop_body
    %s14 = ssub.s32 %s9, 1
    %s15 = ssub.s32 %s9, 2
    %s25 = sadd.s32 1, %s18
    %p26 = scmp.ge.s32.totalorder %s25, 1
    %s27 = scalar_select %p26, 0, %s25
    %s28 = sadd.s32 1, %s17
    %s29 = scalar_select %p26, %s28, %s17
    %p30 = scmp.ge.s32.totalorder %s29, 10
    %s31 = scalar_select %p30, 0, %s29
    %s32 = sadd.s32 1, %s16
    %s33 = scalar_select %p30, %s32, %s16
    %p34 = scmp.ge.s32.totalorder %s33, 2
    %s35 = scalar_select %p34, 0, %s33
    %s36 = ssub.s32 %s17, 1
    %p37 = scmp.gt.s32.totalorder %s36, 0
    %s38 = scalar_select %p37, %s36, 0
    %p39 = scmp.lt.s32.totalorder %s38, 7
    %s40 = scalar_select %p39, %s38, 7
    %s41 = ssub.s32 %s31, 1
    %p42 = scmp.gt.s32.totalorder %s41, 0
    %s43 = scalar_select %p42, %s41, 0
    %p44 = scmp.lt.s32.totalorder %s43, 7
    %s45 = scalar_select %p44, %s43, 7
    %s46 = ssub.s32 %s16, %s35
    %s47 = ssub.s32 %s40, %s45
    %s48 = sor.u32 %s46, %s47
    %s49 = ssub.s32 %s18, %s27
    %s50 = sor.u32 %s48, %s49
    %p51 = scmp.eq.s32.totalorder %s50, 0
    %s53 = sadd.s32 %s52, 1
    %s54 = scalar_select %p51, %s52, %s53
    %p57 = pneg %p51
    %p58 = scmp.eq.s32.totalorder %s9, 19
    %p59 = por %p57, %p58
    %p60 = scmp.ne.s32.totalorder %s52, %s55
    %p61 = scmp.eq.s32.totalorder %s9, 0
    %p62 = por %p60, %p61
    %p63 = scmp.ne.s32.totalorder %s52, %s55
    %p64 = scmp.eq.s32.totalorder %s14, 19
    %p65 = por %p63, %p64
    %p66 = scmp.ne.s32.totalorder %s55, %s56
    %p67 = scmp.eq.s32.totalorder %s14, 0
    %p68 = por %p66, %p67
    %p69 = scmp.ne.s32.totalorder %s55, %s56
    %p70 = scmp.eq.s32.totalorder %s15, 19
    %p71 = por %p69, %p70
    %p73 = scmp.ne.s32.totalorder %s56, %s72
    %p74 = scmp.eq.s32.totalorder %s15, 0
    %p75 = por %p73, %p74
    %s77 = sadd.s32 %s76, 1
    %p80 = scmp.eq.s32.totalorder %s9, 19
    %p81 = scmp.ne.s32.totalorder %s76, %s78
    %p82 = scmp.eq.s32.totalorder %s9, 0
    %p83 = por %p81, %p82
    %p84 = scmp.ne.s32.totalorder %s76, %s78
    %p85 = scmp.eq.s32.totalorder %s14, 19
    %p86 = por %p84, %p85
    %p87 = scmp.ne.s32.totalorder %s78, %s79
    %p88 = scmp.eq.s32.totalorder %s14, 0
    %p89 = por %p87, %p88
    %p90 = scmp.ne.s32.totalorder %s78, %s79
    %p91 = scmp.eq.s32.totalorder %s15, 19
    %p92 = por %p90, %p91
    %p94 = scmp.ne.s32.totalorder %s79, %s93
    %p95 = scmp.eq.s32.totalorder %s15, 0
    %p96 = por %p94, %p95
    %s98 = sadd.s32 %s97, 1
    %p101 = scmp.eq.s32.totalorder %s9, 19
    %p102 = scmp.ne.s32.totalorder %s97, %s99
    %p103 = scmp.eq.s32.totalorder %s9, 0
    %p104 = por %p102, %p103
    %p105 = scmp.ne.s32.totalorder %s97, %s99
    %p106 = scmp.eq.s32.totalorder %s14, 19
    %p107 = por %p105, %p106
    %p108 = scmp.ne.s32.totalorder %s99, %s100
    %p109 = scmp.eq.s32.totalorder %s14, 0
    %p110 = por %p108, %p109
    %p111 = scmp.ne.s32.totalorder %s99, %s100
    %p112 = scmp.eq.s32.totalorder %s15, 19
    %p113 = por %p111, %p112
    %p115 = scmp.ne.s32.totalorder %s100, %s114
    %p116 = scmp.eq.s32.totalorder %s15, 0
    %p117 = por %p115, %p116
    %s118 = ssub.s32 %s16, %s35
    %s119 = ssub.s32 %s17, %s31
    %s120 = sor.u32 %s118, %s119
    %s121 = ssub.s32 %s18, %s27
    %s122 = sor.u32 %s120, %s121
    %p123 = scmp.eq.s32.totalorder %s122, 0
    %s125 = sadd.s32 %s124, 1
    %s126 = scalar_select %p123, %s124, %s125
    %p129 = pneg %p123
    %p130 = scmp.eq.s32.totalorder %s9, 19
    %p131 = por %p129, %p130
    %p132 = scmp.ne.s32.totalorder %s124, %s127
    %p133 = scmp.eq.s32.totalorder %s9, 0
    %p134 = por %p132, %p133
    %p135 = scmp.ne.s32.totalorder %s124, %s127
    %p136 = scmp.eq.s32.totalorder %s14, 19
    %p137 = por %p135, %p136
    %p138 = scmp.ne.s32.totalorder %s127, %s128
    %p139 = scmp.eq.s32.totalorder %s14, 0
    %p140 = por %p138, %p139
    %p141 = scmp.ne.s32.totalorder %s127, %s128
    %p142 = scmp.eq.s32.totalorder %s15, 19
    %p143 = por %p141, %p142
    %p145 = scmp.ne.s32.totalorder %s128, %s144
    %p146 = scmp.eq.s32.totalorder %s15, 0
    %p147 = por %p145, %p146
    %p148 = scmp.le.s32.totalorder 1, %s9
    %p149 = scmp.lt.s32.totalorder %s9, 21
    %p150 = pnand %p148, %p149
    %p151 = pneg %p150
    // Predicated region
    $region9: #{double_conv.5} parent=5 // pred_check
      _
    $region10: #{double_conv.5} parent=5 // pred_check_branch
      %153 = sbr.rel (%p150) target = $region12
    $region11: #{double_conv.5} parent=5 // pred_region
      %s154 = ssub.s32 %s9, 1
      // Predicated region
      $region13: #{double_conv.5} parent=11 // pred_check
        %p155 = pneg %p89
      $region14: #{double_conv.5} parent=11 // pred_check_branch
        %157 = sbr.rel (%p155) target = $region16
      $region15: #{double_conv.5} parent=11 // pred_region
        _
      $region16: #{double_conv.5} parent=11 // pred_fallthru
        _
      // Predicated region
      $region17: #{double_conv.5} parent=11 // pred_check
        %p158 = pneg %p110
      $region18: #{double_conv.5} parent=11 // pred_check_branch
        %160 = sbr.rel (%p158) target = $region20
      $region19: #{double_conv.5} parent=11 // pred_region
        _
      $region20: #{double_conv.5} parent=11 // pred_fallthru
        _
    $region12: #{double_conv.5} parent=5 // pred_fallthru
      _
    %p161 = scmp.lt.s32.totalorder %s9, 20
    // Predicated region
    $region21: #{double_conv.5} parent=5 // pred_check
      %p162 = pneg %p161
    $region22: #{double_conv.5} parent=5 // pred_check_branch
      %164 = sbr.rel (%p162) target = $region24
    $region23: #{double_conv.5} parent=5 // pred_region
      // Predicated region
      $region25: #{double_conv.5} parent=23 // pred_check
        %p165 = pneg %p62
      $region26: #{double_conv.5} parent=23 // pred_check_branch
        %167 = sbr.rel (%p165) target = $region28
      $region27: #{double_conv.5} parent=23 // pred_region
        %s168 = ssub.s32 %s17, 1
        %p169 = scmp.gt.s32.totalorder %s168, 0
        %s170 = scalar_select %p169, %s168, 0
        %p171 = scmp.lt.s32.totalorder %s170, 7
        %s172 = scalar_select %p171, %s170, 7
        %s173 = smul.u32 8, %s18
        %p174 = scmp.lt.s32.totalorder %s16, 1
        %s175 = scalar_select %p174, %s16, 1
        %p176 = scmp.lt.s32.totalorder %s172, 7
        %s177 = scalar_select %p176, %s172, 7
        %p178 = scmp.lt.s32.totalorder %s173, 7
        %s179 = scalar_select %p178, %s173, 7
        %s180 = smul.addr %s177, 8
        %s181 = sadd.s32 %s179, %s180
        %s182 = smul.addr %s175, 64
        %s183 = sadd.s32 %s181, %s182
        %s184 = smul.addr %s183, 8
        %s185 = scalar_lea.vmem %s0, %s184
        %s186 = ssub.s32 %s17, 1
        %p187 = scmp.gt.s32.totalorder %s186, 0
        %s188 = scalar_select %p187, %s186, 0
        %p189 = scmp.lt.s32.totalorder %s188, 7
        %s190 = scalar_select %p189, %s188, 7
        %s191 = smul.u32 8, %s18
      $region28: #{double_conv.5} parent=23 // pred_fallthru
        _
    $region24: #{double_conv.5} parent=5 // pred_fallthru
      _
    %p192 = scmp.le.s32.totalorder 1, %s9
    %p193 = scmp.lt.s32.totalorder %s9, 21
    %p194 = pnand %p192, %p193
    %p195 = pneg %p194
    // Predicated region
    $region29: #{double_conv.5} parent=5 // pred_check
      _
    $region30: #{double_conv.5} parent=5 // pred_check_branch
      %197 = sbr.rel (%p194) target = $region32
    $region31: #{double_conv.5} parent=5 // pred_region
      %s198 = ssub.s32 %s9, 1
      %s199 = ssub.s32 %s20, 1
      %p200 = scmp.gt.s32.totalorder %s199, 0
      %s201 = scalar_select %p200, %s199, 0
      %p202 = scmp.lt.s32.totalorder %s201, 7
      %s203 = scalar_select %p202, %s201, 7
      %s204 = smul.u32 8, %s21
      %p205 = scmp.lt.s32.totalorder %s19, 1
      %s206 = scalar_select %p205, %s19, 1
      %p207 = scmp.lt.s32.totalorder %s203, 7
      %s208 = scalar_select %p207, %s203, 7
      %p209 = scmp.lt.s32.totalorder %s204, 7
      %s210 = scalar_select %p209, %s204, 7
      %s211 = smul.addr %s208, 8
      %s212 = sadd.s32 %s210, %s211
      %s213 = smul.addr %s206, 64
      %s214 = sadd.s32 %s212, %s213
      %s215 = smul.addr %s214, 8
      %s216 = scalar_lea.vmem %s0, %s215
      %p217 = pneg %p68
      %p218 = pneg %p65
      %p219 = pneg %p89
      %p220 = pneg %p86
      %p221 = pneg %p110
      %p222 = pneg %p107
      %p223 = pneg %p140
      %p224 = pneg %p137
      %s225 = smul.u32 8, %s21
      %p226 = scmp.lt.s32.totalorder %s19, 1
      %s227 = scalar_select %p226, %s19, 1
      %p228 = scmp.lt.s32.totalorder %s20, 9
      %s229 = scalar_select %p228, %s20, 9
      %p230 = scmp.lt.s32.totalorder %s225, 7
      %s231 = scalar_select %p230, %s225, 7
      %s232 = smul.addr %s229, 8
      %s233 = sadd.s32 %s231, %s232
      %s234 = smul.addr %s227, 80
      %s235 = sadd.s32 %s233, %s234
      %s236 = smul.addr %s235, 4
      %s237 = scalar_lea.vmem %s3, %s236
      %s238 = ssub.s32 %s20, 1
      %p239 = scmp.gt.s32.totalorder %s238, 0
      %s240 = scalar_select %p239, %s238, 0
      %p241 = scmp.lt.s32.totalorder %s240, 7
      %s242 = scalar_select %p241, %s240, 7
      %s243 = smul.u32 8, %s21
      %p244 = scmp.lt.s32.totalorder %s19, 1
      %s245 = scalar_select %p244, %s19, 1
      %p246 = scmp.lt.s32.totalorder %s242, 7
      %s247 = scalar_select %p246, %s242, 7
      %p248 = scmp.lt.s32.totalorder %s243, 7
      %s249 = scalar_select %p248, %s243, 7
      %s250 = smul.addr %s247, 8
      %s251 = sadd.s32 %s249, %s250
      %s252 = smul.addr %s245, 64
      %s253 = sadd.s32 %s251, %s252
      %s254 = smul.addr %s253, 8
      %s255 = scalar_lea.vmem %s0, %s254
      %s256 = ssub.s32 %s20, 1
      %p257 = scmp.gt.s32.totalorder %s256, 0
      %s258 = scalar_select %p257, %s256, 0
      %p259 = scmp.lt.s32.totalorder %s258, 7
      %s260 = scalar_select %p259, %s258, 7
      %s261 = smul.u32 8, %s21
      %s262 = smul.u32 8, %s21
      %p263 = scmp.lt.s32.totalorder %s19, 1
      %s264 = scalar_select %p263, %s19, 1
      %p265 = scmp.lt.s32.totalorder %s20, 9
      %s266 = scalar_select %p265, %s20, 9
      %p267 = scmp.lt.s32.totalorder %s262, 7
      %s268 = scalar_select %p267, %s262, 7
      %s269 = smul.addr %s266, 8
      %s270 = sadd.s32 %s268, %s269
      %s271 = smul.addr %s264, 80
      %s272 = sadd.s32 %s270, %s271
      %s273 = smul.addr %s272, 4
      %s274 = scalar_lea.vmem %s3, %s273
      %s275 = smul.u32 8, %s21
      %p277 = scmp.ge.s32.totalorder %s20, 1
      %p278 = scmp.le.s32.totalorder %s20, 8
      %p279 = pnand %p277, %p278
      %p280 = pneg %p279
      // Predicated region
      $region33: #{double_conv.5} parent=31 // pred_check
        _
      $region34: #{double_conv.5} parent=31 // pred_check_branch
        %282 = sbr.rel (%p279) target = $region36
      $region35: #{double_conv.5} parent=31 // pred_region
        %v283 = vld [vmem:[%s255] sm:$0xff]
        %v284 = vld [vmem:[%s255 + $0x8] sm:$0xff]
        %v285 = vld [vmem:[%s255 + $0x10] sm:$0xff]
        %v286 = vld [vmem:[%s255 + $0x18] sm:$0xff]
        %v287 = vld [vmem:[%s255 + $0x20] sm:$0xff]
        %v288 = vld [vmem:[%s255 + $0x28] sm:$0xff]
        %v289 = vld [vmem:[%s255 + $0x30] sm:$0xff]
        %v290 = vld [vmem:[%s255 + $0x38] sm:$0xff]
        %v291 = vld [vmem:[%s1] sm:$0x1]
        %v293 = vlaneseq
        %v294 = vshrl.u32 %v293, 7
        %v295 = vsub.s32 0, %v294
        %v296 = vrot.slane %v291, %v295
        %v298 = vmul.f32 %v283, %v296
        %v299 = vmul.f32 %v284, %v296
        %v300 = vmul.f32 %v285, %v296
        %v301 = vmul.f32 %v286, %v296
        %v302 = vmul.f32 %v287, %v296
        %v303 = vmul.f32 %v288, %v296
        %v304 = vmul.f32 %v289, %v296
        %v305 = vmul.f32 %v290, %v296
        %v306 = vld [vmem:[%s2] sm:$0x1]
        %v308 = vlaneseq
        %v309 = vshrl.u32 %v308, 7
        %v310 = vsub.s32 0, %v309
        %v311 = vrot.slane %v306, %v310
        %v313 = vadd.f32 %v298, %v311
        %v314 = vadd.f32 %v299, %v311
        %v315 = vadd.f32 %v300, %v311
        %v316 = vadd.f32 %v301, %v311
        %v317 = vadd.f32 %v302, %v311
        %v318 = vadd.f32 %v303, %v311
        %v319 = vadd.f32 %v304, %v311
        %v320 = vadd.f32 %v305, %v311
        %v321 = vmax.f32 %v313, 0.0
        %v322 = vmax.f32 %v314, 0.0
        %v323 = vmax.f32 %v315, 0.0
        %v324 = vmax.f32 %v316, 0.0
        %v325 = vmax.f32 %v317, 0.0
        %v326 = vmax.f32 %v318, 0.0
        %v327 = vmax.f32 %v319, 0.0
        %v328 = vmax.f32 %v320, 0.0
        %v329 = vpack.c.bf16 %v322, %v321
        %v330 = vpack.c.bf16 %v324, %v323
        %v331 = vpack.c.bf16 %v326, %v325
        %v332 = vpack.c.bf16 %v328, %v327
        %v337 = vunpack.c.l.b16 %v329
        %v338 = vunpack.c.h.b16 %v329
        %v339 = vunpack.c.l.b16 %v330
        %v340 = vunpack.c.h.b16 %v330
        %v341 = vunpack.c.l.b16 %v331
        %v342 = vunpack.c.h.b16 %v331
        %v343 = vunpack.c.l.b16 %v332
        %v344 = vunpack.c.h.b16 %v332
        %v345 = vpack.c.b16 %v337, %v337
        %v346 = vpack.c.b16 %v338, %v338
        %v347 = vpack.c.b16 %v339, %v339
        %v348 = vpack.c.b16 %v340, %v340
        %v349 = vpack.c.b16 %v341, %v341
        %v350 = vpack.c.b16 %v342, %v342
        %v351 = vpack.c.b16 %v343, %v343
        %v352 = vpack.c.b16 %v344, %v344
        %361 = vst [vmem:[%s274] sm:$0xf] %v345
        %362 = vst [vmem:[%s274 + $0x4] sm:$0xf] %v346
        %363 = vst [vmem:[%s274 + $0x8] sm:$0xf] %v347
        %364 = vst [vmem:[%s274 + $0xc] sm:$0xf] %v348
        %365 = vst [vmem:[%s274 + $0x10] sm:$0xf] %v349
        %366 = vst [vmem:[%s274 + $0x14] sm:$0xf] %v350
        %367 = vst [vmem:[%s274 + $0x18] sm:$0xf] %v351
        %368 = vst [vmem:[%s274 + $0x1c] sm:$0xf] %v352
      $region36: #{double_conv.5} parent=31 // pred_fallthru
        _
      %p369 = pneg %p280
      // Predicated region
      $region37: #{double_conv.5} parent=31 // pred_check
        _
      $region38: #{double_conv.5} parent=31 // pred_check_branch
        %371 = sbr.rel (%p280) target = $region40
      $region39: #{double_conv.5} parent=31 // pred_region
        %372 = vst [vmem:[%s274] sm:$0xf] 0
        %373 = vst [vmem:[%s274 + $0x4] sm:$0xf] 0
        %374 = vst [vmem:[%s274 + $0x8] sm:$0xf] 0
        %375 = vst [vmem:[%s274 + $0xc] sm:$0xf] 0
        %376 = vst [vmem:[%s274 + $0x10] sm:$0xf] 0
        %377 = vst [vmem:[%s274 + $0x14] sm:$0xf] 0
        %378 = vst [vmem:[%s274 + $0x18] sm:$0xf] 0
        %379 = vst [vmem:[%s274 + $0x1c] sm:$0xf] 0
      $region40: #{double_conv.5} parent=31 // pred_fallthru
        _
      %s380 = smul.u32 8, %s21
      %p381 = scmp.lt.s32.totalorder %s19, 1
      %s382 = scalar_select %p381, %s19, 1
      %p383 = scmp.lt.s32.totalorder %s20, 9
      %s384 = scalar_select %p383, %s20, 9
      %p385 = scmp.lt.s32.totalorder %s380, 7
      %s386 = scalar_select %p385, %s380, 7
      %s387 = smul.addr %s384, 8
      %s388 = sadd.s32 %s386, %s387
      %s389 = smul.addr %s382, 80
      %s390 = sadd.s32 %s388, %s389
      %s391 = smul.addr %s390, 4
      %s392 = scalar_lea.vmem %s3, %s391
      // Predicated region
      $region41: #{double_conv.5} parent=31 // pred_check
        %p393 = pneg %p137
      $region42: #{double_conv.5} parent=31 // pred_check_branch
        %395 = sbr.rel (%p393) target = $region44
      $region43: #{double_conv.5} parent=31 // pred_region
        %s396 = smul.u32 8, %s21
      $region44: #{double_conv.5} parent=31 // pred_fallthru
        _
    $region32: #{double_conv.5} parent=5 // pred_fallthru
      _
    %p397 = scmp.le.s32.totalorder 2, %s9
    // Predicated region
    $region45: #{double_conv.5} parent=5 // pred_check
      %p398 = pneg %p397
    $region46: #{double_conv.5} parent=5 // pred_check_branch
      %400 = sbr.rel (%p398) target = $region48
    $region47: #{double_conv.5} parent=5 // pred_region
      %s401 = ssub.s32 %s9, 2
      // Predicated region
      $region49: #{double_conv.5} parent=47 // pred_check
        %p402 = pneg %p143
      $region50: #{double_conv.5} parent=47 // pred_check_branch
        %404 = sbr.rel (%p402) target = $region52
      $region51: #{double_conv.5} parent=47 // pred_region
        %s405 = smul.u32 8, %s24
        %p406 = scmp.lt.s32.totalorder %s22, 1
        %s407 = scalar_select %p406, %s22, 1
        %p408 = scmp.lt.s32.totalorder %s23, 9
        %s409 = scalar_select %p408, %s23, 9
        %p410 = scmp.lt.s32.totalorder %s405, 7
        %s411 = scalar_select %p410, %s405, 7
        %s412 = smul.addr %s409, 8
        %s413 = sadd.s32 %s411, %s412
        %s414 = smul.addr %s407, 80
        %s415 = sadd.s32 %s413, %s414
        %s416 = smul.addr %s415, 4
        %s417 = scalar_lea.vmem %s3, %s416
      $region52: #{double_conv.5} parent=47 // pred_fallthru
        _
    $region48: #{double_conv.5} parent=5 // pred_fallthru
      _
  $region6: #{double_conv.5} parent=0 // loop_footer
    %s13 = sadd.s32 1, %s9
  $region7: #{double_conv.5} parent=0 // loop_footer_branch
    %8 = sbr.rel target = $region3
  $region8: #{double_conv.5} parent=0 // loop_exit
    _

// kernel: double_conv.4
$region0: #{double_conv.4}
  #allocation0 [shape = 'u32[]', space=smem, size = 0x4, offset = 0x4, fixed_abs, tag = 'smem constant byte address 0x4 - core index']
  #allocation1 [shape = 'u32[144,128]{1,0:T(1,128)}', space=vmem, size = 0x12000, scoped, tag = 'internal scratch']
  %s0 = inlined_call_operand.vmem [shape: bf16[2,8,64,128], index: 0, kind: input, shape index: {}]
  %s1 = inlined_call_operand.vmem [shape: bf16[1,128,128], index: 1, kind: input, shape index: {}]
  %s2 = inlined_call_operand.vmem [shape: f32[2,8,64,128], index: 2, kind: output, shape index: {0}]
  %s3 = inlined_call_operand.vmem [shape: f32[2,8,1,1,128], index: 3, kind: output, shape index: {1}]
  %s4 = inlined_call_operand.vmem [shape: f32[2,8,1,1,128], index: 4, kind: output, shape index: {2}]
  %5 = xla_tuple %s2, %s3, %s4
  %s6 = sld [smem:[#allocation0]]
  $region65: #{double_conv.4} parent=0
    _
  %s8 = ssub.s32 1, %s6
  %s9 = scalar_select 0, %s8, %s6
  loop: start=0, step=1, limit=18
  $region2: #{double_conv.4} parent=0 // loop_pre_header
    _
  $region3: #{double_conv.4} parent=0 // loop_header
    %s11 = sphi 0, %s15
    %p12 = scmp.ge.s32.totalorder %s11, 18
    %s18 = sphi 0, %s44
    %s19 = sphi 0, %s40
    %s20 = sphi 0, %s36
    %s21 = sphi 0, %s32
    %s22 = sphi 0, %s18
    %s23 = sphi 0, %s19
    %s24 = sphi 0, %s20
    %s25 = sphi 0, %s21
    %s26 = sphi 0, %s22
    %s27 = sphi 0, %s23
    %s28 = sphi 0, %s24
    %s29 = sphi 0, %s25
    %s53 = sphi 0, %s55
    %s56 = sphi 0, %s53
    %s57 = sphi 0, %s56
    %s73 = sphi 0, %s57
    %s77 = sphi 0, %s77
    %s79 = sphi 0, %s77
    %s80 = sphi 0, %s79
    %s94 = sphi 0, %s80
    %s104 = sphi 0, %s106
    %s107 = sphi 0, %s104
    %s108 = sphi 0, %s107
    %s124 = sphi 0, %s108
    %s134 = sphi 0, %s136
    %s137 = sphi 0, %s134
    %s138 = sphi 0, %s137
    %s154 = sphi 0, %s138
    %s164 = sphi 0, %s166
    %s167 = sphi 0, %s164
    %s168 = sphi 0, %s167
    %s184 = sphi 0, %s168
  $region4: #{double_conv.4} parent=0 // loop_header_branch
    %14 = sbr.rel (%p12) target = $region8
  $region5: #{double_conv.4} parent=0 // loop_body
    %s16 = ssub.s32 %s11, 1
    %s17 = ssub.s32 %s11, 2
    %s30 = sadd.s32 1, %s21
    %p31 = scmp.ge.s32.totalorder %s30, 1
    %s32 = scalar_select %p31, 0, %s30
    %s33 = sadd.s32 1, %s20
    %s34 = scalar_select %p31, %s33, %s20
    %p35 = scmp.ge.s32.totalorder %s34, 1
    %s36 = scalar_select %p35, 0, %s34
    %s37 = sadd.s32 1, %s19
    %s38 = scalar_select %p35, %s37, %s19
    %p39 = scmp.ge.s32.totalorder %s38, 8
    %s40 = scalar_select %p39, 0, %s38
    %s41 = sadd.s32 1, %s18
    %s42 = scalar_select %p39, %s41, %s18
    %p43 = scmp.ge.s32.totalorder %s42, 2
    %s44 = scalar_select %p43, 0, %s42
    %s45 = sadd.s32 %s19, %s21
    %s46 = sadd.s32 %s40, %s32
    %s47 = ssub.s32 %s18, %s44
    %s48 = ssub.s32 %s45, %s46
    %s49 = sor.u32 %s47, %s48
    %s50 = ssub.s32 %s20, %s36
    %s51 = sor.u32 %s49, %s50
    %p52 = scmp.eq.s32.totalorder %s51, 0
    %s54 = sadd.s32 %s53, 1
    %s55 = scalar_select %p52, %s53, %s54
    %p58 = pneg %p52
    %p59 = scmp.eq.s32.totalorder %s11, 15
    %p60 = por %p58, %p59
    %p61 = scmp.ne.s32.totalorder %s53, %s56
    %p62 = scmp.eq.s32.totalorder %s11, 0
    %p63 = por %p61, %p62
    %p64 = scmp.ne.s32.totalorder %s53, %s56
    %p65 = scmp.eq.s32.totalorder %s16, 15
    %p66 = por %p64, %p65
    %p67 = scmp.ne.s32.totalorder %s56, %s57
    %p68 = scmp.eq.s32.totalorder %s16, 0
    %p69 = por %p67, %p68
    %p70 = scmp.ne.s32.totalorder %s56, %s57
    %p71 = scmp.eq.s32.totalorder %s17, 15
    %p72 = por %p70, %p71
    %p74 = scmp.ne.s32.totalorder %s57, %s73
    %p75 = scmp.eq.s32.totalorder %s17, 0
    %p76 = por %p74, %p75
    %s78 = sadd.s32 %s77, 1
    %p81 = scmp.eq.s32.totalorder %s11, 15
    %p82 = scmp.ne.s32.totalorder %s77, %s79
    %p83 = scmp.eq.s32.totalorder %s11, 0
    %p84 = por %p82, %p83
    %p85 = scmp.ne.s32.totalorder %s77, %s79
    %p86 = scmp.eq.s32.totalorder %s16, 15
    %p87 = por %p85, %p86
    %p88 = scmp.ne.s32.totalorder %s79, %s80
    %p89 = scmp.eq.s32.totalorder %s16, 0
    %p90 = por %p88, %p89
    %p91 = scmp.ne.s32.totalorder %s79, %s80
    %p92 = scmp.eq.s32.totalorder %s17, 15
    %p93 = por %p91, %p92
    %p95 = scmp.ne.s32.totalorder %s80, %s94
    %p96 = scmp.eq.s32.totalorder %s17, 0
    %p97 = por %p95, %p96
    %s98 = ssub.s32 %s18, %s44
    %s99 = ssub.s32 %s19, %s40
    %s100 = sor.u32 %s98, %s99
    %s101 = ssub.s32 %s20, %s36
    %s102 = sor.u32 %s100, %s101
    %p103 = scmp.eq.s32.totalorder %s102, 0
    %s105 = sadd.s32 %s104, 1
    %s106 = scalar_select %p103, %s104, %s105
    %p109 = pneg %p103
    %p110 = scmp.eq.s32.totalorder %s11, 15
    %p111 = por %p109, %p110
    %p112 = scmp.ne.s32.totalorder %s104, %s107
    %p113 = scmp.eq.s32.totalorder %s11, 0
    %p114 = por %p112, %p113
    %p115 = scmp.ne.s32.totalorder %s104, %s107
    %p116 = scmp.eq.s32.totalorder %s16, 15
    %p117 = por %p115, %p116
    %p118 = scmp.ne.s32.totalorder %s107, %s108
    %p119 = scmp.eq.s32.totalorder %s16, 0
    %p120 = por %p118, %p119
    %p121 = scmp.ne.s32.totalorder %s107, %s108
    %p122 = scmp.eq.s32.totalorder %s17, 15
    %p123 = por %p121, %p122
    %p125 = scmp.ne.s32.totalorder %s108, %s124
    %p126 = scmp.eq.s32.totalorder %s17, 0
    %p127 = por %p125, %p126
    %s128 = ssub.s32 %s18, %s44
    %s129 = ssub.s32 %s19, %s40
    %s130 = sor.u32 %s128, %s129
    %s131 = ssub.s32 %s20, %s36
    %s132 = sor.u32 %s130, %s131
    %p133 = scmp.eq.s32.totalorder %s132, 0
    %s135 = sadd.s32 %s134, 1
    %s136 = scalar_select %p133, %s134, %s135
    %p139 = pneg %p133
    %p140 = scmp.eq.s32.totalorder %s11, 15
    %p141 = por %p139, %p140
    %p142 = scmp.ne.s32.totalorder %s134, %s137
    %p143 = scmp.eq.s32.totalorder %s11, 0
    %p144 = por %p142, %p143
    %p145 = scmp.ne.s32.totalorder %s134, %s137
    %p146 = scmp.eq.s32.totalorder %s16, 15
    %p147 = por %p145, %p146
    %p148 = scmp.ne.s32.totalorder %s137, %s138
    %p149 = scmp.eq.s32.totalorder %s16, 0
    %p150 = por %p148, %p149
    %p151 = scmp.ne.s32.totalorder %s137, %s138
    %p152 = scmp.eq.s32.totalorder %s17, 15
    %p153 = por %p151, %p152
    %p155 = scmp.ne.s32.totalorder %s138, %s154
    %p156 = scmp.eq.s32.totalorder %s17, 0
    %p157 = por %p155, %p156
    %s158 = ssub.s32 %s18, %s44
    %s159 = ssub.s32 %s19, %s40
    %s160 = sor.u32 %s158, %s159
    %s161 = ssub.s32 %s20, %s36
    %s162 = sor.u32 %s160, %s161
    %p163 = scmp.eq.s32.totalorder %s162, 0
    %s165 = sadd.s32 %s164, 1
    %s166 = scalar_select %p163, %s164, %s165
    %p169 = pneg %p163
    %p170 = scmp.eq.s32.totalorder %s11, 15
    %p171 = por %p169, %p170
    %p172 = scmp.ne.s32.totalorder %s164, %s167
    %p173 = scmp.eq.s32.totalorder %s11, 0
    %p174 = por %p172, %p173
    %p175 = scmp.ne.s32.totalorder %s164, %s167
    %p176 = scmp.eq.s32.totalorder %s16, 15
    %p177 = por %p175, %p176
    %p178 = scmp.ne.s32.totalorder %s167, %s168
    %p179 = scmp.eq.s32.totalorder %s16, 0
    %p180 = por %p178, %p179
    %p181 = scmp.ne.s32.totalorder %s167, %s168
    %p182 = scmp.eq.s32.totalorder %s17, 15
    %p183 = por %p181, %p182
    %p185 = scmp.ne.s32.totalorder %s168, %s184
    %p186 = scmp.eq.s32.totalorder %s17, 0
    %p187 = por %p185, %p186
    %p188 = scmp.le.s32.totalorder 1, %s11
    %p189 = scmp.lt.s32.totalorder %s11, 17
    %p190 = pnand %p188, %p189
    %p191 = pneg %p190
    // Predicated region
    $region9: #{double_conv.4} parent=5 // pred_check
      _
    $region10: #{double_conv.4} parent=5 // pred_check_branch
      %193 = sbr.rel (%p190) target = $region12
    $region11: #{double_conv.4} parent=5 // pred_region
      %s194 = ssub.s32 %s11, 1
      // Predicated region
      $region13: #{double_conv.4} parent=11 // pred_check
        %p195 = pneg %p90
      $region14: #{double_conv.4} parent=11 // pred_check_branch
        %197 = sbr.rel (%p195) target = $region16
      $region15: #{double_conv.4} parent=11 // pred_region
        _
      $region16: #{double_conv.4} parent=11 // pred_fallthru
        _
    $region12: #{double_conv.4} parent=5 // pred_fallthru
      _
    %p198 = scmp.lt.s32.totalorder %s11, 16
    // Predicated region
    $region17: #{double_conv.4} parent=5 // pred_check
      %p199 = pneg %p198
    $region18: #{double_conv.4} parent=5 // pred_check_branch
      %201 = sbr.rel (%p199) target = $region20
    $region19: #{double_conv.4} parent=5 // pred_region
      // Predicated region
      $region21: #{double_conv.4} parent=19 // pred_check
        %p202 = pneg %p63
      $region22: #{double_conv.4} parent=19 // pred_check_branch
        %204 = sbr.rel (%p202) target = $region24
      $region23: #{double_conv.4} parent=19 // pred_region
        %s205 = sadd.s32 %s19, %s21
        %s206 = smul.u32 8, %s20
        %p207 = scmp.lt.s32.totalorder %s18, 1
        %s208 = scalar_select %p207, %s18, 1
        %p209 = scmp.lt.s32.totalorder %s205, 7
        %s210 = scalar_select %p209, %s205, 7
        %p211 = scmp.lt.s32.totalorder %s206, 7
        %s212 = scalar_select %p211, %s206, 7
        %s213 = smul.addr %s210, 8
        %s214 = sadd.s32 %s212, %s213
        %s215 = smul.addr %s208, 64
        %s216 = sadd.s32 %s214, %s215
        %s217 = smul.addr %s216, 4
        %s218 = scalar_lea.vmem %s0, %s217
        %s219 = sadd.s32 %s19, %s21
        %s220 = smul.u32 8, %s20
      $region24: #{double_conv.4} parent=19 // pred_fallthru
        _
    $region20: #{double_conv.4} parent=5 // pred_fallthru
      _
    %p221 = scmp.le.s32.totalorder 1, %s11
    %p222 = scmp.lt.s32.totalorder %s11, 17
    %p223 = pnand %p221, %p222
    %p224 = pneg %p223
    // Predicated region
    $region25: #{double_conv.4} parent=5 // pred_check
      _
    $region26: #{double_conv.4} parent=5 // pred_check_branch
      %226 = sbr.rel (%p223) target = $region28
    $region27: #{double_conv.4} parent=5 // pred_region
      %s227 = ssub.s32 %s11, 1
      %s228 = sadd.s32 %s23, %s25
      %s229 = smul.u32 8, %s24
      %p230 = scmp.lt.s32.totalorder %s22, 1
      %s231 = scalar_select %p230, %s22, 1
      %p232 = scmp.lt.s32.totalorder %s228, 7
      %s233 = scalar_select %p232, %s228, 7
      %p234 = scmp.lt.s32.totalorder %s229, 7
      %s235 = scalar_select %p234, %s229, 7
      %s236 = smul.addr %s233, 8
      %s237 = sadd.s32 %s235, %s236
      %s238 = smul.addr %s231, 64
      %s239 = sadd.s32 %s237, %s238
      %s240 = smul.addr %s239, 4
      %s241 = scalar_lea.vmem %s0, %s240
      %p242 = pneg %p69
      %p243 = pneg %p66
      %p244 = pneg %p90
      %p245 = pneg %p87
      %p246 = pneg %p120
      %p247 = pneg %p117
      %s248 = smul.u32 8, %s24
      %p249 = scmp.lt.s32.totalorder %s22, 1
      %s250 = scalar_select %p249, %s22, 1
      %p251 = scmp.lt.s32.totalorder %s23, 7
      %s252 = scalar_select %p251, %s23, 7
      %p253 = scmp.lt.s32.totalorder %s248, 7
      %s254 = scalar_select %p253, %s248, 7
      %s255 = smul.addr %s252, 8
      %s256 = sadd.s32 %s254, %s255
      %s257 = smul.addr %s250, 64
      %s258 = sadd.s32 %s256, %s257
      %s259 = smul.addr %s258, 8
      %s260 = scalar_lea.vmem %s2, %s259
      %p261 = pneg %p150
      %p262 = pneg %p147
      %p263 = scmp.lt.s32.totalorder %s22, 1
      %s264 = scalar_select %p263, %s22, 1
      %p265 = scmp.lt.s32.totalorder %s23, 7
      %s266 = scalar_select %p265, %s23, 7
      %p267 = scmp.lt.s32.totalorder %s24, 0
      %s268 = scalar_select %p267, %s24, 0
      %s269 = sadd.s32 %s268, %s266
      %s270 = smul.addr %s264, 8
      %s271 = sadd.s32 %s269, %s270
      %s272 = scalar_lea.vmem %s3, %s271
      %p273 = pneg %p180
      %p274 = pneg %p177
      %p275 = scmp.lt.s32.totalorder %s22, 1
      %s276 = scalar_select %p275, %s22, 1
      %p277 = scmp.lt.s32.totalorder %s23, 7
      %s278 = scalar_select %p277, %s23, 7
      %p279 = scmp.lt.s32.totalorder %s24, 0
      %s280 = scalar_select %p279, %s24, 0
      %s281 = sadd.s32 %s280, %s278
      %s282 = smul.addr %s276, 8
      %s283 = sadd.s32 %s281, %s282
      %s284 = scalar_lea.vmem %s4, %s283
      %s285 = sadd.s32 %s23, %s25
      %s286 = smul.u32 8, %s24
      %p287 = scmp.lt.s32.totalorder %s22, 1
      %s288 = scalar_select %p287, %s22, 1
      %p289 = scmp.lt.s32.totalorder %s285, 7
      %s290 = scalar_select %p289, %s285, 7
      %p291 = scmp.lt.s32.totalorder %s286, 7
      %s292 = scalar_select %p291, %s286, 7
      %s293 = smul.addr %s290, 8
      %s294 = sadd.s32 %s292, %s293
      %s295 = smul.addr %s288, 64
      %s296 = sadd.s32 %s294, %s295
      %s297 = smul.addr %s296, 4
      %s298 = scalar_lea.vmem %s0, %s297
      %s299 = sadd.s32 %s23, %s25
      %s300 = smul.u32 8, %s24
      %s301 = smul.u32 8, %s24
      %p302 = scmp.lt.s32.totalorder %s22, 1
      %s303 = scalar_select %p302, %s22, 1
      %p304 = scmp.lt.s32.totalorder %s23, 7
      %s305 = scalar_select %p304, %s23, 7
      %p306 = scmp.lt.s32.totalorder %s301, 7
      %s307 = scalar_select %p306, %s301, 7
      %s308 = smul.addr %s305, 8
      %s309 = sadd.s32 %s307, %s308
      %s310 = smul.addr %s303, 64
      %s311 = sadd.s32 %s309, %s310
      %s312 = smul.addr %s311, 8
      %s313 = scalar_lea.vmem %s2, %s312
      %s314 = smul.u32 8, %s24
      %p315 = scmp.lt.s32.totalorder %s22, 1
      %s316 = scalar_select %p315, %s22, 1
      %p317 = scmp.lt.s32.totalorder %s23, 7
      %s318 = scalar_select %p317, %s23, 7
      %p319 = scmp.lt.s32.totalorder %s24, 0
      %s320 = scalar_select %p319, %s24, 0
      %s321 = sadd.s32 %s320, %s318
      %s322 = smul.addr %s316, 8
      %s323 = sadd.s32 %s321, %s322
      %s324 = scalar_lea.vmem %s3, %s323
      %p325 = scmp.lt.s32.totalorder %s22, 1
      %s326 = scalar_select %p325, %s22, 1
      %p327 = scmp.lt.s32.totalorder %s23, 7
      %s328 = scalar_select %p327, %s23, 7
      %p329 = scmp.lt.s32.totalorder %s24, 0
      %s330 = scalar_select %p329, %s24, 0
      %s331 = sadd.s32 %s330, %s328
      %s332 = smul.addr %s326, 8
      %s333 = sadd.s32 %s331, %s332
      %s334 = scalar_lea.vmem %s4, %s333
      %p336 = scmp.eq.s32.totalorder %s25, 0
      // Predicated region
      $region29: #{double_conv.4} parent=27 // pred_check
        %p337 = pneg %p336
      $region30: #{double_conv.4} parent=27 // pred_check_branch
        %339 = sbr.rel (%p337) target = $region32
      $region31: #{double_conv.4} parent=27 // pred_region
        %340 = vst [vmem:[%s313] sm:$0xff] 0.0
        %341 = vst [vmem:[%s313 + $0x8] sm:$0xff] 0.0
        %342 = vst [vmem:[%s313 + $0x10] sm:$0xff] 0.0
        %343 = vst [vmem:[%s313 + $0x18] sm:$0xff] 0.0
        %344 = vst [vmem:[%s313 + $0x20] sm:$0xff] 0.0
        %345 = vst [vmem:[%s313 + $0x28] sm:$0xff] 0.0
        %346 = vst [vmem:[%s313 + $0x30] sm:$0xff] 0.0
        %347 = vst [vmem:[%s313 + $0x38] sm:$0xff] 0.0
      $region32: #{double_conv.4} parent=27 // pred_fallthru
        _
      %v348 = vld [vmem:[%s313] sm:$0xff]
      %v349 = vld [vmem:[%s313 + $0x8] sm:$0xff]
      %v350 = vld [vmem:[%s313 + $0x10] sm:$0xff]
      %v351 = vld [vmem:[%s313 + $0x18] sm:$0xff]
      %v352 = vld [vmem:[%s313 + $0x20] sm:$0xff]
      %v353 = vld [vmem:[%s313 + $0x28] sm:$0xff]
      %v354 = vld [vmem:[%s313 + $0x30] sm:$0xff]
      %v355 = vld [vmem:[%s313 + $0x38] sm:$0xff]
      %v356 = vld [vmem:[%s298] sm:$0xf]
      %v357 = vld [vmem:[%s298 + $0x4] sm:$0xf]
      %v358 = vld [vmem:[%s298 + $0x8] sm:$0xf]
      %v359 = vld [vmem:[%s298 + $0xc] sm:$0xf]
      %v360 = vld [vmem:[%s298 + $0x10] sm:$0xf]
      %v361 = vld [vmem:[%s298 + $0x14] sm:$0xf]
      %v362 = vld [vmem:[%s298 + $0x18] sm:$0xf]
      %v363 = vld [vmem:[%s298 + $0x1c] sm:$0xf]
      %s364 = smul.u32 %s25, 16
      %s365 = smul.addr %s364, 4
      %s366 = scalar_lea.vmem %s1, %s365
      %v367 = vld [vmem:[%s366] sm:$0xf]
      %v368 = vld [vmem:[%s366 + $0x4] sm:$0xf]
      %v369 = vld [vmem:[%s366 + $0x8] sm:$0xf]
      %v370 = vld [vmem:[%s366 + $0xc] sm:$0xf]
      %v371 = vld [vmem:[%s366 + $0x10] sm:$0xf]
      %v372 = vld [vmem:[%s366 + $0x14] sm:$0xf]
      %v373 = vld [vmem:[%s366 + $0x18] sm:$0xf]
      %v374 = vld [vmem:[%s366 + $0x1c] sm:$0xf]
      %v375 = vld [vmem:[%s366 + $0x20] sm:$0xf]
      %v376 = vld [vmem:[%s366 + $0x24] sm:$0xf]
      %v377 = vld [vmem:[%s366 + $0x28] sm:$0xf]
      %v378 = vld [vmem:[%s366 + $0x2c] sm:$0xf]
      %v379 = vld [vmem:[%s366 + $0x30] sm:$0xf]
      %v380 = vld [vmem:[%s366 + $0x34] sm:$0xf]
      %v381 = vld [vmem:[%s366 + $0x38] sm:$0xf]
      %v382 = vld [vmem:[%s366 + $0x3c] sm:$0xf]
      %v391 = vunpack.c.l.b16 %v356
      %v392 = vunpack.c.l.b16 %v357
      %v393 = vunpack.c.l.b16 %v358
      %v394 = vunpack.c.l.b16 %v359
      %v395 = vunpack.c.l.b16 %v360
      %v396 = vunpack.c.l.b16 %v361
      %v397 = vunpack.c.l.b16 %v362
      %v398 = vunpack.c.l.b16 %v363
      %v399 = vpack.c.b16 %v392, %v391
      %v400 = vpack.c.b16 %v394, %v393
      %v401 = vpack.c.b16 %v396, %v395
      %v402 = vpack.c.b16 %v398, %v397
      %v423 = vunpack.c.l.b16 %v367
      %v424 = vunpack.c.l.b16 %v368
      %v425 = vunpack.c.l.b16 %v369
      %v426 = vunpack.c.l.b16 %v370
      %v427 = vunpack.c.l.b16 %v371
      %v428 = vunpack.c.l.b16 %v372
      %v429 = vunpack.c.l.b16 %v373
      %v430 = vunpack.c.l.b16 %v374
      %v431 = vunpack.c.l.b16 %v375
      %v432 = vunpack.c.l.b16 %v376
      %v433 = vunpack.c.l.b16 %v377
      %v434 = vunpack.c.l.b16 %v378
      %v435 = vunpack.c.l.b16 %v379
      %v436 = vunpack.c.l.b16 %v380
      %v437 = vunpack.c.l.b16 %v381
      %v438 = vunpack.c.l.b16 %v382
      %v439 = vpack.c.b16 %v424, %v423
      %v440 = vpack.c.b16 %v426, %v425
      %v441 = vpack.c.b16 %v428, %v427
      %v442 = vpack.c.b16 %v430, %v429
      %v443 = vpack.c.b16 %v432, %v431
      %v444 = vpack.c.b16 %v434, %v433
      %v445 = vpack.c.b16 %v436, %v435
      %v446 = vpack.c.b16 %v438, %v437
      %455 = vmatprep.subr.bf16.mxu0 0
      %456 = vmatpush1.bf16.msra.mxu0 %v439
      %457 = vmatprep.subr.bf16.mxu0 0
      %458 = vmatpush1.bf16.msra.mxu0 %v440
      %459 = vmatprep.subr.bf16.mxu0 0
      %460 = vmatpush1.bf16.msra.mxu0 %v441
      %461 = vmatprep.subr.bf16.mxu0 0
      %462 = vmatpush1.bf16.msra.mxu0 %v442
      %463 = vmatprep.subr.bf16.mxu0 0
      %464 = vmatpush1.bf16.msra.mxu0 %v443
      %465 = vmatprep.subr.bf16.mxu0 0
      %466 = vmatpush1.bf16.msra.mxu0 %v444
      %467 = vmatprep.subr.bf16.mxu0 0
      %468 = vmatpush1.bf16.msra.mxu0 %v445
      %469 = vmatprep.subr.bf16.mxu0 0
      %470 = vmatpush1.bf16.msra.mxu0 %v446
      %471 = vmatprep.subr.bf16.mxu0 0
      %472 = vmatpush1.bf16.msra.mxu0 0
      %473 = vmatprep.subr.bf16.mxu0 0
      %474 = vmatpush1.bf16.msra.mxu0 0
      %475 = vmatprep.subr.bf16.mxu0 0
      %476 = vmatpush1.bf16.msra.mxu0 0
      %477 = vmatprep.subr.bf16.mxu0 0
      %478 = vmatpush1.bf16.msra.mxu0 0
      %479 = vmatprep.subr.bf16.mxu0 0
      %480 = vmatpush1.bf16.msra.mxu0 0
      %481 = vmatprep.subr.bf16.mxu0 0
      %482 = vmatpush1.bf16.msra.mxu0 0
      %483 = vmatprep.subr.bf16.mxu0 0
      %484 = vmatpush1.bf16.msra.mxu0 0
      %485 = vmatprep.subr.bf16.mxu0 0
      %486 = vmatpush1.bf16.msra.mxu0 0
      %487 = vmatprep.mubr.bf16.mxu0 0
      %488 = vmatmul.mubr.bf16.gmra.mrb[0].mxu0 %v399
      %v489 = vpop.f32.mrb[0].mxu0
      %v490 = vadd.f32 0.0, %v489
      %v491 = vpop.f32.mrb[0].mxu0
      %v492 = vpop.f32.mrb[0].mxu0
      %v493 = vadd.f32 0.0, %v492
      %v494 = vpop.f32.mrb[0].mxu0
      %495 = vmatprep.mubr.bf16.mxu0 0
      %496 = vmatmul.mubr.bf16.gmra.mrb[0].mxu0 %v400
      %v497 = vpop.f32.mrb[0].mxu0
      %v498 = vadd.f32 0.0, %v497
      %v499 = vpop.f32.mrb[0].mxu0
      %v500 = vpop.f32.mrb[0].mxu0
      %v501 = vadd.f32 0.0, %v500
      %v502 = vpop.f32.mrb[0].mxu0
      %503 = vmatprep.mubr.bf16.mxu0 0
      %504 = vmatmul.mubr.bf16.gmra.mrb[0].mxu0 %v401
      %v505 = vpop.f32.mrb[0].mxu0
      %v506 = vadd.f32 0.0, %v505
      %v507 = vpop.f32.mrb[0].mxu0
      %v508 = vpop.f32.mrb[0].mxu0
      %v509 = vadd.f32 0.0, %v508
      %v510 = vpop.f32.mrb[0].mxu0
      %511 = vmatprep.mubr.bf16.mxu0 0
      %512 = vmatmul.mubr.bf16.gmra.mrb[0].mxu0 %v402
      %v513 = vpop.f32.mrb[0].mxu0
      %v514 = vadd.f32 0.0, %v513
      %v515 = vpop.f32.mrb[0].mxu0
      %v516 = vpop.f32.mrb[0].mxu0
      %v517 = vadd.f32 0.0, %v516
      %v518 = vpop.f32.mrb[0].mxu0
      %519 = vdwg.mxu0
      %v520 = vadd.f32 %v348, %v490
      %v521 = vadd.f32 %v349, %v493
      %v522 = vadd.f32 %v350, %v498
      %v523 = vadd.f32 %v351, %v501
      %v524 = vadd.f32 %v352, %v506
      %v525 = vadd.f32 %v353, %v509
      %v526 = vadd.f32 %v354, %v514
      %v527 = vadd.f32 %v355, %v517
      %528 = vst [vmem:[%s313] sm:$0xff] %v520
      %529 = vst [vmem:[%s313 + $0x8] sm:$0xff] %v521
      %530 = vst [vmem:[%s313 + $0x10] sm:$0xff] %v522
      %531 = vst [vmem:[%s313 + $0x18] sm:$0xff] %v523
      %532 = vst [vmem:[%s313 + $0x20] sm:$0xff] %v524
      %533 = vst [vmem:[%s313 + $0x28] sm:$0xff] %v525
      %534 = vst [vmem:[%s313 + $0x30] sm:$0xff] %v526
      %535 = vst [vmem:[%s313 + $0x38] sm:$0xff] %v527
      // Predicated region
      $region33: #{double_conv.4} parent=27 // pred_check
        %p536 = pneg %p336
      $region34: #{double_conv.4} parent=27 // pred_check_branch
        %538 = sbr.rel (%p536) target = $region36
      $region35: #{double_conv.4} parent=27 // pred_region
        %v539 = vld [vmem:[%s313] sm:$0xff]
        %v540 = vld [vmem:[%s313 + $0x8] sm:$0xff]
        %v541 = vld [vmem:[%s313 + $0x10] sm:$0xff]
        %v542 = vld [vmem:[%s313 + $0x18] sm:$0xff]
        %v543 = vld [vmem:[%s313 + $0x20] sm:$0xff]
        %v544 = vld [vmem:[%s313 + $0x28] sm:$0xff]
        %v545 = vld [vmem:[%s313 + $0x30] sm:$0xff]
        %v546 = vld [vmem:[%s313 + $0x38] sm:$0xff]
        %v547 = vadd.f32 %v539, %v540
        %v548 = vadd.f32 %v547, %v541
        %v549 = vadd.f32 %v548, %v542
        %v550 = vadd.f32 %v549, %v543
        %v551 = vadd.f32 %v550, %v544
        %v552 = vadd.f32 %v551, %v545
        %v553 = vadd.f32 %v552, %v546
        %v554 = vrot.slane %v553, 4
        %v555 = vadd.f32 %v553, %v554
        %v556 = vrot.slane %v555, 2
        %v557 = vadd.f32 %v555, %v556
        %v558 = vrot.slane %v557, 1
        %v559 = vadd.f32 %v557, %v558
        %560 = vst [vmem:[%s324] sm:$0x1] %v559
        %v561 = vmul.f32 %v539, %v539
        %v562 = vmul.f32 %v540, %v540
        %v563 = vmul.f32 %v541, %v541
        %v564 = vmul.f32 %v542, %v542
        %v565 = vmul.f32 %v543, %v543
        %v566 = vmul.f32 %v544, %v544
        %v567 = vmul.f32 %v545, %v545
        %v568 = vmul.f32 %v546, %v546
        %v569 = vadd.f32 %v561, %v562
        %v570 = vadd.f32 %v569, %v563
        %v571 = vadd.f32 %v570, %v564
        %v572 = vadd.f32 %v571, %v565
        %v573 = vadd.f32 %v572, %v566
        %v574 = vadd.f32 %v573, %v567
        %v575 = vadd.f32 %v574, %v568
        %v576 = vrot.slane %v575, 4
        %v577 = vadd.f32 %v575, %v576
        %v578 = vrot.slane %v577, 2
        %v579 = vadd.f32 %v577, %v578
        %v580 = vrot.slane %v579, 1
        %v581 = vadd.f32 %v579, %v580
        %582 = vst [vmem:[%s334] sm:$0x1] %v581
      $region36: #{double_conv.4} parent=27 // pred_fallthru
        _
      %s583 = smul.u32 8, %s24
      %p584 = scmp.lt.s32.totalorder %s22, 1
      %s585 = scalar_select %p584, %s22, 1
      %p586 = scmp.lt.s32.totalorder %s23, 7
      %s587 = scalar_select %p586, %s23, 7
      %p588 = scmp.lt.s32.totalorder %s583, 7
      %s589 = scalar_select %p588, %s583, 7
      %s590 = smul.addr %s587, 8
      %s591 = sadd.s32 %s589, %s590
      %s592 = smul.addr %s585, 64
      %s593 = sadd.s32 %s591, %s592
      %s594 = smul.addr %s593, 8
      %s595 = scalar_lea.vmem %s2, %s594
      %p596 = scmp.lt.s32.totalorder %s22, 1
      %s597 = scalar_select %p596, %s22, 1
      %p598 = scmp.lt.s32.totalorder %s23, 7
      %s599 = scalar_select %p598, %s23, 7
      %p600 = scmp.lt.s32.totalorder %s24, 0
      %s601 = scalar_select %p600, %s24, 0
      %s602 = sadd.s32 %s601, %s599
      %s603 = smul.addr %s597, 8
      %s604 = sadd.s32 %s602, %s603
      %s605 = scalar_lea.vmem %s3, %s604
      %p606 = scmp.lt.s32.totalorder %s22, 1
      %s607 = scalar_select %p606, %s22, 1
      %p608 = scmp.lt.s32.totalorder %s23, 7
      %s609 = scalar_select %p608, %s23, 7
      %p610 = scmp.lt.s32.totalorder %s24, 0
      %s611 = scalar_select %p610, %s24, 0
      %s612 = sadd.s32 %s611, %s609
      %s613 = smul.addr %s607, 8
      %s614 = sadd.s32 %s612, %s613
      %s615 = scalar_lea.vmem %s4, %s614
      // Predicated region
      $region37: #{double_conv.4} parent=27 // pred_check
        %p616 = pneg %p117
      $region38: #{double_conv.4} parent=27 // pred_check_branch
        %618 = sbr.rel (%p616) target = $region40
      $region39: #{double_conv.4} parent=27 // pred_region
        %s619 = smul.u32 8, %s24
      $region40: #{double_conv.4} parent=27 // pred_fallthru
        _
      // Predicated region
      $region41: #{double_conv.4} parent=27 // pred_check
        %p620 = pneg %p147
      $region42: #{double_conv.4} parent=27 // pred_check_branch
        %622 = sbr.rel (%p620) target = $region44
      $region43: #{double_conv.4} parent=27 // pred_region
        _
      $region44: #{double_conv.4} parent=27 // pred_fallthru
        _
      // Predicated region
      $region45: #{double_conv.4} parent=27 // pred_check
        %p623 = pneg %p177
      $region46: #{double_conv.4} parent=27 // pred_check_branch
        %625 = sbr.rel (%p623) target = $region48
      $region47: #{double_conv.4} parent=27 // pred_region
        _
      $region48: #{double_conv.4} parent=27 // pred_fallthru
        _
    $region28: #{double_conv.4} parent=5 // pred_fallthru
      _
    %p626 = scmp.le.s32.totalorder 2, %s11
    // Predicated region
    $region49: #{double_conv.4} parent=5 // pred_check
      %p627 = pneg %p626
    $region50: #{double_conv.4} parent=5 // pred_check_branch
      %629 = sbr.rel (%p627) target = $region52
    $region51: #{double_conv.4} parent=5 // pred_region
      %s630 = ssub.s32 %s11, 2
      // Predicated region
      $region53: #{double_conv.4} parent=51 // pred_check
        %p631 = pneg %p123
      $region54: #{double_conv.4} parent=51 // pred_check_branch
        %633 = sbr.rel (%p631) target = $region56
      $region55: #{double_conv.4} parent=51 // pred_region
        %s634 = smul.u32 8, %s28
        %p635 = scmp.lt.s32.totalorder %s26, 1
        %s636 = scalar_select %p635, %s26, 1
        %p637 = scmp.lt.s32.totalorder %s27, 7
        %s638 = scalar_select %p637, %s27, 7
        %p639 = scmp.lt.s32.totalorder %s634, 7
        %s640 = scalar_select %p639, %s634, 7
        %s641 = smul.addr %s638, 8
        %s642 = sadd.s32 %s640, %s641
        %s643 = smul.addr %s636, 64
        %s644 = sadd.s32 %s642, %s643
        %s645 = smul.addr %s644, 8
        %s646 = scalar_lea.vmem %s2, %s645
      $region56: #{double_conv.4} parent=51 // pred_fallthru
        _
      // Predicated region
      $region57: #{double_conv.4} parent=51 // pred_check
        %p647 = pneg %p153
      $region58: #{double_conv.4} parent=51 // pred_check_branch
        %649 = sbr.rel (%p647) target = $region60
      $region59: #{double_conv.4} parent=51 // pred_region
        %p650 = scmp.lt.s32.totalorder %s26, 1
        %s651 = scalar_select %p650, %s26, 1
        %p652 = scmp.lt.s32.totalorder %s27, 7
        %s653 = scalar_select %p652, %s27, 7
        %p654 = scmp.lt.s32.totalorder %s28, 0
        %s655 = scalar_select %p654, %s28, 0
        %s656 = sadd.s32 %s655, %s653
        %s657 = smul.addr %s651, 8
        %s658 = sadd.s32 %s656, %s657
        %s659 = scalar_lea.vmem %s3, %s658
      $region60: #{double_conv.4} parent=51 // pred_fallthru
        _
      // Predicated region
      $region61: #{double_conv.4} parent=51 // pred_check
        %p660 = pneg %p183
      $region62: #{double_conv.4} parent=51 // pred_check_branch
        %662 = sbr.rel (%p660) target = $region64
      $region63: #{double_conv.4} parent=51 // pred_region
        %p663 = scmp.lt.s32.totalorder %s26, 1
        %s664 = scalar_select %p663, %s26, 1
        %p665 = scmp.lt.s32.totalorder %s27, 7
        %s666 = scalar_select %p665, %s27, 7
        %p667 = scmp.lt.s32.totalorder %s28, 0
        %s668 = scalar_select %p667, %s28, 0
        %s669 = sadd.s32 %s668, %s666
        %s670 = smul.addr %s664, 8
        %s671 = sadd.s32 %s669, %s670
        %s672 = scalar_lea.vmem %s4, %s671
      $region64: #{double_conv.4} parent=51 // pred_fallthru
        _
    $region52: #{double_conv.4} parent=5 // pred_fallthru
      _
  $region6: #{double_conv.4} parent=0 // loop_footer
    %s15 = sadd.s32 1, %s11
  $region7: #{double_conv.4} parent=0 // loop_footer_branch
    %10 = sbr.rel target = $region3
  $region8: #{double_conv.4} parent=0 // loop_exit
    _

// kernel: double_conv.6
$region0: #{double_conv.6}
  #allocation0 [shape = 'u32[]', space=smem, size = 0x4, offset = 0x4, fixed_abs, tag = 'smem constant byte address 0x4 - core index']
  #allocation1 [shape = 'u32[144,128]{1,0:T(1,128)}', space=vmem, size = 0x12000, scoped, tag = 'internal scratch']
  %s0 = inlined_call_operand.vmem [shape: bf16[2,10,64,1152], index: 0, kind: input, shape index: {}]
  %s1 = inlined_call_operand.vmem [shape: bf16[3,1152,128], index: 1, kind: input, shape index: {}]
  %s2 = inlined_call_operand.vmem [shape: f32[2,8,64,128], index: 2, kind: output, shape index: {0}]
  %s3 = inlined_call_operand.vmem [shape: f32[2,8,1,1,128], index: 3, kind: output, shape index: {1}]
  %s4 = inlined_call_operand.vmem [shape: f32[2,8,1,1,128], index: 4, kind: output, shape index: {2}]
  %5 = xla_tuple %s2, %s3, %s4
  %s6 = sld [smem:[#allocation0]]
  $region65: #{double_conv.6} parent=0
    _
  %s8 = ssub.s32 1, %s6
  %s9 = scalar_select 0, %s8, %s6
  loop: start=0, step=1, limit=50
  $region2: #{double_conv.6} parent=0 // loop_pre_header
    _
  $region3: #{double_conv.6} parent=0 // loop_header
    %s11 = sphi 0, %s15
    %p12 = scmp.ge.s32.totalorder %s11, 50
    %s18 = sphi 0, %s44
    %s19 = sphi 0, %s40
    %s20 = sphi 0, %s36
    %s21 = sphi 0, %s32
    %s22 = sphi 0, %s18
    %s23 = sphi 0, %s19
    %s24 = sphi 0, %s20
    %s25 = sphi 0, %s21
    %s26 = sphi 0, %s22
    %s27 = sphi 0, %s23
    %s28 = sphi 0, %s24
    %s29 = sphi 0, %s25
    %s53 = sphi 0, %s55
    %s56 = sphi 0, %s53
    %s57 = sphi 0, %s56
    %s73 = sphi 0, %s57
    %s77 = sphi 0, %s77
    %s79 = sphi 0, %s77
    %s80 = sphi 0, %s79
    %s94 = sphi 0, %s80
    %s104 = sphi 0, %s106
    %s107 = sphi 0, %s104
    %s108 = sphi 0, %s107
    %s124 = sphi 0, %s108
    %s134 = sphi 0, %s136
    %s137 = sphi 0, %s134
    %s138 = sphi 0, %s137
    %s154 = sphi 0, %s138
    %s164 = sphi 0, %s166
    %s167 = sphi 0, %s164
    %s168 = sphi 0, %s167
    %s184 = sphi 0, %s168
  $region4: #{double_conv.6} parent=0 // loop_header_branch
    %14 = sbr.rel (%p12) target = $region8
  $region5: #{double_conv.6} parent=0 // loop_body
    %s16 = ssub.s32 %s11, 1
    %s17 = ssub.s32 %s11, 2
    %s30 = sadd.s32 1, %s21
    %p31 = scmp.ge.s32.totalorder %s30, 3
    %s32 = scalar_select %p31, 0, %s30
    %s33 = sadd.s32 1, %s20
    %s34 = scalar_select %p31, %s33, %s20
    %p35 = scmp.ge.s32.totalorder %s34, 1
    %s36 = scalar_select %p35, 0, %s34
    %s37 = sadd.s32 1, %s19
    %s38 = scalar_select %p35, %s37, %s19
    %p39 = scmp.ge.s32.totalorder %s38, 8
    %s40 = scalar_select %p39, 0, %s38
    %s41 = sadd.s32 1, %s18
    %s42 = scalar_select %p39, %s41, %s18
    %p43 = scmp.ge.s32.totalorder %s42, 2
    %s44 = scalar_select %p43, 0, %s42
    %s45 = sadd.s32 %s19, %s21
    %s46 = sadd.s32 %s40, %s32
    %s47 = ssub.s32 %s18, %s44
    %s48 = ssub.s32 %s45, %s46
    %s49 = sor.u32 %s47, %s48
    %s50 = ssub.s32 %s20, %s36
    %s51 = sor.u32 %s49, %s50
    %p52 = scmp.eq.s32.totalorder %s51, 0
    %s54 = sadd.s32 %s53, 1
    %s55 = scalar_select %p52, %s53, %s54
    %p58 = pneg %p52
    %p59 = scmp.eq.s32.totalorder %s11, 47
    %p60 = por %p58, %p59
    %p61 = scmp.ne.s32.totalorder %s53, %s56
    %p62 = scmp.eq.s32.totalorder %s11, 0
    %p63 = por %p61, %p62
    %p64 = scmp.ne.s32.totalorder %s53, %s56
    %p65 = scmp.eq.s32.totalorder %s16, 47
    %p66 = por %p64, %p65
    %p67 = scmp.ne.s32.totalorder %s56, %s57
    %p68 = scmp.eq.s32.totalorder %s16, 0
    %p69 = por %p67, %p68
    %p70 = scmp.ne.s32.totalorder %s56, %s57
    %p71 = scmp.eq.s32.totalorder %s17, 47
    %p72 = por %p70, %p71
    %p74 = scmp.ne.s32.totalorder %s57, %s73
    %p75 = scmp.eq.s32.totalorder %s17, 0
    %p76 = por %p74, %p75
    %s78 = sadd.s32 %s77, 1
    %p81 = scmp.eq.s32.totalorder %s11, 47
    %p82 = scmp.ne.s32.totalorder %s77, %s79
    %p83 = scmp.eq.s32.totalorder %s11, 0
    %p84 = por %p82, %p83
    %p85 = scmp.ne.s32.totalorder %s77, %s79
    %p86 = scmp.eq.s32.totalorder %s16, 47
    %p87 = por %p85, %p86
    %p88 = scmp.ne.s32.totalorder %s79, %s80
    %p89 = scmp.eq.s32.totalorder %s16, 0
    %p90 = por %p88, %p89
    %p91 = scmp.ne.s32.totalorder %s79, %s80
    %p92 = scmp.eq.s32.totalorder %s17, 47
    %p93 = por %p91, %p92
    %p95 = scmp.ne.s32.totalorder %s80, %s94
    %p96 = scmp.eq.s32.totalorder %s17, 0
    %p97 = por %p95, %p96
    %s98 = ssub.s32 %s18, %s44
    %s99 = ssub.s32 %s19, %s40
    %s100 = sor.u32 %s98, %s99
    %s101 = ssub.s32 %s20, %s36
    %s102 = sor.u32 %s100, %s101
    %p103 = scmp.eq.s32.totalorder %s102, 0
    %s105 = sadd.s32 %s104, 1
    %s106 = scalar_select %p103, %s104, %s105
    %p109 = pneg %p103
    %p110 = scmp.eq.s32.totalorder %s11, 47
    %p111 = por %p109, %p110
    %p112 = scmp.ne.s32.totalorder %s104, %s107
    %p113 = scmp.eq.s32.totalorder %s11, 0
    %p114 = por %p112, %p113
    %p115 = scmp.ne.s32.totalorder %s104, %s107
    %p116 = scmp.eq.s32.totalorder %s16, 47
    %p117 = por %p115, %p116
    %p118 = scmp.ne.s32.totalorder %s107, %s108
    %p119 = scmp.eq.s32.totalorder %s16, 0
    %p120 = por %p118, %p119
    %p121 = scmp.ne.s32.totalorder %s107, %s108
    %p122 = scmp.eq.s32.totalorder %s17, 47
    %p123 = por %p121, %p122
    %p125 = scmp.ne.s32.totalorder %s108, %s124
    %p126 = scmp.eq.s32.totalorder %s17, 0
    %p127 = por %p125, %p126
    %s128 = ssub.s32 %s18, %s44
    %s129 = ssub.s32 %s19, %s40
    %s130 = sor.u32 %s128, %s129
    %s131 = ssub.s32 %s20, %s36
    %s132 = sor.u32 %s130, %s131
    %p133 = scmp.eq.s32.totalorder %s132, 0
    %s135 = sadd.s32 %s134, 1
    %s136 = scalar_select %p133, %s134, %s135
    %p139 = pneg %p133
    %p140 = scmp.eq.s32.totalorder %s11, 47
    %p141 = por %p139, %p140
    %p142 = scmp.ne.s32.totalorder %s134, %s137
    %p143 = scmp.eq.s32.totalorder %s11, 0
    %p144 = por %p142, %p143
    %p145 = scmp.ne.s32.totalorder %s134, %s137
    %p146 = scmp.eq.s32.totalorder %s16, 47
    %p147 = por %p145, %p146
    %p148 = scmp.ne.s32.totalorder %s137, %s138
    %p149 = scmp.eq.s32.totalorder %s16, 0
    %p150 = por %p148, %p149
    %p151 = scmp.ne.s32.totalorder %s137, %s138
    %p152 = scmp.eq.s32.totalorder %s17, 47
    %p153 = por %p151, %p152
    %p155 = scmp.ne.s32.totalorder %s138, %s154
    %p156 = scmp.eq.s32.totalorder %s17, 0
    %p157 = por %p155, %p156
    %s158 = ssub.s32 %s18, %s44
    %s159 = ssub.s32 %s19, %s40
    %s160 = sor.u32 %s158, %s159
    %s161 = ssub.s32 %s20, %s36
    %s162 = sor.u32 %s160, %s161
    %p163 = scmp.eq.s32.totalorder %s162, 0
    %s165 = sadd.s32 %s164, 1
    %s166 = scalar_select %p163, %s164, %s165
    %p169 = pneg %p163
    %p170 = scmp.eq.s32.totalorder %s11, 47
    %p171 = por %p169, %p170
    %p172 = scmp.ne.s32.totalorder %s164, %s167
    %p173 = scmp.eq.s32.totalorder %s11, 0
    %p174 = por %p172, %p173
    %p175 = scmp.ne.s32.totalorder %s164, %s167
    %p176 = scmp.eq.s32.totalorder %s16, 47
    %p177 = por %p175, %p176
    %p178 = scmp.ne.s32.totalorder %s167, %s168
    %p179 = scmp.eq.s32.totalorder %s16, 0
    %p180 = por %p178, %p179
    %p181 = scmp.ne.s32.totalorder %s167, %s168
    %p182 = scmp.eq.s32.totalorder %s17, 47
    %p183 = por %p181, %p182
    %p185 = scmp.ne.s32.totalorder %s168, %s184
    %p186 = scmp.eq.s32.totalorder %s17, 0
    %p187 = por %p185, %p186
    %p188 = scmp.le.s32.totalorder 1, %s11
    %p189 = scmp.lt.s32.totalorder %s11, 49
    %p190 = pnand %p188, %p189
    %p191 = pneg %p190
    // Predicated region
    $region9: #{double_conv.6} parent=5 // pred_check
      _
    $region10: #{double_conv.6} parent=5 // pred_check_branch
      %193 = sbr.rel (%p190) target = $region12
    $region11: #{double_conv.6} parent=5 // pred_region
      %s194 = ssub.s32 %s11, 1
      // Predicated region
      $region13: #{double_conv.6} parent=11 // pred_check
        %p195 = pneg %p90
      $region14: #{double_conv.6} parent=11 // pred_check_branch
        %197 = sbr.rel (%p195) target = $region16
      $region15: #{double_conv.6} parent=11 // pred_region
        _
      $region16: #{double_conv.6} parent=11 // pred_fallthru
        _
    $region12: #{double_conv.6} parent=5 // pred_fallthru
      _
    %p198 = scmp.lt.s32.totalorder %s11, 48
    // Predicated region
    $region17: #{double_conv.6} parent=5 // pred_check
      %p199 = pneg %p198
    $region18: #{double_conv.6} parent=5 // pred_check_branch
      %201 = sbr.rel (%p199) target = $region20
    $region19: #{double_conv.6} parent=5 // pred_region
      // Predicated region
      $region21: #{double_conv.6} parent=19 // pred_check
        %p202 = pneg %p63
      $region22: #{double_conv.6} parent=19 // pred_check_branch
        %204 = sbr.rel (%p202) target = $region24
      $region23: #{double_conv.6} parent=19 // pred_region
        %s205 = sadd.s32 %s19, %s21
        %s206 = smul.u32 8, %s20
        %p207 = scmp.lt.s32.totalorder %s18, 1
        %s208 = scalar_select %p207, %s18, 1
        %p209 = scmp.lt.s32.totalorder %s205, 9
        %s210 = scalar_select %p209, %s205, 9
        %p211 = scmp.lt.s32.totalorder %s206, 7
        %s212 = scalar_select %p211, %s206, 7
        %s213 = smul.addr %s212, 9
        %s214 = smul.addr %s210, 72
        %s215 = sadd.s32 %s213, %s214
        %s216 = smul.addr %s208, 720
        %s217 = sadd.s32 %s215, %s216
        %s218 = smul.addr %s217, 4
        %s219 = scalar_lea.vmem %s0, %s218
        %s220 = sadd.s32 %s19, %s21
        %s221 = smul.u32 8, %s20
      $region24: #{double_conv.6} parent=19 // pred_fallthru
        _
    $region20: #{double_conv.6} parent=5 // pred_fallthru
      _
    %p222 = scmp.le.s32.totalorder 1, %s11
    %p223 = scmp.lt.s32.totalorder %s11, 49
    %p224 = pnand %p222, %p223
    %p225 = pneg %p224
    // Predicated region
    $region25: #{double_conv.6} parent=5 // pred_check
      _
    $region26: #{double_conv.6} parent=5 // pred_check_branch
      %227 = sbr.rel (%p224) target = $region28
    $region27: #{double_conv.6} parent=5 // pred_region
      %s228 = ssub.s32 %s11, 1
      %s229 = sadd.s32 %s23, %s25
      %s230 = smul.u32 8, %s24
      %p231 = scmp.lt.s32.totalorder %s22, 1
      %s232 = scalar_select %p231, %s22, 1
      %p233 = scmp.lt.s32.totalorder %s229, 9
      %s234 = scalar_select %p233, %s229, 9
      %p235 = scmp.lt.s32.totalorder %s230, 7
      %s236 = scalar_select %p235, %s230, 7
      %s237 = smul.addr %s236, 9
      %s238 = smul.addr %s234, 72
      %s239 = sadd.s32 %s237, %s238
      %s240 = smul.addr %s232, 720
      %s241 = sadd.s32 %s239, %s240
      %s242 = smul.addr %s241, 4
      %s243 = scalar_lea.vmem %s0, %s242
      %p244 = pneg %p69
      %p245 = pneg %p66
      %p246 = pneg %p90
      %p247 = pneg %p87
      %p248 = pneg %p120
      %p249 = pneg %p117
      %s250 = smul.u32 8, %s24
      %p251 = scmp.lt.s32.totalorder %s22, 1
      %s252 = scalar_select %p251, %s22, 1
      %p253 = scmp.lt.s32.totalorder %s23, 7
      %s254 = scalar_select %p253, %s23, 7
      %p255 = scmp.lt.s32.totalorder %s250, 7
      %s256 = scalar_select %p255, %s250, 7
      %s257 = smul.addr %s254, 8
      %s258 = sadd.s32 %s256, %s257
      %s259 = smul.addr %s252, 64
      %s260 = sadd.s32 %s258, %s259
      %s261 = smul.addr %s260, 8
      %s262 = scalar_lea.vmem %s2, %s261
      %p263 = pneg %p150
      %p264 = pneg %p147
      %p265 = scmp.lt.s32.totalorder %s22, 1
      %s266 = scalar_select %p265, %s22, 1
      %p267 = scmp.lt.s32.totalorder %s23, 7
      %s268 = scalar_select %p267, %s23, 7
      %p269 = scmp.lt.s32.totalorder %s24, 0
      %s270 = scalar_select %p269, %s24, 0
      %s271 = sadd.s32 %s270, %s268
      %s272 = smul.addr %s266, 8
      %s273 = sadd.s32 %s271, %s272
      %s274 = scalar_lea.vmem %s3, %s273
      %p275 = pneg %p180
      %p276 = pneg %p177
      %p277 = scmp.lt.s32.totalorder %s22, 1
      %s278 = scalar_select %p277, %s22, 1
      %p279 = scmp.lt.s32.totalorder %s23, 7
      %s280 = scalar_select %p279, %s23, 7
      %p281 = scmp.lt.s32.totalorder %s24, 0
      %s282 = scalar_select %p281, %s24, 0
      %s283 = sadd.s32 %s282, %s280
      %s284 = smul.addr %s278, 8
      %s285 = sadd.s32 %s283, %s284
      %s286 = scalar_lea.vmem %s4, %s285
      %s287 = sadd.s32 %s23, %s25
      %s288 = smul.u32 8, %s24
      %p289 = scmp.lt.s32.totalorder %s22, 1
      %s290 = scalar_select %p289, %s22, 1
      %p291 = scmp.lt.s32.totalorder %s287, 9
      %s292 = scalar_select %p291, %s287, 9
      %p293 = scmp.lt.s32.totalorder %s288, 7
      %s294 = scalar_select %p293, %s288, 7
      %s295 = smul.addr %s294, 9
      %s296 = smul.addr %s292, 72
      %s297 = sadd.s32 %s295, %s296
      %s298 = smul.addr %s290, 720
      %s299 = sadd.s32 %s297, %s298
      %s300 = smul.addr %s299, 4
      %s301 = scalar_lea.vmem %s0, %s300
      %s302 = sadd.s32 %s23, %s25
      %s303 = smul.u32 8, %s24
      %s304 = smul.u32 8, %s24
      %p305 = scmp.lt.s32.totalorder %s22, 1
      %s306 = scalar_select %p305, %s22, 1
      %p307 = scmp.lt.s32.totalorder %s23, 7
      %s308 = scalar_select %p307, %s23, 7
      %p309 = scmp.lt.s32.totalorder %s304, 7
      %s310 = scalar_select %p309, %s304, 7
      %s311 = smul.addr %s308, 8
      %s312 = sadd.s32 %s310, %s311
      %s313 = smul.addr %s306, 64
      %s314 = sadd.s32 %s312, %s313
      %s315 = smul.addr %s314, 8
      %s316 = scalar_lea.vmem %s2, %s315
      %s317 = smul.u32 8, %s24
      %p318 = scmp.lt.s32.totalorder %s22, 1
      %s319 = scalar_select %p318, %s22, 1
      %p320 = scmp.lt.s32.totalorder %s23, 7
      %s321 = scalar_select %p320, %s23, 7
      %p322 = scmp.lt.s32.totalorder %s24, 0
      %s323 = scalar_select %p322, %s24, 0
      %s324 = sadd.s32 %s323, %s321
      %s325 = smul.addr %s319, 8
      %s326 = sadd.s32 %s324, %s325
      %s327 = scalar_lea.vmem %s3, %s326
      %p328 = scmp.lt.s32.totalorder %s22, 1
      %s329 = scalar_select %p328, %s22, 1
      %p330 = scmp.lt.s32.totalorder %s23, 7
      %s331 = scalar_select %p330, %s23, 7
      %p332 = scmp.lt.s32.totalorder %s24, 0
      %s333 = scalar_select %p332, %s24, 0
      %s334 = sadd.s32 %s333, %s331
      %s335 = smul.addr %s329, 8
      %s336 = sadd.s32 %s334, %s335
      %s337 = scalar_lea.vmem %s4, %s336
      %p339 = scmp.eq.s32.totalorder %s25, 0
      // Predicated region
      $region29: #{double_conv.6} parent=27 // pred_check
        %p340 = pneg %p339
      $region30: #{double_conv.6} parent=27 // pred_check_branch
        %342 = sbr.rel (%p340) target = $region32
      $region31: #{double_conv.6} parent=27 // pred_region
        %343 = vst [vmem:[%s316] sm:$0xff] 0.0
        %344 = vst [vmem:[%s316 + $0x8] sm:$0xff] 0.0
        %345 = vst [vmem:[%s316 + $0x10] sm:$0xff] 0.0
        %346 = vst [vmem:[%s316 + $0x18] sm:$0xff] 0.0
        %347 = vst [vmem:[%s316 + $0x20] sm:$0xff] 0.0
        %348 = vst [vmem:[%s316 + $0x28] sm:$0xff] 0.0
        %349 = vst [vmem:[%s316 + $0x30] sm:$0xff] 0.0
        %350 = vst [vmem:[%s316 + $0x38] sm:$0xff] 0.0
      $region32: #{double_conv.6} parent=27 // pred_fallthru
        _
      %v351 = vld [vmem:[%s316] sm:$0xff]
      %v352 = vld [vmem:[%s316 + $0x8] sm:$0xff]
      %v353 = vld [vmem:[%s316 + $0x10] sm:$0xff]
      %v354 = vld [vmem:[%s316 + $0x18] sm:$0xff]
      %v355 = vld [vmem:[%s316 + $0x20] sm:$0xff]
      %v356 = vld [vmem:[%s316 + $0x28] sm:$0xff]
      %v357 = vld [vmem:[%s316 + $0x30] sm:$0xff]
      %v358 = vld [vmem:[%s316 + $0x38] sm:$0xff]
      %v359 = vld [vmem:[%s301] sm:$0xff]
      %v360 = vld [vmem:[%s301 + $0x8] sm:$0xff]
      %v361 = vld [vmem:[%s301 + $0x10] sm:$0xff]
      %v362 = vld [vmem:[%s301 + $0x18] sm:$0xff]
      %v363 = vld [vmem:[%s301 + $0x20] sm:$0xf]
      %v364 = vld [vmem:[%s301 + $0x24] sm:$0xff]
      %v365 = vld [vmem:[%s301 + $0x2c] sm:$0xff]
      %v366 = vld [vmem:[%s301 + $0x34] sm:$0xff]
      %v367 = vld [vmem:[%s301 + $0x3c] sm:$0xff]
      %v368 = vld [vmem:[%s301 + $0x44] sm:$0xf]
      %v369 = vld [vmem:[%s301 + $0x48] sm:$0xff]
      %v370 = vld [vmem:[%s301 + $0x50] sm:$0xff]
      %v371 = vld [vmem:[%s301 + $0x58] sm:$0xff]
      %v372 = vld [vmem:[%s301 + $0x60] sm:$0xff]
      %v373 = vld [vmem:[%s301 + $0x68] sm:$0xf]
      %v374 = vld [vmem:[%s301 + $0x6c] sm:$0xff]
      %v375 = vld [vmem:[%s301 + $0x74] sm:$0xff]
      %v376 = vld [vmem:[%s301 + $0x7c] sm:$0xff]
      %v377 = vld [vmem:[%s301 + $0x84] sm:$0xff]
      %v378 = vld [vmem:[%s301 + $0x8c] sm:$0xf]
      %v379 = vld [vmem:[%s301 + $0x90] sm:$0xff]
      %v380 = vld [vmem:[%s301 + $0x98] sm:$0xff]
      %v381 = vld [vmem:[%s301 + $0xa0] sm:$0xff]
      %v382 = vld [vmem:[%s301 + $0xa8] sm:$0xff]
      %v383 = vld [vmem:[%s301 + $0xb0] sm:$0xf]
      %v384 = vld [vmem:[%s301 + $0xb4] sm:$0xff]
      %v385 = vld [vmem:[%s301 + $0xbc] sm:$0xff]
      %v386 = vld [vmem:[%s301 + $0xc4] sm:$0xff]
      %v387 = vld [vmem:[%s301 + $0xcc] sm:$0xff]
      %v388 = vld [vmem:[%s301 + $0xd4] sm:$0xf]
      %v389 = vld [vmem:[%s301 + $0xd8] sm:$0xff]
      %v390 = vld [vmem:[%s301 + $0xe0] sm:$0xff]
      %v391 = vld [vmem:[%s301 + $0xe8] sm:$0xff]
      %v392 = vld [vmem:[%s301 + $0xf0] sm:$0xff]
      %v393 = vld [vmem:[%s301 + $0xf8] sm:$0xf]
      %v394 = vld [vmem:[%s301 + $0xfc] sm:$0xff]
      %v395 = vld [vmem:[%s301 + $0x104] sm:$0xff]
      %v396 = vld [vmem:[%s301 + $0x10c] sm:$0xff]
      %v397 = vld [vmem:[%s301 + $0x114] sm:$0xff]
      %v398 = vld [vmem:[%s301 + $0x11c] sm:$0xf]
      %s399 = smul.u32 %s25, 144
      %s400 = smul.addr %s399, 4
      %s401 = scalar_lea.vmem %s1, %s400
      %v402 = vld [vmem:[%s401] sm:$0xf]
      %v403 = vld [vmem:[%s401 + $0x4] sm:$0xf]
      %v404 = vld [vmem:[%s401 + $0x8] sm:$0xf]
      %v405 = vld [vmem:[%s401 + $0xc] sm:$0xf]
      %v406 = vld [vmem:[%s401 + $0x10] sm:$0xf]
      %v407 = vld [vmem:[%s401 + $0x14] sm:$0xf]
      %v408 = vld [vmem:[%s401 + $0x18] sm:$0xf]
      %v409 = vld [vmem:[%s401 + $0x1c] sm:$0xf]
      %v410 = vld [vmem:[%s401 + $0x20] sm:$0xf]
      %v411 = vld [vmem:[%s401 + $0x24] sm:$0xf]
      %v412 = vld [vmem:[%s401 + $0x28] sm:$0xf]
      %v413 = vld [vmem:[%s401 + $0x2c] sm:$0xf]
      %v414 = vld [vmem:[%s401 + $0x30] sm:$0xf]
      %v415 = vld [vmem:[%s401 + $0x34] sm:$0xf]
      %v416 = vld [vmem:[%s401 + $0x38] sm:$0xf]
      %v417 = vld [vmem:[%s401 + $0x3c] sm:$0xf]
      %v418 = vld [vmem:[%s401 + $0x40] sm:$0xf]
      %v419 = vld [vmem:[%s401 + $0x44] sm:$0xf]
      %v420 = vld [vmem:[%s401 + $0x48] sm:$0xf]
      %v421 = vld [vmem:[%s401 + $0x4c] sm:$0xf]
      %v422 = vld [vmem:[%s401 + $0x50] sm:$0xf]
      %v423 = vld [vmem:[%s401 + $0x54] sm:$0xf]
      %v424 = vld [vmem:[%s401 + $0x58] sm:$0xf]
      %v425 = vld [vmem:[%s401 + $0x5c] sm:$0xf]
      %v426 = vld [vmem:[%s401 + $0x60] sm:$0xf]
      %v427 = vld [vmem:[%s401 + $0x64] sm:$0xf]
      %v428 = vld [vmem:[%s401 + $0x68] sm:$0xf]
      %v429 = vld [vmem:[%s401 + $0x6c] sm:$0xf]
      %v430 = vld [vmem:[%s401 + $0x70] sm:$0xf]
      %v431 = vld [vmem:[%s401 + $0x74] sm:$0xf]
      %v432 = vld [vmem:[%s401 + $0x78] sm:$0xf]
      %v433 = vld [vmem:[%s401 + $0x7c] sm:$0xf]
      %v434 = vld [vmem:[%s401 + $0x80] sm:$0xf]
      %v435 = vld [vmem:[%s401 + $0x84] sm:$0xf]
      %v436 = vld [vmem:[%s401 + $0x88] sm:$0xf]
      %v437 = vld [vmem:[%s401 + $0x8c] sm:$0xf]
      %v438 = vld [vmem:[%s401 + $0x90] sm:$0xf]
      %v439 = vld [vmem:[%s401 + $0x94] sm:$0xf]
      %v440 = vld [vmem:[%s401 + $0x98] sm:$0xf]
      %v441 = vld [vmem:[%s401 + $0x9c] sm:$0xf]
      %v442 = vld [vmem:[%s401 + $0xa0] sm:$0xf]
      %v443 = vld [vmem:[%s401 + $0xa4] sm:$0xf]
      %v444 = vld [vmem:[%s401 + $0xa8] sm:$0xf]
      %v445 = vld [vmem:[%s401 + $0xac] sm:$0xf]
      %v446 = vld [vmem:[%s401 + $0xb0] sm:$0xf]
      %v447 = vld [vmem:[%s401 + $0xb4] sm:$0xf]
      %v448 = vld [vmem:[%s401 + $0xb8] sm:$0xf]
      %v449 = vld [vmem:[%s401 + $0xbc] sm:$0xf]
      %v450 = vld [vmem:[%s401 + $0xc0] sm:$0xf]
      %v451 = vld [vmem:[%s401 + $0xc4] sm:$0xf]
      %v452 = vld [vmem:[%s401 + $0xc8] sm:$0xf]
      %v453 = vld [vmem:[%s401 + $0xcc] sm:$0xf]
      %v454 = vld [vmem:[%s401 + $0xd0] sm:$0xf]
      %v455 = vld [vmem:[%s401 + $0xd4] sm:$0xf]
      %v456 = vld [vmem:[%s401 + $0xd8] sm:$0xf]
      %v457 = vld [vmem:[%s401 + $0xdc] sm:$0xf]
      %v458 = vld [vmem:[%s401 + $0xe0] sm:$0xf]
      %v459 = vld [vmem:[%s401 + $0xe4] sm:$0xf]
      %v460 = vld [vmem:[%s401 + $0xe8] sm:$0xf]
      %v461 = vld [vmem:[%s401 + $0xec] sm:$0xf]
      %v462 = vld [vmem:[%s401 + $0xf0] sm:$0xf]
      %v463 = vld [vmem:[%s401 + $0xf4] sm:$0xf]
      %v464 = vld [vmem:[%s401 + $0xf8] sm:$0xf]
      %v465 = vld [vmem:[%s401 + $0xfc] sm:$0xf]
      %v466 = vld [vmem:[%s401 + $0x100] sm:$0xf]
      %v467 = vld [vmem:[%s401 + $0x104] sm:$0xf]
      %v468 = vld [vmem:[%s401 + $0x108] sm:$0xf]
      %v469 = vld [vmem:[%s401 + $0x10c] sm:$0xf]
      %v470 = vld [vmem:[%s401 + $0x110] sm:$0xf]
      %v471 = vld [vmem:[%s401 + $0x114] sm:$0xf]
      %v472 = vld [vmem:[%s401 + $0x118] sm:$0xf]
      %v473 = vld [vmem:[%s401 + $0x11c] sm:$0xf]
      %v474 = vld [vmem:[%s401 + $0x120] sm:$0xf]
      %v475 = vld [vmem:[%s401 + $0x124] sm:$0xf]
      %v476 = vld [vmem:[%s401 + $0x128] sm:$0xf]
      %v477 = vld [vmem:[%s401 + $0x12c] sm:$0xf]
      %v478 = vld [vmem:[%s401 + $0x130] sm:$0xf]
      %v479 = vld [vmem:[%s401 + $0x134] sm:$0xf]
      %v480 = vld [vmem:[%s401 + $0x138] sm:$0xf]
      %v481 = vld [vmem:[%s401 + $0x13c] sm:$0xf]
      %v482 = vld [vmem:[%s401 + $0x140] sm:$0xf]
      %v483 = vld [vmem:[%s401 + $0x144] sm:$0xf]
      %v484 = vld [vmem:[%s401 + $0x148] sm:$0xf]
      %v485 = vld [vmem:[%s401 + $0x14c] sm:$0xf]
      %v486 = vld [vmem:[%s401 + $0x150] sm:$0xf]
      %v487 = vld [vmem:[%s401 + $0x154] sm:$0xf]
      %v488 = vld [vmem:[%s401 + $0x158] sm:$0xf]
      %v489 = vld [vmem:[%s401 + $0x15c] sm:$0xf]
      %v490 = vld [vmem:[%s401 + $0x160] sm:$0xf]
      %v491 = vld [vmem:[%s401 + $0x164] sm:$0xf]
      %v492 = vld [vmem:[%s401 + $0x168] sm:$0xf]
      %v493 = vld [vmem:[%s401 + $0x16c] sm:$0xf]
      %v494 = vld [vmem:[%s401 + $0x170] sm:$0xf]
      %v495 = vld [vmem:[%s401 + $0x174] sm:$0xf]
      %v496 = vld [vmem:[%s401 + $0x178] sm:$0xf]
      %v497 = vld [vmem:[%s401 + $0x17c] sm:$0xf]
      %v498 = vld [vmem:[%s401 + $0x180] sm:$0xf]
      %v499 = vld [vmem:[%s401 + $0x184] sm:$0xf]
      %v500 = vld [vmem:[%s401 + $0x188] sm:$0xf]
      %v501 = vld [vmem:[%s401 + $0x18c] sm:$0xf]
      %v502 = vld [vmem:[%s401 + $0x190] sm:$0xf]
      %v503 = vld [vmem:[%s401 + $0x194] sm:$0xf]
      %v504 = vld [vmem:[%s401 + $0x198] sm:$0xf]
      %v505 = vld [vmem:[%s401 + $0x19c] sm:$0xf]
      %v506 = vld [vmem:[%s401 + $0x1a0] sm:$0xf]
      %v507 = vld [vmem:[%s401 + $0x1a4] sm:$0xf]
      %v508 = vld [vmem:[%s401 + $0x1a8] sm:$0xf]
      %v509 = vld [vmem:[%s401 + $0x1ac] sm:$0xf]
      %v510 = vld [vmem:[%s401 + $0x1b0] sm:$0xf]
      %v511 = vld [vmem:[%s401 + $0x1b4] sm:$0xf]
      %v512 = vld [vmem:[%s401 + $0x1b8] sm:$0xf]
      %v513 = vld [vmem:[%s401 + $0x1bc] sm:$0xf]
      %v514 = vld [vmem:[%s401 + $0x1c0] sm:$0xf]
      %v515 = vld [vmem:[%s401 + $0x1c4] sm:$0xf]
      %v516 = vld [vmem:[%s401 + $0x1c8] sm:$0xf]
      %v517 = vld [vmem:[%s401 + $0x1cc] sm:$0xf]
      %v518 = vld [vmem:[%s401 + $0x1d0] sm:$0xf]
      %v519 = vld [vmem:[%s401 + $0x1d4] sm:$0xf]
      %v520 = vld [vmem:[%s401 + $0x1d8] sm:$0xf]
      %v521 = vld [vmem:[%s401 + $0x1dc] sm:$0xf]
      %v522 = vld [vmem:[%s401 + $0x1e0] sm:$0xf]
      %v523 = vld [vmem:[%s401 + $0x1e4] sm:$0xf]
      %v524 = vld [vmem:[%s401 + $0x1e8] sm:$0xf]
      %v525 = vld [vmem:[%s401 + $0x1ec] sm:$0xf]
      %v526 = vld [vmem:[%s401 + $0x1f0] sm:$0xf]
      %v527 = vld [vmem:[%s401 + $0x1f4] sm:$0xf]
      %v528 = vld [vmem:[%s401 + $0x1f8] sm:$0xf]
      %v529 = vld [vmem:[%s401 + $0x1fc] sm:$0xf]
      %v530 = vld [vmem:[%s401 + $0x200] sm:$0xf]
      %v531 = vld [vmem:[%s401 + $0x204] sm:$0xf]
      %v532 = vld [vmem:[%s401 + $0x208] sm:$0xf]
      %v533 = vld [vmem:[%s401 + $0x20c] sm:$0xf]
      %v534 = vld [vmem:[%s401 + $0x210] sm:$0xf]
      %v535 = vld [vmem:[%s401 + $0x214] sm:$0xf]
      %v536 = vld [vmem:[%s401 + $0x218] sm:$0xf]
      %v537 = vld [vmem:[%s401 + $0x21c] sm:$0xf]
      %v538 = vld [vmem:[%s401 + $0x220] sm:$0xf]
      %v539 = vld [vmem:[%s401 + $0x224] sm:$0xf]
      %v540 = vld [vmem:[%s401 + $0x228] sm:$0xf]
      %v541 = vld [vmem:[%s401 + $0x22c] sm:$0xf]
      %v542 = vld [vmem:[%s401 + $0x230] sm:$0xf]
      %v543 = vld [vmem:[%s401 + $0x234] sm:$0xf]
      %v544 = vld [vmem:[%s401 + $0x238] sm:$0xf]
      %v545 = vld [vmem:[%s401 + $0x23c] sm:$0xf]
      %v586 = vunpack.c.l.b16 %v359
      %v587 = vunpack.c.h.b16 %v359
      %v588 = vunpack.c.l.b16 %v360
      %v589 = vunpack.c.h.b16 %v360
      %v590 = vunpack.c.l.b16 %v361
      %v591 = vunpack.c.h.b16 %v361
      %v592 = vunpack.c.l.b16 %v362
      %v593 = vunpack.c.h.b16 %v362
      %v594 = vunpack.c.l.b16 %v363
      %v595 = vunpack.c.l.b16 %v364
      %v596 = vunpack.c.h.b16 %v364
      %v597 = vunpack.c.l.b16 %v365
      %v598 = vunpack.c.h.b16 %v365
      %v599 = vunpack.c.l.b16 %v366
      %v600 = vunpack.c.h.b16 %v366
      %v601 = vunpack.c.l.b16 %v367
      %v602 = vunpack.c.h.b16 %v367
      %v603 = vunpack.c.l.b16 %v368
      %v604 = vunpack.c.l.b16 %v369
      %v605 = vunpack.c.h.b16 %v369
      %v606 = vunpack.c.l.b16 %v370
      %v607 = vunpack.c.h.b16 %v370
      %v608 = vunpack.c.l.b16 %v371
      %v609 = vunpack.c.h.b16 %v371
      %v610 = vunpack.c.l.b16 %v372
      %v611 = vunpack.c.h.b16 %v372
      %v612 = vunpack.c.l.b16 %v373
      %v613 = vunpack.c.l.b16 %v374
      %v614 = vunpack.c.h.b16 %v374
      %v615 = vunpack.c.l.b16 %v375
      %v616 = vunpack.c.h.b16 %v375
      %v617 = vunpack.c.l.b16 %v376
      %v618 = vunpack.c.h.b16 %v376
      %v619 = vunpack.c.l.b16 %v377
      %v620 = vunpack.c.h.b16 %v377
      %v621 = vunpack.c.l.b16 %v378
      %v622 = vunpack.c.l.b16 %v379
      %v623 = vunpack.c.h.b16 %v379
      %v624 = vunpack.c.l.b16 %v380
      %v625 = vunpack.c.h.b16 %v380
      %v626 = vunpack.c.l.b16 %v381
      %v627 = vunpack.c.h.b16 %v381
      %v628 = vunpack.c.l.b16 %v382
      %v629 = vunpack.c.h.b16 %v382
      %v630 = vunpack.c.l.b16 %v383
      %v631 = vunpack.c.l.b16 %v384
      %v632 = vunpack.c.h.b16 %v384
      %v633 = vunpack.c.l.b16 %v385
      %v634 = vunpack.c.h.b16 %v385
      %v635 = vunpack.c.l.b16 %v386
      %v636 = vunpack.c.h.b16 %v386
      %v637 = vunpack.c.l.b16 %v387
      %v638 = vunpack.c.h.b16 %v387
      %v639 = vunpack.c.l.b16 %v388
      %v640 = vunpack.c.l.b16 %v389
      %v641 = vunpack.c.h.b16 %v389
      %v642 = vunpack.c.l.b16 %v390
      %v643 = vunpack.c.h.b16 %v390
      %v644 = vunpack.c.l.b16 %v391
      %v645 = vunpack.c.h.b16 %v391
      %v646 = vunpack.c.l.b16 %v392
      %v647 = vunpack.c.h.b16 %v392
      %v648 = vunpack.c.l.b16 %v393
      %v649 = vunpack.c.l.b16 %v394
      %v650 = vunpack.c.h.b16 %v394
      %v651 = vunpack.c.l.b16 %v395
      %v652 = vunpack.c.h.b16 %v395
      %v653 = vunpack.c.l.b16 %v396
      %v654 = vunpack.c.h.b16 %v396
      %v655 = vunpack.c.l.b16 %v397
      %v656 = vunpack.c.h.b16 %v397
      %v657 = vunpack.c.l.b16 %v398
      %v658 = vpack.c.b16 %v595, %v586
      %v659 = vpack.c.b16 %v596, %v587
      %v660 = vpack.c.b16 %v597, %v588
      %v661 = vpack.c.b16 %v598, %v589
      %v662 = vpack.c.b16 %v599, %v590
      %v663 = vpack.c.b16 %v600, %v591
      %v664 = vpack.c.b16 %v601, %v592
      %v665 = vpack.c.b16 %v602, %v593
      %v666 = vpack.c.b16 %v603, %v594
      %v667 = vpack.c.b16 %v613, %v604
      %v668 = vpack.c.b16 %v614, %v605
      %v669 = vpack.c.b16 %v615, %v606
      %v670 = vpack.c.b16 %v616, %v607
      %v671 = vpack.c.b16 %v617, %v608
      %v672 = vpack.c.b16 %v618, %v609
      %v673 = vpack.c.b16 %v619, %v610
      %v674 = vpack.c.b16 %v620, %v611
      %v675 = vpack.c.b16 %v621, %v612
      %v676 = vpack.c.b16 %v631, %v622
      %v677 = vpack.c.b16 %v632, %v623
      %v678 = vpack.c.b16 %v633, %v624
      %v679 = vpack.c.b16 %v634, %v625
      %v680 = vpack.c.b16 %v635, %v626
      %v681 = vpack.c.b16 %v636, %v627
      %v682 = vpack.c.b16 %v637, %v628
      %v683 = vpack.c.b16 %v638, %v629
      %v684 = vpack.c.b16 %v639, %v630
      %v685 = vpack.c.b16 %v649, %v640
      %v686 = vpack.c.b16 %v650, %v641
      %v687 = vpack.c.b16 %v651, %v642
      %v688 = vpack.c.b16 %v652, %v643
      %v689 = vpack.c.b16 %v653, %v644
      %v690 = vpack.c.b16 %v654, %v645
      %v691 = vpack.c.b16 %v655, %v646
      %v692 = vpack.c.b16 %v656, %v647
      %v693 = vpack.c.b16 %v657, %v648
      %v874 = vunpack.c.l.b16 %v402
      %v875 = vunpack.c.l.b16 %v403
      %v876 = vunpack.c.l.b16 %v404
      %v877 = vunpack.c.l.b16 %v405
      %v878 = vunpack.c.l.b16 %v406
      %v879 = vunpack.c.l.b16 %v407
      %v880 = vunpack.c.l.b16 %v408
      %v881 = vunpack.c.l.b16 %v409
      %v882 = vunpack.c.l.b16 %v410
      %v883 = vunpack.c.l.b16 %v411
      %v884 = vunpack.c.l.b16 %v412
      %v885 = vunpack.c.l.b16 %v413
      %v886 = vunpack.c.l.b16 %v414
      %v887 = vunpack.c.l.b16 %v415
      %v888 = vunpack.c.l.b16 %v416
      %v889 = vunpack.c.l.b16 %v417
      %v890 = vunpack.c.l.b16 %v418
      %v891 = vunpack.c.l.b16 %v419
      %v892 = vunpack.c.l.b16 %v420
      %v893 = vunpack.c.l.b16 %v421
      %v894 = vunpack.c.l.b16 %v422
      %v895 = vunpack.c.l.b16 %v423
      %v896 = vunpack.c.l.b16 %v424
      %v897 = vunpack.c.l.b16 %v425
      %v898 = vunpack.c.l.b16 %v426
      %v899 = vunpack.c.l.b16 %v427
      %v900 = vunpack.c.l.b16 %v428
      %v901 = vunpack.c.l.b16 %v429
      %v902 = vunpack.c.l.b16 %v430
      %v903 = vunpack.c.l.b16 %v431
      %v904 = vunpack.c.l.b16 %v432
      %v905 = vunpack.c.l.b16 %v433
      %v906 = vunpack.c.l.b16 %v434
      %v907 = vunpack.c.l.b16 %v435
      %v908 = vunpack.c.l.b16 %v436
      %v909 = vunpack.c.l.b16 %v437
      %v910 = vunpack.c.l.b16 %v438
      %v911 = vunpack.c.l.b16 %v439
      %v912 = vunpack.c.l.b16 %v440
      %v913 = vunpack.c.l.b16 %v441
      %v914 = vunpack.c.l.b16 %v442
      %v915 = vunpack.c.l.b16 %v443
      %v916 = vunpack.c.l.b16 %v444
      %v917 = vunpack.c.l.b16 %v445
      %v918 = vunpack.c.l.b16 %v446
      %v919 = vunpack.c.l.b16 %v447
      %v920 = vunpack.c.l.b16 %v448
      %v921 = vunpack.c.l.b16 %v449
      %v922 = vunpack.c.l.b16 %v450
      %v923 = vunpack.c.l.b16 %v451
      %v924 = vunpack.c.l.b16 %v452
      %v925 = vunpack.c.l.b16 %v453
      %v926 = vunpack.c.l.b16 %v454
      %v927 = vunpack.c.l.b16 %v455
      %v928 = vunpack.c.l.b16 %v456
      %v929 = vunpack.c.l.b16 %v457
      %v930 = vunpack.c.l.b16 %v458
      %v931 = vunpack.c.l.b16 %v459
      %v932 = vunpack.c.l.b16 %v460
      %v933 = vunpack.c.l.b16 %v461
      %v934 = vunpack.c.l.b16 %v462
      %v935 = vunpack.c.l.b16 %v463
      %v936 = vunpack.c.l.b16 %v464
      %v937 = vunpack.c.l.b16 %v465
      %v938 = vunpack.c.l.b16 %v466
      %v939 = vunpack.c.l.b16 %v467
      %v940 = vunpack.c.l.b16 %v468
      %v941 = vunpack.c.l.b16 %v469
      %v942 = vunpack.c.l.b16 %v470
      %v943 = vunpack.c.l.b16 %v471
      %v944 = vunpack.c.l.b16 %v472
      %v945 = vunpack.c.l.b16 %v473
      %v946 = vunpack.c.l.b16 %v474
      %v947 = vunpack.c.l.b16 %v475
      %v948 = vunpack.c.l.b16 %v476
      %v949 = vunpack.c.l.b16 %v477
      %v950 = vunpack.c.l.b16 %v478
      %v951 = vunpack.c.l.b16 %v479
      %v952 = vunpack.c.l.b16 %v480
      %v953 = vunpack.c.l.b16 %v481
      %v954 = vunpack.c.l.b16 %v482
      %v955 = vunpack.c.l.b16 %v483
      %v956 = vunpack.c.l.b16 %v484
      %v957 = vunpack.c.l.b16 %v485
      %v958 = vunpack.c.l.b16 %v486
      %v959 = vunpack.c.l.b16 %v487
      %v960 = vunpack.c.l.b16 %v488
      %v961 = vunpack.c.l.b16 %v489
      %v962 = vunpack.c.l.b16 %v490
      %v963 = vunpack.c.l.b16 %v491
      %v964 = vunpack.c.l.b16 %v492
      %v965 = vunpack.c.l.b16 %v493
      %v966 = vunpack.c.l.b16 %v494
      %v967 = vunpack.c.l.b16 %v495
      %v968 = vunpack.c.l.b16 %v496
      %v969 = vunpack.c.l.b16 %v497
      %v970 = vunpack.c.l.b16 %v498
      %v971 = vunpack.c.l.b16 %v499
      %v972 = vunpack.c.l.b16 %v500
      %v973 = vunpack.c.l.b16 %v501
      %v974 = vunpack.c.l.b16 %v502
      %v975 = vunpack.c.l.b16 %v503
      %v976 = vunpack.c.l.b16 %v504
      %v977 = vunpack.c.l.b16 %v505
      %v978 = vunpack.c.l.b16 %v506
      %v979 = vunpack.c.l.b16 %v507
      %v980 = vunpack.c.l.b16 %v508
      %v981 = vunpack.c.l.b16 %v509
      %v982 = vunpack.c.l.b16 %v510
      %v983 = vunpack.c.l.b16 %v511
      %v984 = vunpack.c.l.b16 %v512
      %v985 = vunpack.c.l.b16 %v513
      %v986 = vunpack.c.l.b16 %v514
      %v987 = vunpack.c.l.b16 %v515
      %v988 = vunpack.c.l.b16 %v516
      %v989 = vunpack.c.l.b16 %v517
      %v990 = vunpack.c.l.b16 %v518
      %v991 = vunpack.c.l.b16 %v519
      %v992 = vunpack.c.l.b16 %v520
      %v993 = vunpack.c.l.b16 %v521
      %v994 = vunpack.c.l.b16 %v522
      %v995 = vunpack.c.l.b16 %v523
      %v996 = vunpack.c.l.b16 %v524
      %v997 = vunpack.c.l.b16 %v525
      %v998 = vunpack.c.l.b16 %v526
      %v999 = vunpack.c.l.b16 %v527
      %v1000 = vunpack.c.l.b16 %v528
      %v1001 = vunpack.c.l.b16 %v529
      %v1002 = vunpack.c.l.b16 %v530
      %v1003 = vunpack.c.l.b16 %v531
      %v1004 = vunpack.c.l.b16 %v532
      %v1005 = vunpack.c.l.b16 %v533
      %v1006 = vunpack.c.l.b16 %v534
      %v1007 = vunpack.c.l.b16 %v535
      %v1008 = vunpack.c.l.b16 %v536
      %v1009 = vunpack.c.l.b16 %v537
      %v1010 = vunpack.c.l.b16 %v538
      %v1011 = vunpack.c.l.b16 %v539
      %v1012 = vunpack.c.l.b16 %v540
      %v1013 = vunpack.c.l.b16 %v541
      %v1014 = vunpack.c.l.b16 %v542
      %v1015 = vunpack.c.l.b16 %v543
      %v1016 = vunpack.c.l.b16 %v544
      %v1017 = vunpack.c.l.b16 %v545
      %v1018 = vpack.c.b16 %v875, %v874
      %v1019 = vpack.c.b16 %v877, %v876
      %v1020 = vpack.c.b16 %v879, %v878
      %v1021 = vpack.c.b16 %v881, %v880
      %v1022 = vpack.c.b16 %v883, %v882
      %v1023 = vpack.c.b16 %v885, %v884
      %v1024 = vpack.c.b16 %v887, %v886
      %v1025 = vpack.c.b16 %v889, %v888
      %v1026 = vpack.c.b16 %v891, %v890
      %v1027 = vpack.c.b16 %v893, %v892
      %v1028 = vpack.c.b16 %v895, %v894
      %v1029 = vpack.c.b16 %v897, %v896
      %v1030 = vpack.c.b16 %v899, %v898
      %v1031 = vpack.c.b16 %v901, %v900
      %v1032 = vpack.c.b16 %v903, %v902
      %v1033 = vpack.c.b16 %v905, %v904
      %v1034 = vpack.c.b16 %v907, %v906
      %v1035 = vpack.c.b16 %v909, %v908
      %v1036 = vpack.c.b16 %v911, %v910
      %v1037 = vpack.c.b16 %v913, %v912
      %v1038 = vpack.c.b16 %v915, %v914
      %v1039 = vpack.c.b16 %v917, %v916
      %v1040 = vpack.c.b16 %v919, %v918
      %v1041 = vpack.c.b16 %v921, %v920
      %v1042 = vpack.c.b16 %v923, %v922
      %v1043 = vpack.c.b16 %v925, %v924
      %v1044 = vpack.c.b16 %v927, %v926
      %v1045 = vpack.c.b16 %v929, %v928
      %v1046 = vpack.c.b16 %v931, %v930
      %v1047 = vpack.c.b16 %v933, %v932
      %v1048 = vpack.c.b16 %v935, %v934
      %v1049 = vpack.c.b16 %v937, %v936
      %v1050 = vpack.c.b16 %v939, %v938
      %v1051 = vpack.c.b16 %v941, %v940
      %v1052 = vpack.c.b16 %v943, %v942
      %v1053 = vpack.c.b16 %v945, %v944
      %v1054 = vpack.c.b16 %v947, %v946
      %v1055 = vpack.c.b16 %v949, %v948
      %v1056 = vpack.c.b16 %v951, %v950
      %v1057 = vpack.c.b16 %v953, %v952
      %v1058 = vpack.c.b16 %v955, %v954
      %v1059 = vpack.c.b16 %v957, %v956
      %v1060 = vpack.c.b16 %v959, %v958
      %v1061 = vpack.c.b16 %v961, %v960
      %v1062 = vpack.c.b16 %v963, %v962
      %v1063 = vpack.c.b16 %v965, %v964
      %v1064 = vpack.c.b16 %v967, %v966
      %v1065 = vpack.c.b16 %v969, %v968
      %v1066 = vpack.c.b16 %v971, %v970
      %v1067 = vpack.c.b16 %v973, %v972
      %v1068 = vpack.c.b16 %v975, %v974
      %v1069 = vpack.c.b16 %v977, %v976
      %v1070 = vpack.c.b16 %v979, %v978
      %v1071 = vpack.c.b16 %v981, %v980
      %v1072 = vpack.c.b16 %v983, %v982
      %v1073 = vpack.c.b16 %v985, %v984
      %v1074 = vpack.c.b16 %v987, %v986
      %v1075 = vpack.c.b16 %v989, %v988
      %v1076 = vpack.c.b16 %v991, %v990
      %v1077 = vpack.c.b16 %v993, %v992
      %v1078 = vpack.c.b16 %v995, %v994
      %v1079 = vpack.c.b16 %v997, %v996
      %v1080 = vpack.c.b16 %v999, %v998
      %v1081 = vpack.c.b16 %v1001, %v1000
      %v1082 = vpack.c.b16 %v1003, %v1002
      %v1083 = vpack.c.b16 %v1005, %v1004
      %v1084 = vpack.c.b16 %v1007, %v1006
      %v1085 = vpack.c.b16 %v1009, %v1008
      %v1086 = vpack.c.b16 %v1011, %v1010
      %v1087 = vpack.c.b16 %v1013, %v1012
      %v1088 = vpack.c.b16 %v1015, %v1014
      %v1089 = vpack.c.b16 %v1017, %v1016
      %1162 = vmatprep.subr.bf16.mxu0 0
      %1163 = vmatpush1.bf16.msra.mxu0 %v1018
      %1164 = vmatprep.subr.bf16.mxu0 0
      %1165 = vmatpush1.bf16.msra.mxu0 %v1019
      %1166 = vmatprep.subr.bf16.mxu0 0
      %1167 = vmatpush1.bf16.msra.mxu0 %v1020
      %1168 = vmatprep.subr.bf16.mxu0 0
      %1169 = vmatpush1.bf16.msra.mxu0 %v1021
      %1170 = vmatprep.subr.bf16.mxu0 0
      %1171 = vmatpush1.bf16.msra.mxu0 %v1022
      %1172 = vmatprep.subr.bf16.mxu0 0
      %1173 = vmatpush1.bf16.msra.mxu0 %v1023
      %1174 = vmatprep.subr.bf16.mxu0 0
      %1175 = vmatpush1.bf16.msra.mxu0 %v1024
      %1176 = vmatprep.subr.bf16.mxu0 0
      %1177 = vmatpush1.bf16.msra.mxu0 %v1025
      %1178 = vmatprep.subr.bf16.mxu0 0
      %1179 = vmatpush1.bf16.msra.mxu0 %v1026
      %1180 = vmatprep.subr.bf16.mxu0 0
      %1181 = vmatpush1.bf16.msra.mxu0 %v1027
      %1182 = vmatprep.subr.bf16.mxu0 0
      %1183 = vmatpush1.bf16.msra.mxu0 %v1028
      %1184 = vmatprep.subr.bf16.mxu0 0
      %1185 = vmatpush1.bf16.msra.mxu0 %v1029
      %1186 = vmatprep.subr.bf16.mxu0 0
      %1187 = vmatpush1.bf16.msra.mxu0 %v1030
      %1188 = vmatprep.subr.bf16.mxu0 0
      %1189 = vmatpush1.bf16.msra.mxu0 %v1031
      %1190 = vmatprep.subr.bf16.mxu0 0
      %1191 = vmatpush1.bf16.msra.mxu0 %v1032
      %1192 = vmatprep.subr.bf16.mxu0 0
      %1193 = vmatpush1.bf16.msra.mxu0 %v1033
      %1194 = vmatprep.mubr.bf16.mxu0 %v659
      %1195 = vmatmul.mubr.bf16.gmra.mrb[0].mxu0 %v658
      %v1196 = vpop.f32.mrb[0].mxu0
      %v1197 = vadd.f32 0.0, %v1196
      %v1198 = vpop.f32.mrb[0].mxu0
      %v1199 = vpop.f32.mrb[0].mxu0
      %v1200 = vadd.f32 0.0, %v1199
      %v1201 = vpop.f32.mrb[0].mxu0
      %1202 = vmatprep.mubr.bf16.mxu0 %v668
      %1203 = vmatmul.mubr.bf16.gmra.mrb[0].mxu0 %v667
      %v1204 = vpop.f32.mrb[0].mxu0
      %v1205 = vadd.f32 0.0, %v1204
      %v1206 = vpop.f32.mrb[0].mxu0
      %v1207 = vpop.f32.mrb[0].mxu0
      %v1208 = vadd.f32 0.0, %v1207
      %v1209 = vpop.f32.mrb[0].mxu0
      %1210 = vmatprep.mubr.bf16.mxu0 %v677
      %1211 = vmatmul.mubr.bf16.gmra.mrb[0].mxu0 %v676
      %v1212 = vpop.f32.mrb[0].mxu0
      %v1213 = vadd.f32 0.0, %v1212
      %v1214 = vpop.f32.mrb[0].mxu0
      %v1215 = vpop.f32.mrb[0].mxu0
      %v1216 = vadd.f32 0.0, %v1215
      %v1217 = vpop.f32.mrb[0].mxu0
      %1218 = vmatprep.mubr.bf16.mxu0 %v686
      %1219 = vmatmul.mubr.bf16.gmra.mrb[0].mxu0 %v685
      %v1220 = vpop.f32.mrb[0].mxu0
      %v1221 = vadd.f32 0.0, %v1220
      %v1222 = vpop.f32.mrb[0].mxu0
      %v1223 = vpop.f32.mrb[0].mxu0
      %v1224 = vadd.f32 0.0, %v1223
      %v1225 = vpop.f32.mrb[0].mxu0
      %1226 = vdwg.mxu0
      %1227 = vmatprep.subr.bf16.mxu0 0
      %1228 = vmatpush1.bf16.msra.mxu0 %v1034
      %1229 = vmatprep.subr.bf16.mxu0 0
      %1230 = vmatpush1.bf16.msra.mxu0 %v1035
      %1231 = vmatprep.subr.bf16.mxu0 0
      %1232 = vmatpush1.bf16.msra.mxu0 %v1036
      %1233 = vmatprep.subr.bf16.mxu0 0
      %1234 = vmatpush1.bf16.msra.mxu0 %v1037
      %1235 = vmatprep.subr.bf16.mxu0 0
      %1236 = vmatpush1.bf16.msra.mxu0 %v1038
      %1237 = vmatprep.subr.bf16.mxu0 0
      %1238 = vmatpush1.bf16.msra.mxu0 %v1039
      %1239 = vmatprep.subr.bf16.mxu0 0
      %1240 = vmatpush1.bf16.msra.mxu0 %v1040
      %1241 = vmatprep.subr.bf16.mxu0 0
      %1242 = vmatpush1.bf16.msra.mxu0 %v1041
      %1243 = vmatprep.subr.bf16.mxu0 0
      %1244 = vmatpush1.bf16.msra.mxu0 %v1042
      %1245 = vmatprep.subr.bf16.mxu0 0
      %1246 = vmatpush1.bf16.msra.mxu0 %v1043
      %1247 = vmatprep.subr.bf16.mxu0 0
      %1248 = vmatpush1.bf16.msra.mxu0 %v1044
      %1249 = vmatprep.subr.bf16.mxu0 0
      %1250 = vmatpush1.bf16.msra.mxu0 %v1045
      %1251 = vmatprep.subr.bf16.mxu0 0
      %1252 = vmatpush1.bf16.msra.mxu0 %v1046
      %1253 = vmatprep.subr.bf16.mxu0 0
      %1254 = vmatpush1.bf16.msra.mxu0 %v1047
      %1255 = vmatprep.subr.bf16.mxu0 0
      %1256 = vmatpush1.bf16.msra.mxu0 %v1048
      %1257 = vmatprep.subr.bf16.mxu0 0
      %1258 = vmatpush1.bf16.msra.mxu0 %v1049
      %1259 = vmatprep.mubr.bf16.mxu0 %v661
      %1260 = vmatmul.mubr.bf16.gmra.mrb[0].mxu0 %v660
      %v1261 = vpop.f32.mrb[0].mxu0
      %v1262 = vadd.f32 %v1197, %v1261
      %v1263 = vpop.f32.mrb[0].mxu0
      %v1264 = vpop.f32.mrb[0].mxu0
      %v1265 = vadd.f32 %v1200, %v1264
      %v1266 = vpop.f32.mrb[0].mxu0
      %1267 = vmatprep.mubr.bf16.mxu0 %v670
      %1268 = vmatmul.mubr.bf16.gmra.mrb[0].mxu0 %v669
      %v1269 = vpop.f32.mrb[0].mxu0
      %v1270 = vadd.f32 %v1205, %v1269
      %v1271 = vpop.f32.mrb[0].mxu0
      %v1272 = vpop.f32.mrb[0].mxu0
      %v1273 = vadd.f32 %v1208, %v1272
      %v1274 = vpop.f32.mrb[0].mxu0
      %1275 = vmatprep.mubr.bf16.mxu0 %v679
      %1276 = vmatmul.mubr.bf16.gmra.mrb[0].mxu0 %v678
      %v1277 = vpop.f32.mrb[0].mxu0
      %v1278 = vadd.f32 %v1213, %v1277
      %v1279 = vpop.f32.mrb[0].mxu0
      %v1280 = vpop.f32.mrb[0].mxu0
      %v1281 = vadd.f32 %v1216, %v1280
      %v1282 = vpop.f32.mrb[0].mxu0
      %1283 = vmatprep.mubr.bf16.mxu0 %v688
      %1284 = vmatmul.mubr.bf16.gmra.mrb[0].mxu0 %v687
      %v1285 = vpop.f32.mrb[0].mxu0
      %v1286 = vadd.f32 %v1221, %v1285
      %v1287 = vpop.f32.mrb[0].mxu0
      %v1288 = vpop.f32.mrb[0].mxu0
      %v1289 = vadd.f32 %v1224, %v1288
      %v1290 = vpop.f32.mrb[0].mxu0
      %1291 = vdwg.mxu0
      %1292 = vmatprep.subr.bf16.mxu0 0
      %1293 = vmatpush1.bf16.msra.mxu0 %v1050
      %1294 = vmatprep.subr.bf16.mxu0 0
      %1295 = vmatpush1.bf16.msra.mxu0 %v1051
      %1296 = vmatprep.subr.bf16.mxu0 0
      %1297 = vmatpush1.bf16.msra.mxu0 %v1052
      %1298 = vmatprep.subr.bf16.mxu0 0
      %1299 = vmatpush1.bf16.msra.mxu0 %v1053
      %1300 = vmatprep.subr.bf16.mxu0 0
      %1301 = vmatpush1.bf16.msra.mxu0 %v1054
      %1302 = vmatprep.subr.bf16.mxu0 0
      %1303 = vmatpush1.bf16.msra.mxu0 %v1055
      %1304 = vmatprep.subr.bf16.mxu0 0
      %1305 = vmatpush1.bf16.msra.mxu0 %v1056
      %1306 = vmatprep.subr.bf16.mxu0 0
      %1307 = vmatpush1.bf16.msra.mxu0 %v1057
      %1308 = vmatprep.subr.bf16.mxu0 0
      %1309 = vmatpush1.bf16.msra.mxu0 %v1058
      %1310 = vmatprep.subr.bf16.mxu0 0
      %1311 = vmatpush1.bf16.msra.mxu0 %v1059
      %1312 = vmatprep.subr.bf16.mxu0 0
      %1313 = vmatpush1.bf16.msra.mxu0 %v1060
      %1314 = vmatprep.subr.bf16.mxu0 0
      %1315 = vmatpush1.bf16.msra.mxu0 %v1061
      %1316 = vmatprep.subr.bf16.mxu0 0
      %1317 = vmatpush1.bf16.msra.mxu0 %v1062
      %1318 = vmatprep.subr.bf16.mxu0 0
      %1319 = vmatpush1.bf16.msra.mxu0 %v1063
      %1320 = vmatprep.subr.bf16.mxu0 0
      %1321 = vmatpush1.bf16.msra.mxu0 %v1064
      %1322 = vmatprep.subr.bf16.mxu0 0
      %1323 = vmatpush1.bf16.msra.mxu0 %v1065
      %1324 = vmatprep.mubr.bf16.mxu0 %v663
      %1325 = vmatmul.mubr.bf16.gmra.mrb[0].mxu0 %v662
      %v1326 = vpop.f32.mrb[0].mxu0
      %v1327 = vadd.f32 %v1262, %v1326
      %v1328 = vpop.f32.mrb[0].mxu0
      %v1329 = vpop.f32.mrb[0].mxu0
      %v1330 = vadd.f32 %v1265, %v1329
      %v1331 = vpop.f32.mrb[0].mxu0
      %1332 = vmatprep.mubr.bf16.mxu0 %v672
      %1333 = vmatmul.mubr.bf16.gmra.mrb[0].mxu0 %v671
      %v1334 = vpop.f32.mrb[0].mxu0
      %v1335 = vadd.f32 %v1270, %v1334
      %v1336 = vpop.f32.mrb[0].mxu0
      %v1337 = vpop.f32.mrb[0].mxu0
      %v1338 = vadd.f32 %v1273, %v1337
      %v1339 = vpop.f32.mrb[0].mxu0
      %1340 = vmatprep.mubr.bf16.mxu0 %v681
      %1341 = vmatmul.mubr.bf16.gmra.mrb[0].mxu0 %v680
      %v1342 = vpop.f32.mrb[0].mxu0
      %v1343 = vadd.f32 %v1278, %v1342
      %v1344 = vpop.f32.mrb[0].mxu0
      %v1345 = vpop.f32.mrb[0].mxu0
      %v1346 = vadd.f32 %v1281, %v1345
      %v1347 = vpop.f32.mrb[0].mxu0
      %1348 = vmatprep.mubr.bf16.mxu0 %v690
      %1349 = vmatmul.mubr.bf16.gmra.mrb[0].mxu0 %v689
      %v1350 = vpop.f32.mrb[0].mxu0
      %v1351 = vadd.f32 %v1286, %v1350
      %v1352 = vpop.f32.mrb[0].mxu0
      %v1353 = vpop.f32.mrb[0].mxu0
      %v1354 = vadd.f32 %v1289, %v1353
      %v1355 = vpop.f32.mrb[0].mxu0
      %1356 = vdwg.mxu0
      %1357 = vmatprep.subr.bf16.mxu0 0
      %1358 = vmatpush1.bf16.msra.mxu0 %v1066
      %1359 = vmatprep.subr.bf16.mxu0 0
      %1360 = vmatpush1.bf16.msra.mxu0 %v1067
      %1361 = vmatprep.subr.bf16.mxu0 0
      %1362 = vmatpush1.bf16.msra.mxu0 %v1068
      %1363 = vmatprep.subr.bf16.mxu0 0
      %1364 = vmatpush1.bf16.msra.mxu0 %v1069
      %1365 = vmatprep.subr.bf16.mxu0 0
      %1366 = vmatpush1.bf16.msra.mxu0 %v1070
      %1367 = vmatprep.subr.bf16.mxu0 0
      %1368 = vmatpush1.bf16.msra.mxu0 %v1071
      %1369 = vmatprep.subr.bf16.mxu0 0
      %1370 = vmatpush1.bf16.msra.mxu0 %v1072
      %1371 = vmatprep.subr.bf16.mxu0 0
      %1372 = vmatpush1.bf16.msra.mxu0 %v1073
      %1373 = vmatprep.subr.bf16.mxu0 0
      %1374 = vmatpush1.bf16.msra.mxu0 %v1074
      %1375 = vmatprep.subr.bf16.mxu0 0
      %1376 = vmatpush1.bf16.msra.mxu0 %v1075
      %1377 = vmatprep.subr.bf16.mxu0 0
      %1378 = vmatpush1.bf16.msra.mxu0 %v1076
      %1379 = vmatprep.subr.bf16.mxu0 0
      %1380 = vmatpush1.bf16.msra.mxu0 %v1077
      %1381 = vmatprep.subr.bf16.mxu0 0
      %1382 = vmatpush1.bf16.msra.mxu0 %v1078
      %1383 = vmatprep.subr.bf16.mxu0 0
      %1384 = vmatpush1.bf16.msra.mxu0 %v1079
      %1385 = vmatprep.subr.bf16.mxu0 0
      %1386 = vmatpush1.bf16.msra.mxu0 %v1080
      %1387 = vmatprep.subr.bf16.mxu0 0
      %1388 = vmatpush1.bf16.msra.mxu0 %v1081
      %1389 = vmatprep.mubr.bf16.mxu0 %v665
      %1390 = vmatmul.mubr.bf16.gmra.mrb[0].mxu0 %v664
      %v1391 = vpop.f32.mrb[0].mxu0
      %v1392 = vadd.f32 %v1327, %v1391
      %v1393 = vpop.f32.mrb[0].mxu0
      %v1394 = vpop.f32.mrb[0].mxu0
      %v1395 = vadd.f32 %v1330, %v1394
      %v1396 = vpop.f32.mrb[0].mxu0
      %1397 = vmatprep.mubr.bf16.mxu0 %v674
      %1398 = vmatmul.mubr.bf16.gmra.mrb[0].mxu0 %v673
      %v1399 = vpop.f32.mrb[0].mxu0
      %v1400 = vadd.f32 %v1335, %v1399
      %v1401 = vpop.f32.mrb[0].mxu0
      %v1402 = vpop.f32.mrb[0].mxu0
      %v1403 = vadd.f32 %v1338, %v1402
      %v1404 = vpop.f32.mrb[0].mxu0
      %1405 = vmatprep.mubr.bf16.mxu0 %v683
      %1406 = vmatmul.mubr.bf16.gmra.mrb[0].mxu0 %v682
      %v1407 = vpop.f32.mrb[0].mxu0
      %v1408 = vadd.f32 %v1343, %v1407
      %v1409 = vpop.f32.mrb[0].mxu0
      %v1410 = vpop.f32.mrb[0].mxu0
      %v1411 = vadd.f32 %v1346, %v1410
      %v1412 = vpop.f32.mrb[0].mxu0
      %1413 = vmatprep.mubr.bf16.mxu0 %v692
      %1414 = vmatmul.mubr.bf16.gmra.mrb[0].mxu0 %v691
      %v1415 = vpop.f32.mrb[0].mxu0
      %v1416 = vadd.f32 %v1351, %v1415
      %v1417 = vpop.f32.mrb[0].mxu0
      %v1418 = vpop.f32.mrb[0].mxu0
      %v1419 = vadd.f32 %v1354, %v1418
      %v1420 = vpop.f32.mrb[0].mxu0
      %1421 = vdwg.mxu0
      %1422 = vmatprep.subr.bf16.mxu0 0
      %1423 = vmatpush1.bf16.msra.mxu0 %v1082
      %1424 = vmatprep.subr.bf16.mxu0 0
      %1425 = vmatpush1.bf16.msra.mxu0 %v1083
      %1426 = vmatprep.subr.bf16.mxu0 0
      %1427 = vmatpush1.bf16.msra.mxu0 %v1084
      %1428 = vmatprep.subr.bf16.mxu0 0
      %1429 = vmatpush1.bf16.msra.mxu0 %v1085
      %1430 = vmatprep.subr.bf16.mxu0 0
      %1431 = vmatpush1.bf16.msra.mxu0 %v1086
      %1432 = vmatprep.subr.bf16.mxu0 0
      %1433 = vmatpush1.bf16.msra.mxu0 %v1087
      %1434 = vmatprep.subr.bf16.mxu0 0
      %1435 = vmatpush1.bf16.msra.mxu0 %v1088
      %1436 = vmatprep.subr.bf16.mxu0 0
      %1437 = vmatpush1.bf16.msra.mxu0 %v1089
      %1438 = vmatprep.subr.bf16.mxu0 0
      %1439 = vmatpush1.bf16.msra.mxu0 0
      %1440 = vmatprep.subr.bf16.mxu0 0
      %1441 = vmatpush1.bf16.msra.mxu0 0
      %1442 = vmatprep.subr.bf16.mxu0 0
      %1443 = vmatpush1.bf16.msra.mxu0 0
      %1444 = vmatprep.subr.bf16.mxu0 0
      %1445 = vmatpush1.bf16.msra.mxu0 0
      %1446 = vmatprep.subr.bf16.mxu0 0
      %1447 = vmatpush1.bf16.msra.mxu0 0
      %1448 = vmatprep.subr.bf16.mxu0 0
      %1449 = vmatpush1.bf16.msra.mxu0 0
      %1450 = vmatprep.subr.bf16.mxu0 0
      %1451 = vmatpush1.bf16.msra.mxu0 0
      %1452 = vmatprep.subr.bf16.mxu0 0
      %1453 = vmatpush1.bf16.msra.mxu0 0
      %1454 = vmatprep.mubr.bf16.mxu0 0
      %1455 = vmatmul.mubr.bf16.gmra.mrb[0].mxu0 %v666
      %v1456 = vpop.f32.mrb[0].mxu0
      %v1457 = vadd.f32 %v1392, %v1456
      %v1458 = vpop.f32.mrb[0].mxu0
      %v1459 = vpop.f32.mrb[0].mxu0
      %v1460 = vadd.f32 %v1395, %v1459
      %v1461 = vpop.f32.mrb[0].mxu0
      %1462 = vmatprep.mubr.bf16.mxu0 0
      %1463 = vmatmul.mubr.bf16.gmra.mrb[0].mxu0 %v675
      %v1464 = vpop.f32.mrb[0].mxu0
      %v1465 = vadd.f32 %v1400, %v1464
      %v1466 = vpop.f32.mrb[0].mxu0
      %v1467 = vpop.f32.mrb[0].mxu0
      %v1468 = vadd.f32 %v1403, %v1467
      %v1469 = vpop.f32.mrb[0].mxu0
      %1470 = vmatprep.mubr.bf16.mxu0 0
      %1471 = vmatmul.mubr.bf16.gmra.mrb[0].mxu0 %v684
      %v1472 = vpop.f32.mrb[0].mxu0
      %v1473 = vadd.f32 %v1408, %v1472
      %v1474 = vpop.f32.mrb[0].mxu0
      %v1475 = vpop.f32.mrb[0].mxu0
      %v1476 = vadd.f32 %v1411, %v1475
      %v1477 = vpop.f32.mrb[0].mxu0
      %1478 = vmatprep.mubr.bf16.mxu0 0
      %1479 = vmatmul.mubr.bf16.gmra.mrb[0].mxu0 %v693
      %v1480 = vpop.f32.mrb[0].mxu0
      %v1481 = vadd.f32 %v1416, %v1480
      %v1482 = vpop.f32.mrb[0].mxu0
      %v1483 = vpop.f32.mrb[0].mxu0
      %v1484 = vadd.f32 %v1419, %v1483
      %v1485 = vpop.f32.mrb[0].mxu0
      %1486 = vdwg.mxu0
      %v1487 = vadd.f32 %v351, %v1457
      %v1488 = vadd.f32 %v352, %v1460
      %v1489 = vadd.f32 %v353, %v1465
      %v1490 = vadd.f32 %v354, %v1468
      %v1491 = vadd.f32 %v355, %v1473
      %v1492 = vadd.f32 %v356, %v1476
      %v1493 = vadd.f32 %v357, %v1481
      %v1494 = vadd.f32 %v358, %v1484
      %1495 = vst [vmem:[%s316] sm:$0xff] %v1487
      %1496 = vst [vmem:[%s316 + $0x8] sm:$0xff] %v1488
      %1497 = vst [vmem:[%s316 + $0x10] sm:$0xff] %v1489
      %1498 = vst [vmem:[%s316 + $0x18] sm:$0xff] %v1490
      %1499 = vst [vmem:[%s316 + $0x20] sm:$0xff] %v1491
      %1500 = vst [vmem:[%s316 + $0x28] sm:$0xff] %v1492
      %1501 = vst [vmem:[%s316 + $0x30] sm:$0xff] %v1493
      %1502 = vst [vmem:[%s316 + $0x38] sm:$0xff] %v1494
      %p1503 = scmp.eq.s32.totalorder %s25, 2
      // Predicated region
      $region33: #{double_conv.6} parent=27 // pred_check
        %p1504 = pneg %p1503
      $region34: #{double_conv.6} parent=27 // pred_check_branch
        %1506 = sbr.rel (%p1504) target = $region36
      $region35: #{double_conv.6} parent=27 // pred_region
        %v1507 = vld [vmem:[%s316] sm:$0xff]
        %v1508 = vld [vmem:[%s316 + $0x8] sm:$0xff]
        %v1509 = vld [vmem:[%s316 + $0x10] sm:$0xff]
        %v1510 = vld [vmem:[%s316 + $0x18] sm:$0xff]
        %v1511 = vld [vmem:[%s316 + $0x20] sm:$0xff]
        %v1512 = vld [vmem:[%s316 + $0x28] sm:$0xff]
        %v1513 = vld [vmem:[%s316 + $0x30] sm:$0xff]
        %v1514 = vld [vmem:[%s316 + $0x38] sm:$0xff]
        %v1515 = vadd.f32 %v1507, %v1508
        %v1516 = vadd.f32 %v1515, %v1509
        %v1517 = vadd.f32 %v1516, %v1510
        %v1518 = vadd.f32 %v1517, %v1511
        %v1519 = vadd.f32 %v1518, %v1512
        %v1520 = vadd.f32 %v1519, %v1513
        %v1521 = vadd.f32 %v1520, %v1514
        %v1522 = vrot.slane %v1521, 4
        %v1523 = vadd.f32 %v1521, %v1522
        %v1524 = vrot.slane %v1523, 2
        %v1525 = vadd.f32 %v1523, %v1524
        %v1526 = vrot.slane %v1525, 1
        %v1527 = vadd.f32 %v1525, %v1526
        %1528 = vst [vmem:[%s327] sm:$0x1] %v1527
        %v1529 = vmul.f32 %v1507, %v1507
        %v1530 = vmul.f32 %v1508, %v1508
        %v1531 = vmul.f32 %v1509, %v1509
        %v1532 = vmul.f32 %v1510, %v1510
        %v1533 = vmul.f32 %v1511, %v1511
        %v1534 = vmul.f32 %v1512, %v1512
        %v1535 = vmul.f32 %v1513, %v1513
        %v1536 = vmul.f32 %v1514, %v1514
        %v1537 = vadd.f32 %v1529, %v1530
        %v1538 = vadd.f32 %v1537, %v1531
        %v1539 = vadd.f32 %v1538, %v1532
        %v1540 = vadd.f32 %v1539, %v1533
        %v1541 = vadd.f32 %v1540, %v1534
        %v1542 = vadd.f32 %v1541, %v1535
        %v1543 = vadd.f32 %v1542, %v1536
        %v1544 = vrot.slane %v1543, 4
        %v1545 = vadd.f32 %v1543, %v1544
        %v1546 = vrot.slane %v1545, 2
        %v1547 = vadd.f32 %v1545, %v1546
        %v1548 = vrot.slane %v1547, 1
        %v1549 = vadd.f32 %v1547, %v1548
        %1550 = vst [vmem:[%s337] sm:$0x1] %v1549
      $region36: #{double_conv.6} parent=27 // pred_fallthru
        _
      %s1551 = smul.u32 8, %s24
      %p1552 = scmp.lt.s32.totalorder %s22, 1
      %s1553 = scalar_select %p1552, %s22, 1
      %p1554 = scmp.lt.s32.totalorder %s23, 7
      %s1555 = scalar_select %p1554, %s23, 7
      %p1556 = scmp.lt.s32.totalorder %s1551, 7
      %s1557 = scalar_select %p1556, %s1551, 7
      %s1558 = smul.addr %s1555, 8
      %s1559 = sadd.s32 %s1557, %s1558
      %s1560 = smul.addr %s1553, 64
      %s1561 = sadd.s32 %s1559, %s1560
      %s1562 = smul.addr %s1561, 8
      %s1563 = scalar_lea.vmem %s2, %s1562
      %p1564 = scmp.lt.s32.totalorder %s22, 1
      %s1565 = scalar_select %p1564, %s22, 1
      %p1566 = scmp.lt.s32.totalorder %s23, 7
      %s1567 = scalar_select %p1566, %s23, 7
      %p1568 = scmp.lt.s32.totalorder %s24, 0
      %s1569 = scalar_select %p1568, %s24, 0
      %s1570 = sadd.s32 %s1569, %s1567
      %s1571 = smul.addr %s1565, 8
      %s1572 = sadd.s32 %s1570, %s1571
      %s1573 = scalar_lea.vmem %s3, %s1572
      %p1574 = scmp.lt.s32.totalorder %s22, 1
      %s1575 = scalar_select %p1574, %s22, 1
      %p1576 = scmp.lt.s32.totalorder %s23, 7
      %s1577 = scalar_select %p1576, %s23, 7
      %p1578 = scmp.lt.s32.totalorder %s24, 0
      %s1579 = scalar_select %p1578, %s24, 0
      %s1580 = sadd.s32 %s1579, %s1577
      %s1581 = smul.addr %s1575, 8
      %s1582 = sadd.s32 %s1580, %s1581
      %s1583 = scalar_lea.vmem %s4, %s1582
      // Predicated region
      $region37: #{double_conv.6} parent=27 // pred_check
        %p1584 = pneg %p117
      $region38: #{double_conv.6} parent=27 // pred_check_branch
        %1586 = sbr.rel (%p1584) target = $region40
      $region39: #{double_conv.6} parent=27 // pred_region
        %s1587 = smul.u32 8, %s24
      $region40: #{double_conv.6} parent=27 // pred_fallthru
        _
      // Predicated region
      $region41: #{double_conv.6} parent=27 // pred_check
        %p1588 = pneg %p147
      $region42: #{double_conv.6} parent=27 // pred_check_branch
        %1590 = sbr.rel (%p1588) target = $region44
      $region43: #{double_conv.6} parent=27 // pred_region
        _
      $region44: #{double_conv.6} parent=27 // pred_fallthru
        _
      // Predicated region
      $region45: #{double_conv.6} parent=27 // pred_check
        %p1591 = pneg %p177
      $region46: #{double_conv.6} parent=27 // pred_check_branch
        %1593 = sbr.rel (%p1591) target = $region48
      $region47: #{double_conv.6} parent=27 // pred_region
        _
      $region48: #{double_conv.6} parent=27 // pred_fallthru
        _
    $region28: #{double_conv.6} parent=5 // pred_fallthru
      _
    %p1594 = scmp.le.s32.totalorder 2, %s11
    // Predicated region
    $region49: #{double_conv.6} parent=5 // pred_check
      %p1595 = pneg %p1594
    $region50: #{double_conv.6} parent=5 // pred_check_branch
      %1597 = sbr.rel (%p1595) target = $region52
    $region51: #{double_conv.6} parent=5 // pred_region
      %s1598 = ssub.s32 %s11, 2
      // Predicated region
      $region53: #{double_conv.6} parent=51 // pred_check
        %p1599 = pneg %p123
      $region54: #{double_conv.6} parent=51 // pred_check_branch
        %1601 = sbr.rel (%p1599) target = $region56
      $region55: #{double_conv.6} parent=51 // pred_region
        %s1602 = smul.u32 8, %s28
        %p1603 = scmp.lt.s32.totalorder %s26, 1
        %s1604 = scalar_select %p1603, %s26, 1
        %p1605 = scmp.lt.s32.totalorder %s27, 7
        %s1606 = scalar_select %p1605, %s27, 7
        %p1607 = scmp.lt.s32.totalorder %s1602, 7
        %s1608 = scalar_select %p1607, %s1602, 7
        %s1609 = smul.addr %s1606, 8
        %s1610 = sadd.s32 %s1608, %s1609
        %s1611 = smul.addr %s1604, 64
        %s1612 = sadd.s32 %s1610, %s1611
        %s1613 = smul.addr %s1612, 8
        %s1614 = scalar_lea.vmem %s2, %s1613
      $region56: #{double_conv.6} parent=51 // pred_fallthru
        _
      // Predicated region
      $region57: #{double_conv.6} parent=51 // pred_check
        %p1615 = pneg %p153
      $region58: #{double_conv.6} parent=51 // pred_check_branch
        %1617 = sbr.rel (%p1615) target = $region60
      $region59: #{double_conv.6} parent=51 // pred_region
        %p1618 = scmp.lt.s32.totalorder %s26, 1
        %s1619 = scalar_select %p1618, %s26, 1
        %p1620 = scmp.lt.s32.totalorder %s27, 7
        %s1621 = scalar_select %p1620, %s27, 7
        %p1622 = scmp.lt.s32.totalorder %s28, 0
        %s1623 = scalar_select %p1622, %s28, 0
        %s1624 = sadd.s32 %s1623, %s1621
        %s1625 = smul.addr %s1619, 8
        %s1626 = sadd.s32 %s1624, %s1625
        %s1627 = scalar_lea.vmem %s3, %s1626
      $region60: #{double_conv.6} parent=51 // pred_fallthru
        _
      // Predicated region
      $region61: #{double_conv.6} parent=51 // pred_check
        %p1628 = pneg %p183
      $region62: #{double_conv.6} parent=51 // pred_check_branch
        %1630 = sbr.rel (%p1628) target = $region64
      $region63: #{double_conv.6} parent=51 // pred_region
        %p1631 = scmp.lt.s32.totalorder %s26, 1
        %s1632 = scalar_select %p1631, %s26, 1
        %p1633 = scmp.lt.s32.totalorder %s27, 7
        %s1634 = scalar_select %p1633, %s27, 7
        %p1635 = scmp.lt.s32.totalorder %s28, 0
        %s1636 = scalar_select %p1635, %s28, 0
        %s1637 = sadd.s32 %s1636, %s1634
        %s1638 = smul.addr %s1632, 8
        %s1639 = sadd.s32 %s1637, %s1638
        %s1640 = scalar_lea.vmem %s4, %s1639
      $region64: #{double_conv.6} parent=51 // pred_fallthru
        _
    $region52: #{double_conv.6} parent=5 // pred_fallthru
      _
  $region6: #{double_conv.6} parent=0 // loop_footer
    %s15 = sadd.s32 1, %s11
  $region7: #{double_conv.6} parent=0 // loop_footer_branch
    %10 = sbr.rel target = $region3
  $region8: #{double_conv.6} parent=0 // loop_exit
    _

// kernel: double_conv.7
$region0: #{double_conv.7}
  #allocation0 [shape = 'u32[]', space=smem, size = 0x4, offset = 0x4, fixed_abs, tag = 'smem constant byte address 0x4 - core index']
  #allocation1 [shape = 'u32[144,128]{1,0:T(1,128)}', space=vmem, size = 0x12000, scoped, tag = 'internal scratch']
  %s0 = inlined_call_operand.vmem [shape: f32[2,8,64,128], index: 0, kind: input, shape index: {}]
  %s1 = inlined_call_operand.vmem [shape: f32[1,128], index: 1, kind: input, shape index: {}]
  %s2 = inlined_call_operand.vmem [shape: f32[1,128], index: 2, kind: input, shape index: {}]
  %s3 = inlined_call_operand.vmem [shape: f32[2,8,64,128], index: 3, kind: output, shape index: {}]
  %s4 = sld [smem:[#allocation0]]
  $region45: #{double_conv.7} parent=0
    _
  %s6 = ssub.s32 1, %s4
  %s7 = scalar_select 0, %s6, %s4
  loop: start=0, step=1, limit=18
  $region2: #{double_conv.7} parent=0 // loop_pre_header
    _
  $region3: #{double_conv.7} parent=0 // loop_header
    %s9 = sphi 0, %s13
    %p10 = scmp.ge.s32.totalorder %s9, 18
    %s16 = sphi 0, %s35
    %s17 = sphi 0, %s31
    %s18 = sphi 0, %s27
    %s19 = sphi 0, %s16
    %s20 = sphi 0, %s17
    %s21 = sphi 0, %s18
    %s22 = sphi 0, %s19
    %s23 = sphi 0, %s20
    %s24 = sphi 0, %s21
    %s42 = sphi 0, %s44
    %s45 = sphi 0, %s42
    %s46 = sphi 0, %s45
    %s62 = sphi 0, %s46
    %s66 = sphi 0, %s66
    %s68 = sphi 0, %s66
    %s69 = sphi 0, %s68
    %s83 = sphi 0, %s69
    %s87 = sphi 0, %s87
    %s89 = sphi 0, %s87
    %s90 = sphi 0, %s89
    %s104 = sphi 0, %s90
    %s114 = sphi 0, %s116
    %s117 = sphi 0, %s114
    %s118 = sphi 0, %s117
    %s134 = sphi 0, %s118
  $region4: #{double_conv.7} parent=0 // loop_header_branch
    %12 = sbr.rel (%p10) target = $region8
  $region5: #{double_conv.7} parent=0 // loop_body
    %s14 = ssub.s32 %s9, 1
    %s15 = ssub.s32 %s9, 2
    %s25 = sadd.s32 1, %s18
    %p26 = scmp.ge.s32.totalorder %s25, 1
    %s27 = scalar_select %p26, 0, %s25
    %s28 = sadd.s32 1, %s17
    %s29 = scalar_select %p26, %s28, %s17
    %p30 = scmp.ge.s32.totalorder %s29, 8
    %s31 = scalar_select %p30, 0, %s29
    %s32 = sadd.s32 1, %s16
    %s33 = scalar_select %p30, %s32, %s16
    %p34 = scmp.ge.s32.totalorder %s33, 2
    %s35 = scalar_select %p34, 0, %s33
    %s36 = ssub.s32 %s16, %s35
    %s37 = ssub.s32 %s17, %s31
    %s38 = sor.u32 %s36, %s37
    %s39 = ssub.s32 %s18, %s27
    %s40 = sor.u32 %s38, %s39
    %p41 = scmp.eq.s32.totalorder %s40, 0
    %s43 = sadd.s32 %s42, 1
    %s44 = scalar_select %p41, %s42, %s43
    %p47 = pneg %p41
    %p48 = scmp.eq.s32.totalorder %s9, 15
    %p49 = por %p47, %p48
    %p50 = scmp.ne.s32.totalorder %s42, %s45
    %p51 = scmp.eq.s32.totalorder %s9, 0
    %p52 = por %p50, %p51
    %p53 = scmp.ne.s32.totalorder %s42, %s45
    %p54 = scmp.eq.s32.totalorder %s14, 15
    %p55 = por %p53, %p54
    %p56 = scmp.ne.s32.totalorder %s45, %s46
    %p57 = scmp.eq.s32.totalorder %s14, 0
    %p58 = por %p56, %p57
    %p59 = scmp.ne.s32.totalorder %s45, %s46
    %p60 = scmp.eq.s32.totalorder %s15, 15
    %p61 = por %p59, %p60
    %p63 = scmp.ne.s32.totalorder %s46, %s62
    %p64 = scmp.eq.s32.totalorder %s15, 0
    %p65 = por %p63, %p64
    %s67 = sadd.s32 %s66, 1
    %p70 = scmp.eq.s32.totalorder %s9, 15
    %p71 = scmp.ne.s32.totalorder %s66, %s68
    %p72 = scmp.eq.s32.totalorder %s9, 0
    %p73 = por %p71, %p72
    %p74 = scmp.ne.s32.totalorder %s66, %s68
    %p75 = scmp.eq.s32.totalorder %s14, 15
    %p76 = por %p74, %p75
    %p77 = scmp.ne.s32.totalorder %s68, %s69
    %p78 = scmp.eq.s32.totalorder %s14, 0
    %p79 = por %p77, %p78
    %p80 = scmp.ne.s32.totalorder %s68, %s69
    %p81 = scmp.eq.s32.totalorder %s15, 15
    %p82 = por %p80, %p81
    %p84 = scmp.ne.s32.totalorder %s69, %s83
    %p85 = scmp.eq.s32.totalorder %s15, 0
    %p86 = por %p84, %p85
    %s88 = sadd.s32 %s87, 1
    %p91 = scmp.eq.s32.totalorder %s9, 15
    %p92 = scmp.ne.s32.totalorder %s87, %s89
    %p93 = scmp.eq.s32.totalorder %s9, 0
    %p94 = por %p92, %p93
    %p95 = scmp.ne.s32.totalorder %s87, %s89
    %p96 = scmp.eq.s32.totalorder %s14, 15
    %p97 = por %p95, %p96
    %p98 = scmp.ne.s32.totalorder %s89, %s90
    %p99 = scmp.eq.s32.totalorder %s14, 0
    %p100 = por %p98, %p99
    %p101 = scmp.ne.s32.totalorder %s89, %s90
    %p102 = scmp.eq.s32.totalorder %s15, 15
    %p103 = por %p101, %p102
    %p105 = scmp.ne.s32.totalorder %s90, %s104
    %p106 = scmp.eq.s32.totalorder %s15, 0
    %p107 = por %p105, %p106
    %s108 = ssub.s32 %s16, %s35
    %s109 = ssub.s32 %s17, %s31
    %s110 = sor.u32 %s108, %s109
    %s111 = ssub.s32 %s18, %s27
    %s112 = sor.u32 %s110, %s111
    %p113 = scmp.eq.s32.totalorder %s112, 0
    %s115 = sadd.s32 %s114, 1
    %s116 = scalar_select %p113, %s114, %s115
    %p119 = pneg %p113
    %p120 = scmp.eq.s32.totalorder %s9, 15
    %p121 = por %p119, %p120
    %p122 = scmp.ne.s32.totalorder %s114, %s117
    %p123 = scmp.eq.s32.totalorder %s9, 0
    %p124 = por %p122, %p123
    %p125 = scmp.ne.s32.totalorder %s114, %s117
    %p126 = scmp.eq.s32.totalorder %s14, 15
    %p127 = por %p125, %p126
    %p128 = scmp.ne.s32.totalorder %s117, %s118
    %p129 = scmp.eq.s32.totalorder %s14, 0
    %p130 = por %p128, %p129
    %p131 = scmp.ne.s32.totalorder %s117, %s118
    %p132 = scmp.eq.s32.totalorder %s15, 15
    %p133 = por %p131, %p132
    %p135 = scmp.ne.s32.totalorder %s118, %s134
    %p136 = scmp.eq.s32.totalorder %s15, 0
    %p137 = por %p135, %p136
    %p138 = scmp.le.s32.totalorder 1, %s9
    %p139 = scmp.lt.s32.totalorder %s9, 17
    %p140 = pnand %p138, %p139
    %p141 = pneg %p140
    // Predicated region
    $region9: #{double_conv.7} parent=5 // pred_check
      _
    $region10: #{double_conv.7} parent=5 // pred_check_branch
      %143 = sbr.rel (%p140) target = $region12
    $region11: #{double_conv.7} parent=5 // pred_region
      %s144 = ssub.s32 %s9, 1
      // Predicated region
      $region13: #{double_conv.7} parent=11 // pred_check
        %p145 = pneg %p79
      $region14: #{double_conv.7} parent=11 // pred_check_branch
        %147 = sbr.rel (%p145) target = $region16
      $region15: #{double_conv.7} parent=11 // pred_region
        _
      $region16: #{double_conv.7} parent=11 // pred_fallthru
        _
      // Predicated region
      $region17: #{double_conv.7} parent=11 // pred_check
        %p148 = pneg %p100
      $region18: #{double_conv.7} parent=11 // pred_check_branch
        %150 = sbr.rel (%p148) target = $region20
      $region19: #{double_conv.7} parent=11 // pred_region
        _
      $region20: #{double_conv.7} parent=11 // pred_fallthru
        _
    $region12: #{double_conv.7} parent=5 // pred_fallthru
      _
    %p151 = scmp.lt.s32.totalorder %s9, 16
    // Predicated region
    $region21: #{double_conv.7} parent=5 // pred_check
      %p152 = pneg %p151
    $region22: #{double_conv.7} parent=5 // pred_check_branch
      %154 = sbr.rel (%p152) target = $region24
    $region23: #{double_conv.7} parent=5 // pred_region
      // Predicated region
      $region25: #{double_conv.7} parent=23 // pred_check
        %p155 = pneg %p52
      $region26: #{double_conv.7} parent=23 // pred_check_branch
        %157 = sbr.rel (%p155) target = $region28
      $region27: #{double_conv.7} parent=23 // pred_region
        %s158 = smul.u32 8, %s18
        %p159 = scmp.lt.s32.totalorder %s16, 1
        %s160 = scalar_select %p159, %s16, 1
        %p161 = scmp.lt.s32.totalorder %s17, 7
        %s162 = scalar_select %p161, %s17, 7
        %p163 = scmp.lt.s32.totalorder %s158, 7
        %s164 = scalar_select %p163, %s158, 7
        %s165 = smul.addr %s162, 8
        %s166 = sadd.s32 %s164, %s165
        %s167 = smul.addr %s160, 64
        %s168 = sadd.s32 %s166, %s167
        %s169 = smul.addr %s168, 8
        %s170 = scalar_lea.vmem %s0, %s169
        %s171 = smul.u32 8, %s18
      $region28: #{double_conv.7} parent=23 // pred_fallthru
        _
    $region24: #{double_conv.7} parent=5 // pred_fallthru
      _
    %p172 = scmp.le.s32.totalorder 1, %s9
    %p173 = scmp.lt.s32.totalorder %s9, 17
    %p174 = pnand %p172, %p173
    %p175 = pneg %p174
    // Predicated region
    $region29: #{double_conv.7} parent=5 // pred_check
      _
    $region30: #{double_conv.7} parent=5 // pred_check_branch
      %177 = sbr.rel (%p174) target = $region32
    $region31: #{double_conv.7} parent=5 // pred_region
      %s178 = ssub.s32 %s9, 1
      %s179 = smul.u32 8, %s21
      %p180 = scmp.lt.s32.totalorder %s19, 1
      %s181 = scalar_select %p180, %s19, 1
      %p182 = scmp.lt.s32.totalorder %s20, 7
      %s183 = scalar_select %p182, %s20, 7
      %p184 = scmp.lt.s32.totalorder %s179, 7
      %s185 = scalar_select %p184, %s179, 7
      %s186 = smul.addr %s183, 8
      %s187 = sadd.s32 %s185, %s186
      %s188 = smul.addr %s181, 64
      %s189 = sadd.s32 %s187, %s188
      %s190 = smul.addr %s189, 8
      %s191 = scalar_lea.vmem %s0, %s190
      %p192 = pneg %p58
      %p193 = pneg %p55
      %p194 = pneg %p79
      %p195 = pneg %p76
      %p196 = pneg %p100
      %p197 = pneg %p97
      %p198 = pneg %p130
      %p199 = pneg %p127
      %s200 = smul.u32 8, %s21
      %p201 = scmp.lt.s32.totalorder %s19, 1
      %s202 = scalar_select %p201, %s19, 1
      %p203 = scmp.lt.s32.totalorder %s20, 7
      %s204 = scalar_select %p203, %s20, 7
      %p205 = scmp.lt.s32.totalorder %s200, 7
      %s206 = scalar_select %p205, %s200, 7
      %s207 = smul.addr %s204, 8
      %s208 = sadd.s32 %s206, %s207
      %s209 = smul.addr %s202, 64
      %s210 = sadd.s32 %s208, %s209
      %s211 = smul.addr %s210, 8
      %s212 = scalar_lea.vmem %s3, %s211
      %s213 = smul.u32 8, %s21
      %p214 = scmp.lt.s32.totalorder %s19, 1
      %s215 = scalar_select %p214, %s19, 1
      %p216 = scmp.lt.s32.totalorder %s20, 7
      %s217 = scalar_select %p216, %s20, 7
      %p218 = scmp.lt.s32.totalorder %s213, 7
      %s219 = scalar_select %p218, %s213, 7
      %s220 = smul.addr %s217, 8
      %s221 = sadd.s32 %s219, %s220
      %s222 = smul.addr %s215, 64
      %s223 = sadd.s32 %s221, %s222
      %s224 = smul.addr %s223, 8
      %s225 = scalar_lea.vmem %s0, %s224
      %s226 = smul.u32 8, %s21
      %s227 = smul.u32 8, %s21
      %p228 = scmp.lt.s32.totalorder %s19, 1
      %s229 = scalar_select %p228, %s19, 1
      %p230 = scmp.lt.s32.totalorder %s20, 7
      %s231 = scalar_select %p230, %s20, 7
      %p232 = scmp.lt.s32.totalorder %s227, 7
      %s233 = scalar_select %p232, %s227, 7
      %s234 = smul.addr %s231, 8
      %s235 = sadd.s32 %s233, %s234
      %s236 = smul.addr %s229, 64
      %s237 = sadd.s32 %s235, %s236
      %s238 = smul.addr %s237, 8
      %s239 = scalar_lea.vmem %s3, %s238
      %s240 = smul.u32 8, %s21
      %v241 = vld [vmem:[%s225] sm:$0xff]
      %v242 = vld [vmem:[%s225 + $0x8] sm:$0xff]
      %v243 = vld [vmem:[%s225 + $0x10] sm:$0xff]
      %v244 = vld [vmem:[%s225 + $0x18] sm:$0xff]
      %v245 = vld [vmem:[%s225 + $0x20] sm:$0xff]
      %v246 = vld [vmem:[%s225 + $0x28] sm:$0xff]
      %v247 = vld [vmem:[%s225 + $0x30] sm:$0xff]
      %v248 = vld [vmem:[%s225 + $0x38] sm:$0xff]
      %v249 = vld [vmem:[%s1] sm:$0x1]
      %v251 = vlaneseq
      %v252 = vshrl.u32 %v251, 7
      %v253 = vsub.s32 0, %v252
      %v254 = vrot.slane %v249, %v253
      %v256 = vmul.f32 %v241, %v254
      %v257 = vmul.f32 %v242, %v254
      %v258 = vmul.f32 %v243, %v254
      %v259 = vmul.f32 %v244, %v254
      %v260 = vmul.f32 %v245, %v254
      %v261 = vmul.f32 %v246, %v254
      %v262 = vmul.f32 %v247, %v254
      %v263 = vmul.f32 %v248, %v254
      %v264 = vld [vmem:[%s2] sm:$0x1]
      %v266 = vlaneseq
      %v267 = vshrl.u32 %v266, 7
      %v268 = vsub.s32 0, %v267
      %v269 = vrot.slane %v264, %v268
      %v271 = vadd.f32 %v256, %v269
      %v272 = vadd.f32 %v257, %v269
      %v273 = vadd.f32 %v258, %v269
      %v274 = vadd.f32 %v259, %v269
      %v275 = vadd.f32 %v260, %v269
      %v276 = vadd.f32 %v261, %v269
      %v277 = vadd.f32 %v262, %v269
      %v278 = vadd.f32 %v263, %v269
      %v279 = vmax.f32 %v271, 0.0
      %v280 = vmax.f32 %v272, 0.0
      %v281 = vmax.f32 %v273, 0.0
      %v282 = vmax.f32 %v274, 0.0
      %v283 = vmax.f32 %v275, 0.0
      %v284 = vmax.f32 %v276, 0.0
      %v285 = vmax.f32 %v277, 0.0
      %v286 = vmax.f32 %v278, 0.0
      %287 = vst [vmem:[%s239] sm:$0xff] %v279
      %288 = vst [vmem:[%s239 + $0x8] sm:$0xff] %v280
      %289 = vst [vmem:[%s239 + $0x10] sm:$0xff] %v281
      %290 = vst [vmem:[%s239 + $0x18] sm:$0xff] %v282
      %291 = vst [vmem:[%s239 + $0x20] sm:$0xff] %v283
      %292 = vst [vmem:[%s239 + $0x28] sm:$0xff] %v284
      %293 = vst [vmem:[%s239 + $0x30] sm:$0xff] %v285
      %294 = vst [vmem:[%s239 + $0x38] sm:$0xff] %v286
      %s295 = smul.u32 8, %s21
      %p296 = scmp.lt.s32.totalorder %s19, 1
      %s297 = scalar_select %p296, %s19, 1
      %p298 = scmp.lt.s32.totalorder %s20, 7
      %s299 = scalar_select %p298, %s20, 7
      %p300 = scmp.lt.s32.totalorder %s295, 7
      %s301 = scalar_select %p300, %s295, 7
      %s302 = smul.addr %s299, 8
      %s303 = sadd.s32 %s301, %s302
      %s304 = smul.addr %s297, 64
      %s305 = sadd.s32 %s303, %s304
      %s306 = smul.addr %s305, 8
      %s307 = scalar_lea.vmem %s3, %s306
      // Predicated region
      $region33: #{double_conv.7} parent=31 // pred_check
        %p308 = pneg %p127
      $region34: #{double_conv.7} parent=31 // pred_check_branch
        %310 = sbr.rel (%p308) target = $region36
      $region35: #{double_conv.7} parent=31 // pred_region
        %s311 = smul.u32 8, %s21
      $region36: #{double_conv.7} parent=31 // pred_fallthru
        _
    $region32: #{double_conv.7} parent=5 // pred_fallthru
      _
    %p312 = scmp.le.s32.totalorder 2, %s9
    // Predicated region
    $region37: #{double_conv.7} parent=5 // pred_check
      %p313 = pneg %p312
    $region38: #{double_conv.7} parent=5 // pred_check_branch
      %315 = sbr.rel (%p313) target = $region40
    $region39: #{double_conv.7} parent=5 // pred_region
      %s316 = ssub.s32 %s9, 2
      // Predicated region
      $region41: #{double_conv.7} parent=39 // pred_check
        %p317 = pneg %p133
      $region42: #{double_conv.7} parent=39 // pred_check_branch
        %319 = sbr.rel (%p317) target = $region44
      $region43: #{double_conv.7} parent=39 // pred_region
        %s320 = smul.u32 8, %s24
        %p321 = scmp.lt.s32.totalorder %s22, 1
        %s322 = scalar_select %p321, %s22, 1
        %p323 = scmp.lt.s32.totalorder %s23, 7
        %s324 = scalar_select %p323, %s23, 7
        %p325 = scmp.lt.s32.totalorder %s320, 7
        %s326 = scalar_select %p325, %s320, 7
        %s327 = smul.addr %s324, 8
        %s328 = sadd.s32 %s326, %s327
        %s329 = smul.addr %s322, 64
        %s330 = sadd.s32 %s328, %s329
        %s331 = smul.addr %s330, 8
        %s332 = scalar_lea.vmem %s3, %s331
      $region44: #{double_conv.7} parent=39 // pred_fallthru
        _
    $region40: #{double_conv.7} parent=5 // pred_fallthru
      _
  $region6: #{double_conv.7} parent=0 // loop_footer
    %s13 = sadd.s32 1, %s9
  $region7: #{double_conv.7} parent=0 // loop_footer_branch
    %8 = sbr.rel target = $region3
  $region8: #{double_conv.7} parent=0 // loop_exit
    _

</llo_original>
